<compile_context>
chip_gen: v6e
topology: v6e:2x2x1
jax: 0.10.0
libtpu: 0.0.40
codegen_flags: <defaults>
</compile_context>

<pallas_src>
import functools

import jax
import jax.numpy as jnp
from jax.experimental import pallas as pl
from jax.experimental.pallas import tpu as pltpu


def _round_up(n, m):
    return ((n + m - 1) // m) * m


def _leaky_relu(x, slope=0.5):
    # Valid for slope in (0, 1); single VALU op vs cmp+mul+select with jnp.where.
    return jnp.maximum(x, slope * x)


def _autoencoder_kernel(x_ref,
                        w1, b1, w2, b2, w3, b3,
                        w4, b4, w5, b5, w6, b6,
                        out_ref):
    """One batch tile of the 6-layer autoencoder (Linear + LeakyReLU(0.5); last layer linear).

    x tile and weights are bf16 (MXU-native); every matmul accumulates in f32 via
    preferred_element_type; bias add and LeakyReLU are f32; the output tile is stored bf16.
    """
    h = x_ref[...]  # already bf16 — goes straight into the first MXU matmul

    def layer(h, w_ref, b_ref, act=True):
        y = jnp.dot(h.astype(jnp.bfloat16), w_ref[...],
                    preferred_element_type=jnp.float32) + b_ref[...]
        return _leaky_relu(y) if act else y

    # ---- encoder ----
    h = layer(h, w1, b1)
    h = layer(h, w2, b2)
    h = layer(h, w3, b3)            # latent (padded to 128 lanes; pad entries stay 0)
    # ---- decoder ----
    h = layer(h, w4, b4)
    h = layer(h, w5, b5)
    h = layer(h, w6, b6, act=False)  # no activation after dec3

    out_ref[...] = h.astype(out_ref.dtype)


def init_params(key, input_dim=784, latent=8, dtype=jnp.float32):
    """Deterministic init mimicking PyTorch Linear default (U[-1/sqrt(fan_in), +1/sqrt(fan_in)]).

    Weights are stored already transposed: (in_features, out_features). Biases are (1, out).
    """
    dims = [input_dim, input_dim // 2, input_dim // 4, latent,
            input_dim // 4, input_dim // 2, input_dim]
    params = []
    for i in range(6):
        fan_in, fan_out = dims[i], dims[i + 1]
        key, kw, kb = jax.random.split(key, 3)
        bound = 1.0 / (fan_in ** 0.5)
        w = jax.random.uniform(kw, (fan_in, fan_out), dtype, -bound, bound)
        b = jax.random.uniform(kb, (1, fan_out), dtype, -bound, bound)
        params.append((w, b))
    return params


def prepare_params(params, input_dim=784, latent=8, weight_dtype=jnp.bfloat16):
    """Pad to lane-aligned shapes and quantize weights to bf16 (biases stay f32).

    Padding: input/output dim 784 -> 896, latent 8 -> 128. Pad entries are zero, so they
    contribute nothing to the valid outputs (leaky(0) == 0).
    """
    d_pad = _round_up(input_dim, 128)
    lat_pad = _round_up(latent, 128)
    pdims = [d_pad, input_dim // 2, input_dim // 4, lat_pad,
             input_dim // 4, input_dim // 2, d_pad]
    out = []
    for i, (w, b) in enumerate(params):
        wi, wo = pdims[i], pdims[i + 1]
        w_p = jnp.zeros((wi, wo), weight_dtype).at[:w.shape[0], :w.shape[1]].set(
            w.astype(weight_dtype))
        b_p = jnp.zeros((1, wo), jnp.float32).at[:, :b.shape[1]].set(
            b.astype(jnp.float32))
        out.append((w_p, b_p))
    return out


def _choose_batch_tiling(B, tb_max=512, min_tiles=2, gran=16):
    """Pick (tb, b_pad): >= min_tiles tiles when the batch allows (v7x 2-TC sharding),
    tb <= tb_max, tb a multiple of 16 (bf16 sublane packing), minimal batch padding."""
    b_ceil = _round_up(B, gran)
    n_tiles = min(min_tiles, b_ceil // gran)            # >=2 tiles only if batch allows
    n_tiles = max(n_tiles, -(-b_ceil // tb_max), 1)     # respect tb_max
    tb = _round_up(-(-b_ceil // n_tiles), gran)
    return tb, tb * n_tiles


@functools.partial(jax.jit, static_argnames=("tb_max",))
def autoencoder_forward(x, padded_params, *, tb_max=512):
    B, D = x.shape
    d_pad = padded_params[0][0].shape[0]

    tb, b_pad = _choose_batch_tiling(B, tb_max=tb_max)

    # Pad + cast to bf16 in one half-width wrapper pass (halves x HBM bytes into the kernel).
    x_p = jnp.zeros((b_pad, d_pad), jnp.bfloat16).at[:B, :D].set(x.astype(jnp.bfloat16))

    flat = []
    for w, b in padded_params:
        flat += [w, b]

    def resident(arr):
        # Full-array block, constant index_map -> fetched once, stays VMEM-resident across
        # the batch grid. (Default double-buffering only costs ~1.8 MiB of headroom here;
        # kept for compile safety rather than forcing single-buffering.)
        return pl.BlockSpec(arr.shape, lambda i: (0, 0))

    in_specs = ([pl.BlockSpec((tb, d_pad), lambda i: (i, 0))]
                + [resident(a) for a in flat])

    out_p = pl.pallas_call(
        _autoencoder_kernel,
        out_shape=jax.ShapeDtypeStruct((b_pad, d_pad), jnp.bfloat16),
        grid=(b_pad // tb,),
        in_specs=in_specs,
        out_specs=pl.BlockSpec((tb, d_pad), lambda i: (i, 0)),
        compiler_params=pltpu.CompilerParams(
            dimension_semantics=("parallel",),   # batch tiles shard across v7x's 2 TCs
            vmem_limit_bytes=32 << 20,
        ),
    )(x_p, *flat)

    return out_p[:B, :D].astype(x.dtype)


def autoencoder_reference_f32(x, params):
    """Pure-f32 forward matching the PyTorch module."""
    h = x.astype(jnp.float32)
    for i, (w, b) in enumerate(params):
        h = jnp.dot(h, w.astype(jnp.float32),
                    preferred_element_type=jnp.float32) + b.astype(jnp.float32)
        if i != 5:
            h = _leaky_relu(h)
    return h


def autoencoder_reference_quantized(x, params):
    """Exact numeric mirror of the kernel: bf16 inputs/weights into the MXU, f32
    accumulate + bias + LeakyReLU, bf16 output store."""
    h = x.astype(jnp.bfloat16)
    for i, (w, b) in enumerate(params):
        h = jnp.dot(h.astype(jnp.bfloat16), w.astype(jnp.bfloat16),
                    preferred_element_type=jnp.float32) + b.astype(jnp.float32)
        if i != 5:
            h = _leaky_relu(h)
    return h.astype(jnp.bfloat16).astype(jnp.float32)


if __name__ == "__main__":
    INPUT_DIM = 784
    LATENT = 8
    BATCH = 2

    key = jax.random.PRNGKey(0)
    key, kx = jax.random.split(key)
    x = jax.random.normal(kx, (BATCH, INPUT_DIM), dtype=jnp.float32)

    params = init_params(key, input_dim=INPUT_DIM, latent=LATENT)
    padded_params = prepare_params(params, input_dim=INPUT_DIM, latent=LATENT)

    recon = autoencoder_forward(x, padded_params)
    recon = jax.block_until_ready(recon)
    assert recon.shape == (BATCH, INPUT_DIM), recon.shape

    # Tight check vs. an exact numerical mirror of the kernel (bf16 in/weights/out,
    # f32 accumulate). Tolerance covers ~1 bf16 ulp of MXU-vs-XLA accumulation-order drift.
    ref_q = autoencoder_reference_quantized(x, params)
    assert jnp.allclose(recon, ref_q, atol=1e-2, rtol=1e-2), \
        float(jnp.max(jnp.abs(recon - ref_q)))

    # Loose semantic check vs. the full-f32 PyTorch-equivalent forward
    # (bounds the deliberate bf16 quantization of weights/activations).
    ref_f32 = autoencoder_reference_f32(x, params)
    assert jnp.allclose(recon, ref_f32, atol=5e-2, rtol=5e-2), \
        float(jnp.max(jnp.abs(recon - ref_f32)))

    print("KERNEL_OK")
</pallas_src>

<mosaic_0001>
module attributes {stable_mosaic.version = 11 : i64} {
  func.func @_autoencoder_kernel(%arg0: i32, %arg1: memref<16x896xbf16, #tpu.memory_space<vmem>>, %arg2: memref<896x392xbf16, #tpu.memory_space<vmem>>, %arg3: memref<1x392xf32, #tpu.memory_space<vmem>>, %arg4: memref<392x196xbf16, #tpu.memory_space<vmem>>, %arg5: memref<1x196xf32, #tpu.memory_space<vmem>>, %arg6: memref<196x128xbf16, #tpu.memory_space<vmem>>, %arg7: memref<1x128xf32, #tpu.memory_space<vmem>>, %arg8: memref<128x196xbf16, #tpu.memory_space<vmem>>, %arg9: memref<1x196xf32, #tpu.memory_space<vmem>>, %arg10: memref<196x392xbf16, #tpu.memory_space<vmem>>, %arg11: memref<1x392xf32, #tpu.memory_space<vmem>>, %arg12: memref<392x896xbf16, #tpu.memory_space<vmem>>, %arg13: memref<1x896xf32, #tpu.memory_space<vmem>>, %arg14: memref<16x896xbf16, #tpu.memory_space<vmem>>) attributes {dimension_semantics = [#tpu.dimension_semantics<parallel>], iteration_bounds = array<i64: 1>, scalar_prefetch = 0 : i64, scratch_operands = 0 : i64, tpu.core_type = #tpu.core_type<tc>, window_params = [{transform_indices = @transform_0, window_bounds = array<i64: 16, 896>}, {pipeline_mode = #tpu.pipeline_mode<synchronous>, transform_indices = @transform_1, window_bounds = array<i64: 896, 392>}, {pipeline_mode = #tpu.pipeline_mode<synchronous>, transform_indices = @transform_2, window_bounds = array<i64: 1, 392>}, {pipeline_mode = #tpu.pipeline_mode<synchronous>, transform_indices = @transform_3, window_bounds = array<i64: 392, 196>}, {pipeline_mode = #tpu.pipeline_mode<synchronous>, transform_indices = @transform_4, window_bounds = array<i64: 1, 196>}, {pipeline_mode = #tpu.pipeline_mode<synchronous>, transform_indices = @transform_5, window_bounds = array<i64: 196, 128>}, {pipeline_mode = #tpu.pipeline_mode<synchronous>, transform_indices = @transform_6, window_bounds = array<i64: 1, 128>}, {pipeline_mode = #tpu.pipeline_mode<synchronous>, transform_indices = @transform_7, window_bounds = array<i64: 128, 196>}, {pipeline_mode = #tpu.pipeline_mode<synchronous>, transform_indices = @transform_8, window_bounds = array<i64: 1, 196>}, {pipeline_mode = #tpu.pipeline_mode<synchronous>, transform_indices = @transform_9, window_bounds = array<i64: 196, 392>}, {pipeline_mode = #tpu.pipeline_mode<synchronous>, transform_indices = @transform_10, window_bounds = array<i64: 1, 392>}, {pipeline_mode = #tpu.pipeline_mode<synchronous>, transform_indices = @transform_11, window_bounds = array<i64: 392, 896>}, {pipeline_mode = #tpu.pipeline_mode<synchronous>, transform_indices = @transform_12, window_bounds = array<i64: 1, 896>}, {transform_indices = @transform_13, window_bounds = array<i64: 16, 896>}]} {
    %c0 = arith.constant 0 : index
    %c0_0 = arith.constant 0 : index
    %0 = vector.load %arg1[%c0, %c0_0] : memref<16x896xbf16, #tpu.memory_space<vmem>>, vector<16x896xbf16>
    %c0_1 = arith.constant 0 : index
    %c0_2 = arith.constant 0 : index
    %1 = vector.load %arg2[%c0_1, %c0_2] : memref<896x392xbf16, #tpu.memory_space<vmem>>, vector<896x392xbf16>
    %cst = arith.constant dense<0.000000e+00> : vector<16x392xf32>
    %2 = tpu.matmul %0, %1, %cst {dimension_numbers = #tpu.dot_dimension_numbers<[1], [0], [0], [1], [0, 0, 1, 1], [], []>} : vector<16x896xbf16>, vector<896x392xbf16>, vector<16x392xf32> -> vector<16x392xf32>
    %c0_3 = arith.constant 0 : index
    %c0_4 = arith.constant 0 : index
    %3 = vector.load %arg3[%c0_3, %c0_4] : memref<1x392xf32, #tpu.memory_space<vmem>>, vector<1x392xf32>
    %4 = vector.broadcast %3 : vector<1x392xf32> to vector<16x392xf32>
    %5 = arith.addf %2, %4 : vector<16x392xf32>
    %cst_5 = arith.constant 5.000000e-01 : f32
    %6 = vector.broadcast %cst_5 : f32 to vector<16x392xf32>
    %7 = arith.mulf %6, %5 : vector<16x392xf32>
    %8 = arith.maximumf %5, %7 : vector<16x392xf32>
    %9 = arith.truncf %8 : vector<16x392xf32> to vector<16x392xbf16>
    %c0_6 = arith.constant 0 : index
    %c0_7 = arith.constant 0 : index
    %10 = vector.load %arg4[%c0_6, %c0_7] : memref<392x196xbf16, #tpu.memory_space<vmem>>, vector<392x196xbf16>
    %cst_8 = arith.constant dense<0.000000e+00> : vector<16x196xf32>
    %11 = tpu.matmul %9, %10, %cst_8 {dimension_numbers = #tpu.dot_dimension_numbers<[1], [0], [0], [1], [0, 0, 1, 1], [], []>} : vector<16x392xbf16>, vector<392x196xbf16>, vector<16x196xf32> -> vector<16x196xf32>
    %c0_9 = arith.constant 0 : index
    %c0_10 = arith.constant 0 : index
    %12 = vector.load %arg5[%c0_9, %c0_10] : memref<1x196xf32, #tpu.memory_space<vmem>>, vector<1x196xf32>
    %13 = vector.broadcast %12 : vector<1x196xf32> to vector<16x196xf32>
    %14 = arith.addf %11, %13 : vector<16x196xf32>
    %cst_11 = arith.constant 5.000000e-01 : f32
    %15 = vector.broadcast %cst_11 : f32 to vector<16x196xf32>
    %16 = arith.mulf %15, %14 : vector<16x196xf32>
    %17 = arith.maximumf %14, %16 : vector<16x196xf32>
    %18 = arith.truncf %17 : vector<16x196xf32> to vector<16x196xbf16>
    %c0_12 = arith.constant 0 : index
    %c0_13 = arith.constant 0 : index
    %19 = vector.load %arg6[%c0_12, %c0_13] : memref<196x128xbf16, #tpu.memory_space<vmem>>, vector<196x128xbf16>
    %cst_14 = arith.constant dense<0.000000e+00> : vector<16x128xf32>
    %20 = tpu.matmul %18, %19, %cst_14 {dimension_numbers = #tpu.dot_dimension_numbers<[1], [0], [0], [1], [0, 0, 1, 1], [], []>} : vector<16x196xbf16>, vector<196x128xbf16>, vector<16x128xf32> -> vector<16x128xf32>
    %c0_15 = arith.constant 0 : index
    %c0_16 = arith.constant 0 : index
    %21 = vector.load %arg7[%c0_15, %c0_16] : memref<1x128xf32, #tpu.memory_space<vmem>>, vector<1x128xf32>
    %22 = vector.broadcast %21 : vector<1x128xf32> to vector<16x128xf32>
    %23 = arith.addf %20, %22 : vector<16x128xf32>
    %cst_17 = arith.constant 5.000000e-01 : f32
    %24 = vector.broadcast %cst_17 : f32 to vector<16x128xf32>
    %25 = arith.mulf %24, %23 : vector<16x128xf32>
    %26 = arith.maximumf %23, %25 : vector<16x128xf32>
    %27 = arith.truncf %26 : vector<16x128xf32> to vector<16x128xbf16>
    %c0_18 = arith.constant 0 : index
    %c0_19 = arith.constant 0 : index
    %28 = vector.load %arg8[%c0_18, %c0_19] : memref<128x196xbf16, #tpu.memory_space<vmem>>, vector<128x196xbf16>
    %cst_20 = arith.constant dense<0.000000e+00> : vector<16x196xf32>
    %29 = tpu.matmul %27, %28, %cst_20 {dimension_numbers = #tpu.dot_dimension_numbers<[1], [0], [0], [1], [0, 0, 1, 1], [], []>} : vector<16x128xbf16>, vector<128x196xbf16>, vector<16x196xf32> -> vector<16x196xf32>
    %c0_21 = arith.constant 0 : index
    %c0_22 = arith.constant 0 : index
    %30 = vector.load %arg9[%c0_21, %c0_22] : memref<1x196xf32, #tpu.memory_space<vmem>>, vector<1x196xf32>
    %31 = vector.broadcast %30 : vector<1x196xf32> to vector<16x196xf32>
    %32 = arith.addf %29, %31 : vector<16x196xf32>
    %cst_23 = arith.constant 5.000000e-01 : f32
    %33 = vector.broadcast %cst_23 : f32 to vector<16x196xf32>
    %34 = arith.mulf %33, %32 : vector<16x196xf32>
    %35 = arith.maximumf %32, %34 : vector<16x196xf32>
    %36 = arith.truncf %35 : vector<16x196xf32> to vector<16x196xbf16>
    %c0_24 = arith.constant 0 : index
    %c0_25 = arith.constant 0 : index
    %37 = vector.load %arg10[%c0_24, %c0_25] : memref<196x392xbf16, #tpu.memory_space<vmem>>, vector<196x392xbf16>
    %cst_26 = arith.constant dense<0.000000e+00> : vector<16x392xf32>
    %38 = tpu.matmul %36, %37, %cst_26 {dimension_numbers = #tpu.dot_dimension_numbers<[1], [0], [0], [1], [0, 0, 1, 1], [], []>} : vector<16x196xbf16>, vector<196x392xbf16>, vector<16x392xf32> -> vector<16x392xf32>
    %c0_27 = arith.constant 0 : index
    %c0_28 = arith.constant 0 : index
    %39 = vector.load %arg11[%c0_27, %c0_28] : memref<1x392xf32, #tpu.memory_space<vmem>>, vector<1x392xf32>
    %40 = vector.broadcast %39 : vector<1x392xf32> to vector<16x392xf32>
    %41 = arith.addf %38, %40 : vector<16x392xf32>
    %cst_29 = arith.constant 5.000000e-01 : f32
    %42 = vector.broadcast %cst_29 : f32 to vector<16x392xf32>
    %43 = arith.mulf %42, %41 : vector<16x392xf32>
    %44 = arith.maximumf %41, %43 : vector<16x392xf32>
    %45 = arith.truncf %44 : vector<16x392xf32> to vector<16x392xbf16>
    %c0_30 = arith.constant 0 : index
    %c0_31 = arith.constant 0 : index
    %46 = vector.load %arg12[%c0_30, %c0_31] : memref<392x896xbf16, #tpu.memory_space<vmem>>, vector<392x896xbf16>
    %cst_32 = arith.constant dense<0.000000e+00> : vector<16x896xf32>
    %47 = tpu.matmul %45, %46, %cst_32 {dimension_numbers = #tpu.dot_dimension_numbers<[1], [0], [0], [1], [0, 0, 1, 1], [], []>} : vector<16x392xbf16>, vector<392x896xbf16>, vector<16x896xf32> -> vector<16x896xf32>
    %c0_33 = arith.constant 0 : index
    %c0_34 = arith.constant 0 : index
    %48 = vector.load %arg13[%c0_33, %c0_34] : memref<1x896xf32, #tpu.memory_space<vmem>>, vector<1x896xf32>
    %49 = vector.broadcast %48 : vector<1x896xf32> to vector<16x896xf32>
    %50 = arith.addf %47, %49 : vector<16x896xf32>
    %51 = arith.truncf %50 : vector<16x896xf32> to vector<16x896xbf16>
    %c0_35 = arith.constant 0 : index
    %c0_36 = arith.constant 0 : index
    %52 = vector.load %arg14[%c0_35, %c0_36] : memref<16x896xbf16, #tpu.memory_space<vmem>>, vector<16x896xbf16>
    tpu.vector_store %arg14[%c0_35, %c0_36], %51 {strides = array<i32>} : memref<16x896xbf16, #tpu.memory_space<vmem>>, vector<16x896xbf16>,
    return
  }
  func.func @transform_0(%arg0: i32) -> (i32, i32) {
    %c0_i32 = arith.constant 0 : i32
    %c0_i32_0 = arith.constant 0 : i32
    return %arg0, %c0_i32 : i32, i32
  }
  func.func @transform_1(%arg0: i32) -> (i32, i32) {
    %c0_i32 = arith.constant 0 : i32
    %c0_i32_0 = arith.constant 0 : i32
    %c0_i32_1 = arith.constant 0 : i32
    return %c0_i32, %c0_i32_0 : i32, i32
  }
  func.func @transform_2(%arg0: i32) -> (i32, i32) {
    %c0_i32 = arith.constant 0 : i32
    %c0_i32_0 = arith.constant 0 : i32
    %c0_i32_1 = arith.constant 0 : i32
    return %c0_i32, %c0_i32_0 : i32, i32
  }
  func.func @transform_3(%arg0: i32) -> (i32, i32) {
    %c0_i32 = arith.constant 0 : i32
    %c0_i32_0 = arith.constant 0 : i32
    %c0_i32_1 = arith.constant 0 : i32
    return %c0_i32, %c0_i32_0 : i32, i32
  }
  func.func @transform_4(%arg0: i32) -> (i32, i32) {
    %c0_i32 = arith.constant 0 : i32
    %c0_i32_0 = arith.constant 0 : i32
    %c0_i32_1 = arith.constant 0 : i32
    return %c0_i32, %c0_i32_0 : i32, i32
  }
  func.func @transform_5(%arg0: i32) -> (i32, i32) {
    %c0_i32 = arith.constant 0 : i32
    %c0_i32_0 = arith.constant 0 : i32
    %c0_i32_1 = arith.constant 0 : i32
    return %c0_i32, %c0_i32_0 : i32, i32
  }
  func.func @transform_6(%arg0: i32) -> (i32, i32) {
    %c0_i32 = arith.constant 0 : i32
    %c0_i32_0 = arith.constant 0 : i32
    %c0_i32_1 = arith.constant 0 : i32
    return %c0_i32, %c0_i32_0 : i32, i32
  }
  func.func @transform_7(%arg0: i32) -> (i32, i32) {
    %c0_i32 = arith.constant 0 : i32
    %c0_i32_0 = arith.constant 0 : i32
    %c0_i32_1 = arith.constant 0 : i32
    return %c0_i32, %c0_i32_0 : i32, i32
  }
  func.func @transform_8(%arg0: i32) -> (i32, i32) {
    %c0_i32 = arith.constant 0 : i32
    %c0_i32_0 = arith.constant 0 : i32
    %c0_i32_1 = arith.constant 0 : i32
    return %c0_i32, %c0_i32_0 : i32, i32
  }
  func.func @transform_9(%arg0: i32) -> (i32, i32) {
    %c0_i32 = arith.constant 0 : i32
    %c0_i32_0 = arith.constant 0 : i32
    %c0_i32_1 = arith.constant 0 : i32
    return %c0_i32, %c0_i32_0 : i32, i32
  }
  func.func @transform_10(%arg0: i32) -> (i32, i32) {
    %c0_i32 = arith.constant 0 : i32
    %c0_i32_0 = arith.constant 0 : i32
    %c0_i32_1 = arith.constant 0 : i32
    return %c0_i32, %c0_i32_0 : i32, i32
  }
  func.func @transform_11(%arg0: i32) -> (i32, i32) {
    %c0_i32 = arith.constant 0 : i32
    %c0_i32_0 = arith.constant 0 : i32
    %c0_i32_1 = arith.constant 0 : i32
    return %c0_i32, %c0_i32_0 : i32, i32
  }
  func.func @transform_12(%arg0: i32) -> (i32, i32) {
    %c0_i32 = arith.constant 0 : i32
    %c0_i32_0 = arith.constant 0 : i32
    %c0_i32_1 = arith.constant 0 : i32
    return %c0_i32, %c0_i32_0 : i32, i32
  }
  func.func @transform_13(%arg0: i32) -> (i32, i32) {
    %c0_i32 = arith.constant 0 : i32
    %c0_i32_0 = arith.constant 0 : i32
    return %arg0, %c0_i32 : i32, i32
  }
}

</mosaic_0001>

<llo_original>
// kernel: autoencoder_forward.1
$region0: #{autoencoder_forward.1}
  #allocation0 [shape = 'u32[]', space=smem, size = 0x4, offset = 0x4, fixed_abs, tag = 'smem constant byte address 0x4 - core index']
  #allocation1 [shape = 'u32[144,128]{1,0:T(1,128)}', space=vmem, size = 0x12000, scoped, tag = 'internal scratch']
  %s0 = inlined_call_operand.vmem [shape: bf16[16,896], index: 0, kind: input, shape index: {}]
  %s1 = inlined_call_operand.vmem [shape: bf16[896,392], index: 1, kind: input, shape index: {}]
  %s2 = inlined_call_operand.vmem [shape: f32[1,392], index: 2, kind: input, shape index: {}]
  %s3 = inlined_call_operand.vmem [shape: bf16[392,196], index: 3, kind: input, shape index: {}]
  %s4 = inlined_call_operand.vmem [shape: f32[1,196], index: 4, kind: input, shape index: {}]
  %s5 = inlined_call_operand.vmem [shape: bf16[196,128], index: 5, kind: input, shape index: {}]
  %s6 = inlined_call_operand.vmem [shape: f32[1,128], index: 6, kind: input, shape index: {}]
  %s7 = inlined_call_operand.vmem [shape: bf16[128,196], index: 7, kind: input, shape index: {}]
  %s8 = inlined_call_operand.vmem [shape: f32[1,196], index: 8, kind: input, shape index: {}]
  %s9 = inlined_call_operand.vmem [shape: bf16[196,392], index: 9, kind: input, shape index: {}]
  %s10 = inlined_call_operand.vmem [shape: f32[1,392], index: 10, kind: input, shape index: {}]
  %s11 = inlined_call_operand.vmem [shape: bf16[392,896], index: 11, kind: input, shape index: {}]
  %s12 = inlined_call_operand.vmem [shape: f32[1,896], index: 12, kind: input, shape index: {}]
  %s13 = inlined_call_operand.vmem [shape: bf16[16,896], index: 13, kind: output, shape index: {}]
  %s14 = sld [smem:[#allocation0]]
  $region62: #{autoencoder_forward.1} parent=0
    _
  %s16 = ssub.s32 1, %s14
  %s17 = scalar_select 0, %s16, %s14
  // Predicated region
  $region2: #{autoencoder_forward.1} parent=0 // pred_check
    _
  $region3: #{autoencoder_forward.1} parent=0 // pred_check_branch
    %19 = sbr.rel (0) target = $region5
  $region4: #{autoencoder_forward.1} parent=0 // pred_region
    _
  $region5: #{autoencoder_forward.1} parent=0 // pred_fallthru
    _
  // Predicated region
  $region6: #{autoencoder_forward.1} parent=0 // pred_check
    _
  $region7: #{autoencoder_forward.1} parent=0 // pred_check_branch
    %21 = sbr.rel (0) target = $region9
  $region8: #{autoencoder_forward.1} parent=0 // pred_region
    _
  $region9: #{autoencoder_forward.1} parent=0 // pred_fallthru
    _
  // Predicated region
  $region10: #{autoencoder_forward.1} parent=0 // pred_check
    _
  $region11: #{autoencoder_forward.1} parent=0 // pred_check_branch
    %23 = sbr.rel (0) target = $region13
  $region12: #{autoencoder_forward.1} parent=0 // pred_region
    _
  $region13: #{autoencoder_forward.1} parent=0 // pred_fallthru
    _
  // Predicated region
  $region14: #{autoencoder_forward.1} parent=0 // pred_check
    _
  $region15: #{autoencoder_forward.1} parent=0 // pred_check_branch
    %25 = sbr.rel (0) target = $region17
  $region16: #{autoencoder_forward.1} parent=0 // pred_region
    _
  $region17: #{autoencoder_forward.1} parent=0 // pred_fallthru
    _
  // Predicated region
  $region18: #{autoencoder_forward.1} parent=0 // pred_check
    _
  $region19: #{autoencoder_forward.1} parent=0 // pred_check_branch
    %27 = sbr.rel (0) target = $region21
  $region20: #{autoencoder_forward.1} parent=0 // pred_region
    _
  $region21: #{autoencoder_forward.1} parent=0 // pred_fallthru
    _
  // Predicated region
  $region22: #{autoencoder_forward.1} parent=0 // pred_check
    _
  $region23: #{autoencoder_forward.1} parent=0 // pred_check_branch
    %29 = sbr.rel (0) target = $region25
  $region24: #{autoencoder_forward.1} parent=0 // pred_region
    _
  $region25: #{autoencoder_forward.1} parent=0 // pred_fallthru
    _
  // Predicated region
  $region26: #{autoencoder_forward.1} parent=0 // pred_check
    _
  $region27: #{autoencoder_forward.1} parent=0 // pred_check_branch
    %31 = sbr.rel (0) target = $region29
  $region28: #{autoencoder_forward.1} parent=0 // pred_region
    _
  $region29: #{autoencoder_forward.1} parent=0 // pred_fallthru
    _
  // Predicated region
  $region30: #{autoencoder_forward.1} parent=0 // pred_check
    _
  $region31: #{autoencoder_forward.1} parent=0 // pred_check_branch
    %33 = sbr.rel (0) target = $region33
  $region32: #{autoencoder_forward.1} parent=0 // pred_region
    _
  $region33: #{autoencoder_forward.1} parent=0 // pred_fallthru
    _
  // Predicated region
  $region34: #{autoencoder_forward.1} parent=0 // pred_check
    _
  $region35: #{autoencoder_forward.1} parent=0 // pred_check_branch
    %35 = sbr.rel (0) target = $region37
  $region36: #{autoencoder_forward.1} parent=0 // pred_region
    _
  $region37: #{autoencoder_forward.1} parent=0 // pred_fallthru
    _
  // Predicated region
  $region38: #{autoencoder_forward.1} parent=0 // pred_check
    _
  $region39: #{autoencoder_forward.1} parent=0 // pred_check_branch
    %37 = sbr.rel (0) target = $region41
  $region40: #{autoencoder_forward.1} parent=0 // pred_region
    _
  $region41: #{autoencoder_forward.1} parent=0 // pred_fallthru
    _
  // Predicated region
  $region42: #{autoencoder_forward.1} parent=0 // pred_check
    _
  $region43: #{autoencoder_forward.1} parent=0 // pred_check_branch
    %39 = sbr.rel (0) target = $region45
  $region44: #{autoencoder_forward.1} parent=0 // pred_region
    _
  $region45: #{autoencoder_forward.1} parent=0 // pred_fallthru
    _
  // Predicated region
  $region46: #{autoencoder_forward.1} parent=0 // pred_check
    _
  $region47: #{autoencoder_forward.1} parent=0 // pred_check_branch
    %41 = sbr.rel (0) target = $region49
  $region48: #{autoencoder_forward.1} parent=0 // pred_region
    _
  $region49: #{autoencoder_forward.1} parent=0 // pred_fallthru
    _
  // Predicated region
  $region50: #{autoencoder_forward.1} parent=0 // pred_check
    _
  $region51: #{autoencoder_forward.1} parent=0 // pred_check_branch
    %43 = sbr.rel (0) target = $region53
  $region52: #{autoencoder_forward.1} parent=0 // pred_region
    _
  $region53: #{autoencoder_forward.1} parent=0 // pred_fallthru
    _
  %v45 = vld [vmem:[%s0] sm:$0xff]
  %v46 = vld [vmem:[%s0 + $0x8] sm:$0xff]
  %v47 = vld [vmem:[%s0 + $0x10] sm:$0xff]
  %v48 = vld [vmem:[%s0 + $0x18] sm:$0xf]
  %v49 = vld [vmem:[%s0 + $0x1c] sm:$0xff]
  %v50 = vld [vmem:[%s0 + $0x24] sm:$0xff]
  %v51 = vld [vmem:[%s0 + $0x2c] sm:$0xff]
  %v52 = vld [vmem:[%s0 + $0x34] sm:$0xf]
  %v53 = vld [vmem:[%s1] sm:$0xff]
  %v54 = vld [vmem:[%s1 + $0x8] sm:$0xff]
  %v55 = vld [vmem:[%s1 + $0x10] sm:$0xff]
  %v56 = vld [vmem:[%s1 + $0x18] sm:$0xff]
  %v57 = vld [vmem:[%s1 + $0x20] sm:$0xff]
  %v58 = vld [vmem:[%s1 + $0x28] sm:$0xff]
  %v59 = vld [vmem:[%s1 + $0x30] sm:$0xff]
  %v60 = vld [vmem:[%s1 + $0x38] sm:$0xff]
  %v61 = vld [vmem:[%s1 + $0x40] sm:$0xff]
  %v62 = vld [vmem:[%s1 + $0x48] sm:$0xff]
  %v63 = vld [vmem:[%s1 + $0x50] sm:$0xff]
  %v64 = vld [vmem:[%s1 + $0x58] sm:$0xff]
  %v65 = vld [vmem:[%s1 + $0x60] sm:$0xff]
  %v66 = vld [vmem:[%s1 + $0x68] sm:$0xff]
  %v67 = vld [vmem:[%s1 + $0x70] sm:$0xff]
  %v68 = vld [vmem:[%s1 + $0x78] sm:$0xff]
  %v69 = vld [vmem:[%s1 + $0x80] sm:$0xff]
  %v70 = vld [vmem:[%s1 + $0x88] sm:$0xff]
  %v71 = vld [vmem:[%s1 + $0x90] sm:$0xff]
  %v72 = vld [vmem:[%s1 + $0x98] sm:$0xff]
  %v73 = vld [vmem:[%s1 + $0xa0] sm:$0xff]
  %v74 = vld [vmem:[%s1 + $0xa8] sm:$0xff]
  %v75 = vld [vmem:[%s1 + $0xb0] sm:$0xff]
  %v76 = vld [vmem:[%s1 + $0xb8] sm:$0xff]
  %v77 = vld [vmem:[%s1 + $0xc0] sm:$0xff]
  %v78 = vld [vmem:[%s1 + $0xc8] sm:$0xff]
  %v79 = vld [vmem:[%s1 + $0xd0] sm:$0xff]
  %v80 = vld [vmem:[%s1 + $0xd8] sm:$0xff]
  %v81 = vld [vmem:[%s1 + $0xe0] sm:$0xff]
  %v82 = vld [vmem:[%s1 + $0xe8] sm:$0xff]
  %v83 = vld [vmem:[%s1 + $0xf0] sm:$0xff]
  %v84 = vld [vmem:[%s1 + $0xf8] sm:$0xff]
  %v85 = vld [vmem:[%s1 + $0x100] sm:$0xff]
  %v86 = vld [vmem:[%s1 + $0x108] sm:$0xff]
  %v87 = vld [vmem:[%s1 + $0x110] sm:$0xff]
  %v88 = vld [vmem:[%s1 + $0x118] sm:$0xff]
  %v89 = vld [vmem:[%s1 + $0x120] sm:$0xff]
  %v90 = vld [vmem:[%s1 + $0x128] sm:$0xff]
  %v91 = vld [vmem:[%s1 + $0x130] sm:$0xff]
  %v92 = vld [vmem:[%s1 + $0x138] sm:$0xff]
  %v93 = vld [vmem:[%s1 + $0x140] sm:$0xff]
  %v94 = vld [vmem:[%s1 + $0x148] sm:$0xff]
  %v95 = vld [vmem:[%s1 + $0x150] sm:$0xff]
  %v96 = vld [vmem:[%s1 + $0x158] sm:$0xff]
  %v97 = vld [vmem:[%s1 + $0x160] sm:$0xff]
  %v98 = vld [vmem:[%s1 + $0x168] sm:$0xff]
  %v99 = vld [vmem:[%s1 + $0x170] sm:$0xff]
  %v100 = vld [vmem:[%s1 + $0x178] sm:$0xff]
  %v101 = vld [vmem:[%s1 + $0x180] sm:$0xff]
  %v102 = vld [vmem:[%s1 + $0x188] sm:$0xff]
  %v103 = vld [vmem:[%s1 + $0x190] sm:$0xff]
  %v104 = vld [vmem:[%s1 + $0x198] sm:$0xff]
  %v105 = vld [vmem:[%s1 + $0x1a0] sm:$0xff]
  %v106 = vld [vmem:[%s1 + $0x1a8] sm:$0xff]
  %v107 = vld [vmem:[%s1 + $0x1b0] sm:$0xff]
  %v108 = vld [vmem:[%s1 + $0x1b8] sm:$0xff]
  %v109 = vld [vmem:[%s1 + $0x1c0] sm:$0xff]
  %v110 = vld [vmem:[%s1 + $0x1c8] sm:$0xff]
  %v111 = vld [vmem:[%s1 + $0x1d0] sm:$0xff]
  %v112 = vld [vmem:[%s1 + $0x1d8] sm:$0xff]
  %v113 = vld [vmem:[%s1 + $0x1e0] sm:$0xff]
  %v114 = vld [vmem:[%s1 + $0x1e8] sm:$0xff]
  %v115 = vld [vmem:[%s1 + $0x1f0] sm:$0xff]
  %v116 = vld [vmem:[%s1 + $0x1f8] sm:$0xff]
  %v117 = vld [vmem:[%s1 + $0x200] sm:$0xff]
  %v118 = vld [vmem:[%s1 + $0x208] sm:$0xff]
  %v119 = vld [vmem:[%s1 + $0x210] sm:$0xff]
  %v120 = vld [vmem:[%s1 + $0x218] sm:$0xff]
  %v121 = vld [vmem:[%s1 + $0x220] sm:$0xff]
  %v122 = vld [vmem:[%s1 + $0x228] sm:$0xff]
  %v123 = vld [vmem:[%s1 + $0x230] sm:$0xff]
  %v124 = vld [vmem:[%s1 + $0x238] sm:$0xff]
  %v125 = vld [vmem:[%s1 + $0x240] sm:$0xff]
  %v126 = vld [vmem:[%s1 + $0x248] sm:$0xff]
  %v127 = vld [vmem:[%s1 + $0x250] sm:$0xff]
  %v128 = vld [vmem:[%s1 + $0x258] sm:$0xff]
  %v129 = vld [vmem:[%s1 + $0x260] sm:$0xff]
  %v130 = vld [vmem:[%s1 + $0x268] sm:$0xff]
  %v131 = vld [vmem:[%s1 + $0x270] sm:$0xff]
  %v132 = vld [vmem:[%s1 + $0x278] sm:$0xff]
  %v133 = vld [vmem:[%s1 + $0x280] sm:$0xff]
  %v134 = vld [vmem:[%s1 + $0x288] sm:$0xff]
  %v135 = vld [vmem:[%s1 + $0x290] sm:$0xff]
  %v136 = vld [vmem:[%s1 + $0x298] sm:$0xff]
  %v137 = vld [vmem:[%s1 + $0x2a0] sm:$0xff]
  %v138 = vld [vmem:[%s1 + $0x2a8] sm:$0xff]
  %v139 = vld [vmem:[%s1 + $0x2b0] sm:$0xff]
  %v140 = vld [vmem:[%s1 + $0x2b8] sm:$0xff]
  %v141 = vld [vmem:[%s1 + $0x2c0] sm:$0xff]
  %v142 = vld [vmem:[%s1 + $0x2c8] sm:$0xff]
  %v143 = vld [vmem:[%s1 + $0x2d0] sm:$0xff]
  %v144 = vld [vmem:[%s1 + $0x2d8] sm:$0xff]
  %v145 = vld [vmem:[%s1 + $0x2e0] sm:$0xff]
  %v146 = vld [vmem:[%s1 + $0x2e8] sm:$0xff]
  %v147 = vld [vmem:[%s1 + $0x2f0] sm:$0xff]
  %v148 = vld [vmem:[%s1 + $0x2f8] sm:$0xff]
  %v149 = vld [vmem:[%s1 + $0x300] sm:$0xff]
  %v150 = vld [vmem:[%s1 + $0x308] sm:$0xff]
  %v151 = vld [vmem:[%s1 + $0x310] sm:$0xff]
  %v152 = vld [vmem:[%s1 + $0x318] sm:$0xff]
  %v153 = vld [vmem:[%s1 + $0x320] sm:$0xff]
  %v154 = vld [vmem:[%s1 + $0x328] sm:$0xff]
  %v155 = vld [vmem:[%s1 + $0x330] sm:$0xff]
  %v156 = vld [vmem:[%s1 + $0x338] sm:$0xff]
  %v157 = vld [vmem:[%s1 + $0x340] sm:$0xff]
  %v158 = vld [vmem:[%s1 + $0x348] sm:$0xff]
  %v159 = vld [vmem:[%s1 + $0x350] sm:$0xff]
  %v160 = vld [vmem:[%s1 + $0x358] sm:$0xff]
  %v161 = vld [vmem:[%s1 + $0x360] sm:$0xff]
  %v162 = vld [vmem:[%s1 + $0x368] sm:$0xff]
  %v163 = vld [vmem:[%s1 + $0x370] sm:$0xff]
  %v164 = vld [vmem:[%s1 + $0x378] sm:$0xff]
  %v165 = vld [vmem:[%s1 + $0x380] sm:$0xff]
  %v166 = vld [vmem:[%s1 + $0x388] sm:$0xff]
  %v167 = vld [vmem:[%s1 + $0x390] sm:$0xff]
  %v168 = vld [vmem:[%s1 + $0x398] sm:$0xff]
  %v169 = vld [vmem:[%s1 + $0x3a0] sm:$0xff]
  %v170 = vld [vmem:[%s1 + $0x3a8] sm:$0xff]
  %v171 = vld [vmem:[%s1 + $0x3b0] sm:$0xff]
  %v172 = vld [vmem:[%s1 + $0x3b8] sm:$0xff]
  %v173 = vld [vmem:[%s1 + $0x3c0] sm:$0xff]
  %v174 = vld [vmem:[%s1 + $0x3c8] sm:$0xff]
  %v175 = vld [vmem:[%s1 + $0x3d0] sm:$0xff]
  %v176 = vld [vmem:[%s1 + $0x3d8] sm:$0xff]
  %v177 = vld [vmem:[%s1 + $0x3e0] sm:$0xff]
  %v178 = vld [vmem:[%s1 + $0x3e8] sm:$0xff]
  %v179 = vld [vmem:[%s1 + $0x3f0] sm:$0xff]
  %v180 = vld [vmem:[%s1 + $0x3f8] sm:$0xff]
  %v181 = vld [vmem:[%s1 + $0x400] sm:$0xff]
  %v182 = vld [vmem:[%s1 + $0x408] sm:$0xff]
  %v183 = vld [vmem:[%s1 + $0x410] sm:$0xff]
  %v184 = vld [vmem:[%s1 + $0x418] sm:$0xff]
  %v185 = vld [vmem:[%s1 + $0x420] sm:$0xff]
  %v186 = vld [vmem:[%s1 + $0x428] sm:$0xff]
  %v187 = vld [vmem:[%s1 + $0x430] sm:$0xff]
  %v188 = vld [vmem:[%s1 + $0x438] sm:$0xff]
  %v189 = vld [vmem:[%s1 + $0x440] sm:$0xff]
  %v190 = vld [vmem:[%s1 + $0x448] sm:$0xff]
  %v191 = vld [vmem:[%s1 + $0x450] sm:$0xff]
  %v192 = vld [vmem:[%s1 + $0x458] sm:$0xff]
  %v193 = vld [vmem:[%s1 + $0x460] sm:$0xff]
  %v194 = vld [vmem:[%s1 + $0x468] sm:$0xff]
  %v195 = vld [vmem:[%s1 + $0x470] sm:$0xff]
  %v196 = vld [vmem:[%s1 + $0x478] sm:$0xff]
  %v197 = vld [vmem:[%s1 + $0x480] sm:$0xff]
  %v198 = vld [vmem:[%s1 + $0x488] sm:$0xff]
  %v199 = vld [vmem:[%s1 + $0x490] sm:$0xff]
  %v200 = vld [vmem:[%s1 + $0x498] sm:$0xff]
  %v201 = vld [vmem:[%s1 + $0x4a0] sm:$0xff]
  %v202 = vld [vmem:[%s1 + $0x4a8] sm:$0xff]
  %v203 = vld [vmem:[%s1 + $0x4b0] sm:$0xff]
  %v204 = vld [vmem:[%s1 + $0x4b8] sm:$0xff]
  %v205 = vld [vmem:[%s1 + $0x4c0] sm:$0xff]
  %v206 = vld [vmem:[%s1 + $0x4c8] sm:$0xff]
  %v207 = vld [vmem:[%s1 + $0x4d0] sm:$0xff]
  %v208 = vld [vmem:[%s1 + $0x4d8] sm:$0xff]
  %v209 = vld [vmem:[%s1 + $0x4e0] sm:$0xff]
  %v210 = vld [vmem:[%s1 + $0x4e8] sm:$0xff]
  %v211 = vld [vmem:[%s1 + $0x4f0] sm:$0xff]
  %v212 = vld [vmem:[%s1 + $0x4f8] sm:$0xff]
  %v213 = vld [vmem:[%s1 + $0x500] sm:$0xff]
  %v214 = vld [vmem:[%s1 + $0x508] sm:$0xff]
  %v215 = vld [vmem:[%s1 + $0x510] sm:$0xff]
  %v216 = vld [vmem:[%s1 + $0x518] sm:$0xff]
  %v217 = vld [vmem:[%s1 + $0x520] sm:$0xff]
  %v218 = vld [vmem:[%s1 + $0x528] sm:$0xff]
  %v219 = vld [vmem:[%s1 + $0x530] sm:$0xff]
  %v220 = vld [vmem:[%s1 + $0x538] sm:$0xff]
  %v221 = vld [vmem:[%s1 + $0x540] sm:$0xff]
  %v222 = vld [vmem:[%s1 + $0x548] sm:$0xff]
  %v223 = vld [vmem:[%s1 + $0x550] sm:$0xff]
  %v224 = vld [vmem:[%s1 + $0x558] sm:$0xff]
  %v225 = vld [vmem:[%s1 + $0x560] sm:$0xff]
  %v226 = vld [vmem:[%s1 + $0x568] sm:$0xff]
  %v227 = vld [vmem:[%s1 + $0x570] sm:$0xff]
  %v228 = vld [vmem:[%s1 + $0x578] sm:$0xff]
  %v229 = vld [vmem:[%s1 + $0x580] sm:$0xff]
  %v230 = vld [vmem:[%s1 + $0x588] sm:$0xff]
  %v231 = vld [vmem:[%s1 + $0x590] sm:$0xff]
  %v232 = vld [vmem:[%s1 + $0x598] sm:$0xff]
  %v233 = vld [vmem:[%s1 + $0x5a0] sm:$0xff]
  %v234 = vld [vmem:[%s1 + $0x5a8] sm:$0xff]
  %v235 = vld [vmem:[%s1 + $0x5b0] sm:$0xff]
  %v236 = vld [vmem:[%s1 + $0x5b8] sm:$0xff]
  %v237 = vld [vmem:[%s1 + $0x5c0] sm:$0xff]
  %v238 = vld [vmem:[%s1 + $0x5c8] sm:$0xff]
  %v239 = vld [vmem:[%s1 + $0x5d0] sm:$0xff]
  %v240 = vld [vmem:[%s1 + $0x5d8] sm:$0xff]
  %v241 = vld [vmem:[%s1 + $0x5e0] sm:$0xff]
  %v242 = vld [vmem:[%s1 + $0x5e8] sm:$0xff]
  %v243 = vld [vmem:[%s1 + $0x5f0] sm:$0xff]
  %v244 = vld [vmem:[%s1 + $0x5f8] sm:$0xff]
  %v245 = vld [vmem:[%s1 + $0x600] sm:$0xff]
  %v246 = vld [vmem:[%s1 + $0x608] sm:$0xff]
  %v247 = vld [vmem:[%s1 + $0x610] sm:$0xff]
  %v248 = vld [vmem:[%s1 + $0x618] sm:$0xff]
  %v249 = vld [vmem:[%s1 + $0x620] sm:$0xff]
  %v250 = vld [vmem:[%s1 + $0x628] sm:$0xff]
  %v251 = vld [vmem:[%s1 + $0x630] sm:$0xff]
  %v252 = vld [vmem:[%s1 + $0x638] sm:$0xff]
  %v253 = vld [vmem:[%s1 + $0x640] sm:$0xff]
  %v254 = vld [vmem:[%s1 + $0x648] sm:$0xff]
  %v255 = vld [vmem:[%s1 + $0x650] sm:$0xff]
  %v256 = vld [vmem:[%s1 + $0x658] sm:$0xff]
  %v257 = vld [vmem:[%s1 + $0x660] sm:$0xff]
  %v258 = vld [vmem:[%s1 + $0x668] sm:$0xff]
  %v259 = vld [vmem:[%s1 + $0x670] sm:$0xff]
  %v260 = vld [vmem:[%s1 + $0x678] sm:$0xff]
  %v261 = vld [vmem:[%s1 + $0x680] sm:$0xff]
  %v262 = vld [vmem:[%s1 + $0x688] sm:$0xff]
  %v263 = vld [vmem:[%s1 + $0x690] sm:$0xff]
  %v264 = vld [vmem:[%s1 + $0x698] sm:$0xff]
  %v265 = vld [vmem:[%s1 + $0x6a0] sm:$0xff]
  %v266 = vld [vmem:[%s1 + $0x6a8] sm:$0xff]
  %v267 = vld [vmem:[%s1 + $0x6b0] sm:$0xff]
  %v268 = vld [vmem:[%s1 + $0x6b8] sm:$0xff]
  %v269 = vld [vmem:[%s1 + $0x6c0] sm:$0xff]
  %v270 = vld [vmem:[%s1 + $0x6c8] sm:$0xff]
  %v271 = vld [vmem:[%s1 + $0x6d0] sm:$0xff]
  %v272 = vld [vmem:[%s1 + $0x6d8] sm:$0xff]
  %v273 = vld [vmem:[%s1 + $0x6e0] sm:$0xff]
  %v274 = vld [vmem:[%s1 + $0x6e8] sm:$0xff]
  %v275 = vld [vmem:[%s1 + $0x6f0] sm:$0xff]
  %v276 = vld [vmem:[%s1 + $0x6f8] sm:$0xff]
  %v277 = vld [vmem:[%s2] sm:$0xf]
  %v279 = vlaneseq
  %v280 = vshrl.u32 %v279, 7
  %v281 = vsub.s32 0, %v280
  %v282 = vrot.slane %v277, %v281
  %v283 = vlaneseq
  %v284 = vshrl.u32 %v283, 7
  %v285 = vsub.s32 1, %v284
  %v286 = vrot.slane %v277, %v285
  %v287 = vlaneseq
  %v288 = vshrl.u32 %v287, 7
  %v289 = vsub.s32 2, %v288
  %v290 = vrot.slane %v277, %v289
  %v291 = vlaneseq
  %v292 = vshrl.u32 %v291, 7
  %v293 = vsub.s32 3, %v292
  %v294 = vrot.slane %v277, %v293
  %v307 = vunpack.c.l.b16 %v45
  %v308 = vunpack.c.h.b16 %v45
  %v309 = vunpack.c.l.b16 %v46
  %v310 = vunpack.c.h.b16 %v46
  %v311 = vunpack.c.l.b16 %v47
  %v312 = vunpack.c.h.b16 %v47
  %v313 = vunpack.c.l.b16 %v48
  %v314 = vunpack.c.l.b16 %v49
  %v315 = vunpack.c.h.b16 %v49
  %v316 = vunpack.c.l.b16 %v50
  %v317 = vunpack.c.h.b16 %v50
  %v318 = vunpack.c.l.b16 %v51
  %v319 = vunpack.c.h.b16 %v51
  %v320 = vunpack.c.l.b16 %v52
  %v321 = vpack.c.b16 %v314, %v307
  %v322 = vpack.c.b16 %v315, %v308
  %v323 = vpack.c.b16 %v316, %v309
  %v324 = vpack.c.b16 %v317, %v310
  %v325 = vpack.c.b16 %v318, %v311
  %v326 = vpack.c.b16 %v319, %v312
  %v327 = vpack.c.b16 %v320, %v313
  %v559 = vunpack.c.l.b16 %v53
  %v560 = vunpack.c.h.b16 %v53
  %v561 = vunpack.c.l.b16 %v54
  %v562 = vunpack.c.h.b16 %v54
  %v563 = vunpack.c.l.b16 %v55
  %v564 = vunpack.c.h.b16 %v55
  %v565 = vunpack.c.l.b16 %v56
  %v566 = vunpack.c.h.b16 %v56
  %v567 = vunpack.c.l.b16 %v57
  %v568 = vunpack.c.h.b16 %v57
  %v569 = vunpack.c.l.b16 %v58
  %v570 = vunpack.c.h.b16 %v58
  %v571 = vunpack.c.l.b16 %v59
  %v572 = vunpack.c.h.b16 %v59
  %v573 = vunpack.c.l.b16 %v60
  %v574 = vunpack.c.h.b16 %v60
  %v575 = vunpack.c.l.b16 %v61
  %v576 = vunpack.c.h.b16 %v61
  %v577 = vunpack.c.l.b16 %v62
  %v578 = vunpack.c.h.b16 %v62
  %v579 = vunpack.c.l.b16 %v63
  %v580 = vunpack.c.h.b16 %v63
  %v581 = vunpack.c.l.b16 %v64
  %v582 = vunpack.c.h.b16 %v64
  %v583 = vunpack.c.l.b16 %v65
  %v584 = vunpack.c.h.b16 %v65
  %v585 = vunpack.c.l.b16 %v66
  %v586 = vunpack.c.h.b16 %v66
  %v587 = vunpack.c.l.b16 %v67
  %v588 = vunpack.c.h.b16 %v67
  %v589 = vunpack.c.l.b16 %v68
  %v590 = vunpack.c.h.b16 %v68
  %v591 = vunpack.c.l.b16 %v69
  %v592 = vunpack.c.h.b16 %v69
  %v593 = vunpack.c.l.b16 %v70
  %v594 = vunpack.c.h.b16 %v70
  %v595 = vunpack.c.l.b16 %v71
  %v596 = vunpack.c.h.b16 %v71
  %v597 = vunpack.c.l.b16 %v72
  %v598 = vunpack.c.h.b16 %v72
  %v599 = vunpack.c.l.b16 %v73
  %v600 = vunpack.c.h.b16 %v73
  %v601 = vunpack.c.l.b16 %v74
  %v602 = vunpack.c.h.b16 %v74
  %v603 = vunpack.c.l.b16 %v75
  %v604 = vunpack.c.h.b16 %v75
  %v605 = vunpack.c.l.b16 %v76
  %v606 = vunpack.c.h.b16 %v76
  %v607 = vunpack.c.l.b16 %v77
  %v608 = vunpack.c.h.b16 %v77
  %v609 = vunpack.c.l.b16 %v78
  %v610 = vunpack.c.h.b16 %v78
  %v611 = vunpack.c.l.b16 %v79
  %v612 = vunpack.c.h.b16 %v79
  %v613 = vunpack.c.l.b16 %v80
  %v614 = vunpack.c.h.b16 %v80
  %v615 = vunpack.c.l.b16 %v81
  %v616 = vunpack.c.h.b16 %v81
  %v617 = vunpack.c.l.b16 %v82
  %v618 = vunpack.c.h.b16 %v82
  %v619 = vunpack.c.l.b16 %v83
  %v620 = vunpack.c.h.b16 %v83
  %v621 = vunpack.c.l.b16 %v84
  %v622 = vunpack.c.h.b16 %v84
  %v623 = vunpack.c.l.b16 %v85
  %v624 = vunpack.c.h.b16 %v85
  %v625 = vunpack.c.l.b16 %v86
  %v626 = vunpack.c.h.b16 %v86
  %v627 = vunpack.c.l.b16 %v87
  %v628 = vunpack.c.h.b16 %v87
  %v629 = vunpack.c.l.b16 %v88
  %v630 = vunpack.c.h.b16 %v88
  %v631 = vunpack.c.l.b16 %v89
  %v632 = vunpack.c.h.b16 %v89
  %v633 = vunpack.c.l.b16 %v90
  %v634 = vunpack.c.h.b16 %v90
  %v635 = vunpack.c.l.b16 %v91
  %v636 = vunpack.c.h.b16 %v91
  %v637 = vunpack.c.l.b16 %v92
  %v638 = vunpack.c.h.b16 %v92
  %v639 = vunpack.c.l.b16 %v93
  %v640 = vunpack.c.h.b16 %v93
  %v641 = vunpack.c.l.b16 %v94
  %v642 = vunpack.c.h.b16 %v94
  %v643 = vunpack.c.l.b16 %v95
  %v644 = vunpack.c.h.b16 %v95
  %v645 = vunpack.c.l.b16 %v96
  %v646 = vunpack.c.h.b16 %v96
  %v647 = vunpack.c.l.b16 %v97
  %v648 = vunpack.c.h.b16 %v97
  %v649 = vunpack.c.l.b16 %v98
  %v650 = vunpack.c.h.b16 %v98
  %v651 = vunpack.c.l.b16 %v99
  %v652 = vunpack.c.h.b16 %v99
  %v653 = vunpack.c.l.b16 %v100
  %v654 = vunpack.c.h.b16 %v100
  %v655 = vunpack.c.l.b16 %v101
  %v656 = vunpack.c.h.b16 %v101
  %v657 = vunpack.c.l.b16 %v102
  %v658 = vunpack.c.h.b16 %v102
  %v659 = vunpack.c.l.b16 %v103
  %v660 = vunpack.c.h.b16 %v103
  %v661 = vunpack.c.l.b16 %v104
  %v662 = vunpack.c.h.b16 %v104
  %v663 = vunpack.c.l.b16 %v105
  %v664 = vunpack.c.h.b16 %v105
  %v665 = vunpack.c.l.b16 %v106
  %v666 = vunpack.c.h.b16 %v106
  %v667 = vunpack.c.l.b16 %v107
  %v668 = vunpack.c.h.b16 %v107
  %v669 = vunpack.c.l.b16 %v108
  %v670 = vunpack.c.h.b16 %v108
  %v671 = vunpack.c.l.b16 %v109
  %v672 = vunpack.c.h.b16 %v109
  %v673 = vunpack.c.l.b16 %v110
  %v674 = vunpack.c.h.b16 %v110
  %v675 = vunpack.c.l.b16 %v111
  %v676 = vunpack.c.h.b16 %v111
  %v677 = vunpack.c.l.b16 %v112
  %v678 = vunpack.c.h.b16 %v112
  %v679 = vunpack.c.l.b16 %v113
  %v680 = vunpack.c.h.b16 %v113
  %v681 = vunpack.c.l.b16 %v114
  %v682 = vunpack.c.h.b16 %v114
  %v683 = vunpack.c.l.b16 %v115
  %v684 = vunpack.c.h.b16 %v115
  %v685 = vunpack.c.l.b16 %v116
  %v686 = vunpack.c.h.b16 %v116
  %v687 = vunpack.c.l.b16 %v117
  %v688 = vunpack.c.h.b16 %v117
  %v689 = vunpack.c.l.b16 %v118
  %v690 = vunpack.c.h.b16 %v118
  %v691 = vunpack.c.l.b16 %v119
  %v692 = vunpack.c.h.b16 %v119
  %v693 = vunpack.c.l.b16 %v120
  %v694 = vunpack.c.h.b16 %v120
  %v695 = vunpack.c.l.b16 %v121
  %v696 = vunpack.c.h.b16 %v121
  %v697 = vunpack.c.l.b16 %v122
  %v698 = vunpack.c.h.b16 %v122
  %v699 = vunpack.c.l.b16 %v123
  %v700 = vunpack.c.h.b16 %v123
  %v701 = vunpack.c.l.b16 %v124
  %v702 = vunpack.c.h.b16 %v124
  %v703 = vunpack.c.l.b16 %v125
  %v704 = vunpack.c.h.b16 %v125
  %v705 = vunpack.c.l.b16 %v126
  %v706 = vunpack.c.h.b16 %v126
  %v707 = vunpack.c.l.b16 %v127
  %v708 = vunpack.c.h.b16 %v127
  %v709 = vunpack.c.l.b16 %v128
  %v710 = vunpack.c.h.b16 %v128
  %v711 = vunpack.c.l.b16 %v129
  %v712 = vunpack.c.h.b16 %v129
  %v713 = vunpack.c.l.b16 %v130
  %v714 = vunpack.c.h.b16 %v130
  %v715 = vunpack.c.l.b16 %v131
  %v716 = vunpack.c.h.b16 %v131
  %v717 = vunpack.c.l.b16 %v132
  %v718 = vunpack.c.h.b16 %v132
  %v719 = vunpack.c.l.b16 %v133
  %v720 = vunpack.c.h.b16 %v133
  %v721 = vunpack.c.l.b16 %v134
  %v722 = vunpack.c.h.b16 %v134
  %v723 = vunpack.c.l.b16 %v135
  %v724 = vunpack.c.h.b16 %v135
  %v725 = vunpack.c.l.b16 %v136
  %v726 = vunpack.c.h.b16 %v136
  %v727 = vunpack.c.l.b16 %v137
  %v728 = vunpack.c.h.b16 %v137
  %v729 = vunpack.c.l.b16 %v138
  %v730 = vunpack.c.h.b16 %v138
  %v731 = vunpack.c.l.b16 %v139
  %v732 = vunpack.c.h.b16 %v139
  %v733 = vunpack.c.l.b16 %v140
  %v734 = vunpack.c.h.b16 %v140
  %v735 = vunpack.c.l.b16 %v141
  %v736 = vunpack.c.h.b16 %v141
  %v737 = vunpack.c.l.b16 %v142
  %v738 = vunpack.c.h.b16 %v142
  %v739 = vunpack.c.l.b16 %v143
  %v740 = vunpack.c.h.b16 %v143
  %v741 = vunpack.c.l.b16 %v144
  %v742 = vunpack.c.h.b16 %v144
  %v743 = vunpack.c.l.b16 %v145
  %v744 = vunpack.c.h.b16 %v145
  %v745 = vunpack.c.l.b16 %v146
  %v746 = vunpack.c.h.b16 %v146
  %v747 = vunpack.c.l.b16 %v147
  %v748 = vunpack.c.h.b16 %v147
  %v749 = vunpack.c.l.b16 %v148
  %v750 = vunpack.c.h.b16 %v148
  %v751 = vunpack.c.l.b16 %v149
  %v752 = vunpack.c.h.b16 %v149
  %v753 = vunpack.c.l.b16 %v150
  %v754 = vunpack.c.h.b16 %v150
  %v755 = vunpack.c.l.b16 %v151
  %v756 = vunpack.c.h.b16 %v151
  %v757 = vunpack.c.l.b16 %v152
  %v758 = vunpack.c.h.b16 %v152
  %v759 = vunpack.c.l.b16 %v153
  %v760 = vunpack.c.h.b16 %v153
  %v761 = vunpack.c.l.b16 %v154
  %v762 = vunpack.c.h.b16 %v154
  %v763 = vunpack.c.l.b16 %v155
  %v764 = vunpack.c.h.b16 %v155
  %v765 = vunpack.c.l.b16 %v156
  %v766 = vunpack.c.h.b16 %v156
  %v767 = vunpack.c.l.b16 %v157
  %v768 = vunpack.c.h.b16 %v157
  %v769 = vunpack.c.l.b16 %v158
  %v770 = vunpack.c.h.b16 %v158
  %v771 = vunpack.c.l.b16 %v159
  %v772 = vunpack.c.h.b16 %v159
  %v773 = vunpack.c.l.b16 %v160
  %v774 = vunpack.c.h.b16 %v160
  %v775 = vunpack.c.l.b16 %v161
  %v776 = vunpack.c.h.b16 %v161
  %v777 = vunpack.c.l.b16 %v162
  %v778 = vunpack.c.h.b16 %v162
  %v779 = vunpack.c.l.b16 %v163
  %v780 = vunpack.c.h.b16 %v163
  %v781 = vunpack.c.l.b16 %v164
  %v782 = vunpack.c.h.b16 %v164
  %v783 = vunpack.c.l.b16 %v165
  %v784 = vunpack.c.h.b16 %v165
  %v785 = vunpack.c.l.b16 %v166
  %v786 = vunpack.c.h.b16 %v166
  %v787 = vunpack.c.l.b16 %v167
  %v788 = vunpack.c.h.b16 %v167
  %v789 = vunpack.c.l.b16 %v168
  %v790 = vunpack.c.h.b16 %v168
  %v791 = vunpack.c.l.b16 %v169
  %v792 = vunpack.c.h.b16 %v169
  %v793 = vunpack.c.l.b16 %v170
  %v794 = vunpack.c.h.b16 %v170
  %v795 = vunpack.c.l.b16 %v171
  %v796 = vunpack.c.h.b16 %v171
  %v797 = vunpack.c.l.b16 %v172
  %v798 = vunpack.c.h.b16 %v172
  %v799 = vunpack.c.l.b16 %v173
  %v800 = vunpack.c.h.b16 %v173
  %v801 = vunpack.c.l.b16 %v174
  %v802 = vunpack.c.h.b16 %v174
  %v803 = vunpack.c.l.b16 %v175
  %v804 = vunpack.c.h.b16 %v175
  %v805 = vunpack.c.l.b16 %v176
  %v806 = vunpack.c.h.b16 %v176
  %v807 = vunpack.c.l.b16 %v177
  %v808 = vunpack.c.h.b16 %v177
  %v809 = vunpack.c.l.b16 %v178
  %v810 = vunpack.c.h.b16 %v178
  %v811 = vunpack.c.l.b16 %v179
  %v812 = vunpack.c.h.b16 %v179
  %v813 = vunpack.c.l.b16 %v180
  %v814 = vunpack.c.h.b16 %v180
  %v815 = vunpack.c.l.b16 %v181
  %v816 = vunpack.c.h.b16 %v181
  %v817 = vunpack.c.l.b16 %v182
  %v818 = vunpack.c.h.b16 %v182
  %v819 = vunpack.c.l.b16 %v183
  %v820 = vunpack.c.h.b16 %v183
  %v821 = vunpack.c.l.b16 %v184
  %v822 = vunpack.c.h.b16 %v184
  %v823 = vunpack.c.l.b16 %v185
  %v824 = vunpack.c.h.b16 %v185
  %v825 = vunpack.c.l.b16 %v186
  %v826 = vunpack.c.h.b16 %v186
  %v827 = vunpack.c.l.b16 %v187
  %v828 = vunpack.c.h.b16 %v187
  %v829 = vunpack.c.l.b16 %v188
  %v830 = vunpack.c.h.b16 %v188
  %v831 = vunpack.c.l.b16 %v189
  %v832 = vunpack.c.h.b16 %v189
  %v833 = vunpack.c.l.b16 %v190
  %v834 = vunpack.c.h.b16 %v190
  %v835 = vunpack.c.l.b16 %v191
  %v836 = vunpack.c.h.b16 %v191
  %v837 = vunpack.c.l.b16 %v192
  %v838 = vunpack.c.h.b16 %v192
  %v839 = vunpack.c.l.b16 %v193
  %v840 = vunpack.c.h.b16 %v193
  %v841 = vunpack.c.l.b16 %v194
  %v842 = vunpack.c.h.b16 %v194
  %v843 = vunpack.c.l.b16 %v195
  %v844 = vunpack.c.h.b16 %v195
  %v845 = vunpack.c.l.b16 %v196
  %v846 = vunpack.c.h.b16 %v196
  %v847 = vunpack.c.l.b16 %v197
  %v848 = vunpack.c.h.b16 %v197
  %v849 = vunpack.c.l.b16 %v198
  %v850 = vunpack.c.h.b16 %v198
  %v851 = vunpack.c.l.b16 %v199
  %v852 = vunpack.c.h.b16 %v199
  %v853 = vunpack.c.l.b16 %v200
  %v854 = vunpack.c.h.b16 %v200
  %v855 = vunpack.c.l.b16 %v201
  %v856 = vunpack.c.h.b16 %v201
  %v857 = vunpack.c.l.b16 %v202
  %v858 = vunpack.c.h.b16 %v202
  %v859 = vunpack.c.l.b16 %v203
  %v860 = vunpack.c.h.b16 %v203
  %v861 = vunpack.c.l.b16 %v204
  %v862 = vunpack.c.h.b16 %v204
  %v863 = vunpack.c.l.b16 %v205
  %v864 = vunpack.c.h.b16 %v205
  %v865 = vunpack.c.l.b16 %v206
  %v866 = vunpack.c.h.b16 %v206
  %v867 = vunpack.c.l.b16 %v207
  %v868 = vunpack.c.h.b16 %v207
  %v869 = vunpack.c.l.b16 %v208
  %v870 = vunpack.c.h.b16 %v208
  %v871 = vunpack.c.l.b16 %v209
  %v872 = vunpack.c.h.b16 %v209
  %v873 = vunpack.c.l.b16 %v210
  %v874 = vunpack.c.h.b16 %v210
  %v875 = vunpack.c.l.b16 %v211
  %v876 = vunpack.c.h.b16 %v211
  %v877 = vunpack.c.l.b16 %v212
  %v878 = vunpack.c.h.b16 %v212
  %v879 = vunpack.c.l.b16 %v213
  %v880 = vunpack.c.h.b16 %v213
  %v881 = vunpack.c.l.b16 %v214
  %v882 = vunpack.c.h.b16 %v214
  %v883 = vunpack.c.l.b16 %v215
  %v884 = vunpack.c.h.b16 %v215
  %v885 = vunpack.c.l.b16 %v216
  %v886 = vunpack.c.h.b16 %v216
  %v887 = vunpack.c.l.b16 %v217
  %v888 = vunpack.c.h.b16 %v217
  %v889 = vunpack.c.l.b16 %v218
  %v890 = vunpack.c.h.b16 %v218
  %v891 = vunpack.c.l.b16 %v219
  %v892 = vunpack.c.h.b16 %v219
  %v893 = vunpack.c.l.b16 %v220
  %v894 = vunpack.c.h.b16 %v220
  %v895 = vunpack.c.l.b16 %v221
  %v896 = vunpack.c.h.b16 %v221
  %v897 = vunpack.c.l.b16 %v222
  %v898 = vunpack.c.h.b16 %v222
  %v899 = vunpack.c.l.b16 %v223
  %v900 = vunpack.c.h.b16 %v223
  %v901 = vunpack.c.l.b16 %v224
  %v902 = vunpack.c.h.b16 %v224
  %v903 = vunpack.c.l.b16 %v225
  %v904 = vunpack.c.h.b16 %v225
  %v905 = vunpack.c.l.b16 %v226
  %v906 = vunpack.c.h.b16 %v226
  %v907 = vunpack.c.l.b16 %v227
  %v908 = vunpack.c.h.b16 %v227
  %v909 = vunpack.c.l.b16 %v228
  %v910 = vunpack.c.h.b16 %v228
  %v911 = vunpack.c.l.b16 %v229
  %v912 = vunpack.c.h.b16 %v229
  %v913 = vunpack.c.l.b16 %v230
  %v914 = vunpack.c.h.b16 %v230
  %v915 = vunpack.c.l.b16 %v231
  %v916 = vunpack.c.h.b16 %v231
  %v917 = vunpack.c.l.b16 %v232
  %v918 = vunpack.c.h.b16 %v232
  %v919 = vunpack.c.l.b16 %v233
  %v920 = vunpack.c.h.b16 %v233
  %v921 = vunpack.c.l.b16 %v234
  %v922 = vunpack.c.h.b16 %v234
  %v923 = vunpack.c.l.b16 %v235
  %v924 = vunpack.c.h.b16 %v235
  %v925 = vunpack.c.l.b16 %v236
  %v926 = vunpack.c.h.b16 %v236
  %v927 = vunpack.c.l.b16 %v237
  %v928 = vunpack.c.h.b16 %v237
  %v929 = vunpack.c.l.b16 %v238
  %v930 = vunpack.c.h.b16 %v238
  %v931 = vunpack.c.l.b16 %v239
  %v932 = vunpack.c.h.b16 %v239
  %v933 = vunpack.c.l.b16 %v240
  %v934 = vunpack.c.h.b16 %v240
  %v935 = vunpack.c.l.b16 %v241
  %v936 = vunpack.c.h.b16 %v241
  %v937 = vunpack.c.l.b16 %v242
  %v938 = vunpack.c.h.b16 %v242
  %v939 = vunpack.c.l.b16 %v243
  %v940 = vunpack.c.h.b16 %v243
  %v941 = vunpack.c.l.b16 %v244
  %v942 = vunpack.c.h.b16 %v244
  %v943 = vunpack.c.l.b16 %v245
  %v944 = vunpack.c.h.b16 %v245
  %v945 = vunpack.c.l.b16 %v246
  %v946 = vunpack.c.h.b16 %v246
  %v947 = vunpack.c.l.b16 %v247
  %v948 = vunpack.c.h.b16 %v247
  %v949 = vunpack.c.l.b16 %v248
  %v950 = vunpack.c.h.b16 %v248
  %v951 = vunpack.c.l.b16 %v249
  %v952 = vunpack.c.h.b16 %v249
  %v953 = vunpack.c.l.b16 %v250
  %v954 = vunpack.c.h.b16 %v250
  %v955 = vunpack.c.l.b16 %v251
  %v956 = vunpack.c.h.b16 %v251
  %v957 = vunpack.c.l.b16 %v252
  %v958 = vunpack.c.h.b16 %v252
  %v959 = vunpack.c.l.b16 %v253
  %v960 = vunpack.c.h.b16 %v253
  %v961 = vunpack.c.l.b16 %v254
  %v962 = vunpack.c.h.b16 %v254
  %v963 = vunpack.c.l.b16 %v255
  %v964 = vunpack.c.h.b16 %v255
  %v965 = vunpack.c.l.b16 %v256
  %v966 = vunpack.c.h.b16 %v256
  %v967 = vunpack.c.l.b16 %v257
  %v968 = vunpack.c.h.b16 %v257
  %v969 = vunpack.c.l.b16 %v258
  %v970 = vunpack.c.h.b16 %v258
  %v971 = vunpack.c.l.b16 %v259
  %v972 = vunpack.c.h.b16 %v259
  %v973 = vunpack.c.l.b16 %v260
  %v974 = vunpack.c.h.b16 %v260
  %v975 = vunpack.c.l.b16 %v261
  %v976 = vunpack.c.h.b16 %v261
  %v977 = vunpack.c.l.b16 %v262
  %v978 = vunpack.c.h.b16 %v262
  %v979 = vunpack.c.l.b16 %v263
  %v980 = vunpack.c.h.b16 %v263
  %v981 = vunpack.c.l.b16 %v264
  %v982 = vunpack.c.h.b16 %v264
  %v983 = vunpack.c.l.b16 %v265
  %v984 = vunpack.c.h.b16 %v265
  %v985 = vunpack.c.l.b16 %v266
  %v986 = vunpack.c.h.b16 %v266
  %v987 = vunpack.c.l.b16 %v267
  %v988 = vunpack.c.h.b16 %v267
  %v989 = vunpack.c.l.b16 %v268
  %v990 = vunpack.c.h.b16 %v268
  %v991 = vunpack.c.l.b16 %v269
  %v992 = vunpack.c.h.b16 %v269
  %v993 = vunpack.c.l.b16 %v270
  %v994 = vunpack.c.h.b16 %v270
  %v995 = vunpack.c.l.b16 %v271
  %v996 = vunpack.c.h.b16 %v271
  %v997 = vunpack.c.l.b16 %v272
  %v998 = vunpack.c.h.b16 %v272
  %v999 = vunpack.c.l.b16 %v273
  %v1000 = vunpack.c.h.b16 %v273
  %v1001 = vunpack.c.l.b16 %v274
  %v1002 = vunpack.c.h.b16 %v274
  %v1003 = vunpack.c.l.b16 %v275
  %v1004 = vunpack.c.h.b16 %v275
  %v1005 = vunpack.c.l.b16 %v276
  %v1006 = vunpack.c.h.b16 %v276
  %v1007 = vpack.c.b16 %v563, %v559
  %v1008 = vpack.c.b16 %v564, %v560
  %v1009 = vpack.c.b16 %v565, %v561
  %v1010 = vpack.c.b16 %v566, %v562
  %v1011 = vpack.c.b16 %v571, %v567
  %v1012 = vpack.c.b16 %v572, %v568
  %v1013 = vpack.c.b16 %v573, %v569
  %v1014 = vpack.c.b16 %v574, %v570
  %v1015 = vpack.c.b16 %v579, %v575
  %v1016 = vpack.c.b16 %v580, %v576
  %v1017 = vpack.c.b16 %v581, %v577
  %v1018 = vpack.c.b16 %v582, %v578
  %v1019 = vpack.c.b16 %v587, %v583
  %v1020 = vpack.c.b16 %v588, %v584
  %v1021 = vpack.c.b16 %v589, %v585
  %v1022 = vpack.c.b16 %v590, %v586
  %v1023 = vpack.c.b16 %v595, %v591
  %v1024 = vpack.c.b16 %v596, %v592
  %v1025 = vpack.c.b16 %v597, %v593
  %v1026 = vpack.c.b16 %v598, %v594
  %v1027 = vpack.c.b16 %v603, %v599
  %v1028 = vpack.c.b16 %v604, %v600
  %v1029 = vpack.c.b16 %v605, %v601
  %v1030 = vpack.c.b16 %v606, %v602
  %v1031 = vpack.c.b16 %v611, %v607
  %v1032 = vpack.c.b16 %v612, %v608
  %v1033 = vpack.c.b16 %v613, %v609
  %v1034 = vpack.c.b16 %v614, %v610
  %v1035 = vpack.c.b16 %v619, %v615
  %v1036 = vpack.c.b16 %v620, %v616
  %v1037 = vpack.c.b16 %v621, %v617
  %v1038 = vpack.c.b16 %v622, %v618
  %v1039 = vpack.c.b16 %v627, %v623
  %v1040 = vpack.c.b16 %v628, %v624
  %v1041 = vpack.c.b16 %v629, %v625
  %v1042 = vpack.c.b16 %v630, %v626
  %v1043 = vpack.c.b16 %v635, %v631
  %v1044 = vpack.c.b16 %v636, %v632
  %v1045 = vpack.c.b16 %v637, %v633
  %v1046 = vpack.c.b16 %v638, %v634
  %v1047 = vpack.c.b16 %v643, %v639
  %v1048 = vpack.c.b16 %v644, %v640
  %v1049 = vpack.c.b16 %v645, %v641
  %v1050 = vpack.c.b16 %v646, %v642
  %v1051 = vpack.c.b16 %v651, %v647
  %v1052 = vpack.c.b16 %v652, %v648
  %v1053 = vpack.c.b16 %v653, %v649
  %v1054 = vpack.c.b16 %v654, %v650
  %v1055 = vpack.c.b16 %v659, %v655
  %v1056 = vpack.c.b16 %v660, %v656
  %v1057 = vpack.c.b16 %v661, %v657
  %v1058 = vpack.c.b16 %v662, %v658
  %v1059 = vpack.c.b16 %v667, %v663
  %v1060 = vpack.c.b16 %v668, %v664
  %v1061 = vpack.c.b16 %v669, %v665
  %v1062 = vpack.c.b16 %v670, %v666
  %v1063 = vpack.c.b16 %v675, %v671
  %v1064 = vpack.c.b16 %v676, %v672
  %v1065 = vpack.c.b16 %v677, %v673
  %v1066 = vpack.c.b16 %v678, %v674
  %v1067 = vpack.c.b16 %v683, %v679
  %v1068 = vpack.c.b16 %v684, %v680
  %v1069 = vpack.c.b16 %v685, %v681
  %v1070 = vpack.c.b16 %v686, %v682
  %v1071 = vpack.c.b16 %v691, %v687
  %v1072 = vpack.c.b16 %v692, %v688
  %v1073 = vpack.c.b16 %v693, %v689
  %v1074 = vpack.c.b16 %v694, %v690
  %v1075 = vpack.c.b16 %v699, %v695
  %v1076 = vpack.c.b16 %v700, %v696
  %v1077 = vpack.c.b16 %v701, %v697
  %v1078 = vpack.c.b16 %v702, %v698
  %v1079 = vpack.c.b16 %v707, %v703
  %v1080 = vpack.c.b16 %v708, %v704
  %v1081 = vpack.c.b16 %v709, %v705
  %v1082 = vpack.c.b16 %v710, %v706
  %v1083 = vpack.c.b16 %v715, %v711
  %v1084 = vpack.c.b16 %v716, %v712
  %v1085 = vpack.c.b16 %v717, %v713
  %v1086 = vpack.c.b16 %v718, %v714
  %v1087 = vpack.c.b16 %v723, %v719
  %v1088 = vpack.c.b16 %v724, %v720
  %v1089 = vpack.c.b16 %v725, %v721
  %v1090 = vpack.c.b16 %v726, %v722
  %v1091 = vpack.c.b16 %v731, %v727
  %v1092 = vpack.c.b16 %v732, %v728
  %v1093 = vpack.c.b16 %v733, %v729
  %v1094 = vpack.c.b16 %v734, %v730
  %v1095 = vpack.c.b16 %v739, %v735
  %v1096 = vpack.c.b16 %v740, %v736
  %v1097 = vpack.c.b16 %v741, %v737
  %v1098 = vpack.c.b16 %v742, %v738
  %v1099 = vpack.c.b16 %v747, %v743
  %v1100 = vpack.c.b16 %v748, %v744
  %v1101 = vpack.c.b16 %v749, %v745
  %v1102 = vpack.c.b16 %v750, %v746
  %v1103 = vpack.c.b16 %v755, %v751
  %v1104 = vpack.c.b16 %v756, %v752
  %v1105 = vpack.c.b16 %v757, %v753
  %v1106 = vpack.c.b16 %v758, %v754
  %v1107 = vpack.c.b16 %v763, %v759
  %v1108 = vpack.c.b16 %v764, %v760
  %v1109 = vpack.c.b16 %v765, %v761
  %v1110 = vpack.c.b16 %v766, %v762
  %v1111 = vpack.c.b16 %v771, %v767
  %v1112 = vpack.c.b16 %v772, %v768
  %v1113 = vpack.c.b16 %v773, %v769
  %v1114 = vpack.c.b16 %v774, %v770
  %v1115 = vpack.c.b16 %v779, %v775
  %v1116 = vpack.c.b16 %v780, %v776
  %v1117 = vpack.c.b16 %v781, %v777
  %v1118 = vpack.c.b16 %v782, %v778
  %v1119 = vpack.c.b16 %v787, %v783
  %v1120 = vpack.c.b16 %v788, %v784
  %v1121 = vpack.c.b16 %v789, %v785
  %v1122 = vpack.c.b16 %v790, %v786
  %v1123 = vpack.c.b16 %v795, %v791
  %v1124 = vpack.c.b16 %v796, %v792
  %v1125 = vpack.c.b16 %v797, %v793
  %v1126 = vpack.c.b16 %v798, %v794
  %v1127 = vpack.c.b16 %v803, %v799
  %v1128 = vpack.c.b16 %v804, %v800
  %v1129 = vpack.c.b16 %v805, %v801
  %v1130 = vpack.c.b16 %v806, %v802
  %v1131 = vpack.c.b16 %v811, %v807
  %v1132 = vpack.c.b16 %v812, %v808
  %v1133 = vpack.c.b16 %v813, %v809
  %v1134 = vpack.c.b16 %v814, %v810
  %v1135 = vpack.c.b16 %v819, %v815
  %v1136 = vpack.c.b16 %v820, %v816
  %v1137 = vpack.c.b16 %v821, %v817
  %v1138 = vpack.c.b16 %v822, %v818
  %v1139 = vpack.c.b16 %v827, %v823
  %v1140 = vpack.c.b16 %v828, %v824
  %v1141 = vpack.c.b16 %v829, %v825
  %v1142 = vpack.c.b16 %v830, %v826
  %v1143 = vpack.c.b16 %v835, %v831
  %v1144 = vpack.c.b16 %v836, %v832
  %v1145 = vpack.c.b16 %v837, %v833
  %v1146 = vpack.c.b16 %v838, %v834
  %v1147 = vpack.c.b16 %v843, %v839
  %v1148 = vpack.c.b16 %v844, %v840
  %v1149 = vpack.c.b16 %v845, %v841
  %v1150 = vpack.c.b16 %v846, %v842
  %v1151 = vpack.c.b16 %v851, %v847
  %v1152 = vpack.c.b16 %v852, %v848
  %v1153 = vpack.c.b16 %v853, %v849
  %v1154 = vpack.c.b16 %v854, %v850
  %v1155 = vpack.c.b16 %v859, %v855
  %v1156 = vpack.c.b16 %v860, %v856
  %v1157 = vpack.c.b16 %v861, %v857
  %v1158 = vpack.c.b16 %v862, %v858
  %v1159 = vpack.c.b16 %v867, %v863
  %v1160 = vpack.c.b16 %v868, %v864
  %v1161 = vpack.c.b16 %v869, %v865
  %v1162 = vpack.c.b16 %v870, %v866
  %v1163 = vpack.c.b16 %v875, %v871
  %v1164 = vpack.c.b16 %v876, %v872
  %v1165 = vpack.c.b16 %v877, %v873
  %v1166 = vpack.c.b16 %v878, %v874
  %v1167 = vpack.c.b16 %v883, %v879
  %v1168 = vpack.c.b16 %v884, %v880
  %v1169 = vpack.c.b16 %v885, %v881
  %v1170 = vpack.c.b16 %v886, %v882
  %v1171 = vpack.c.b16 %v891, %v887
  %v1172 = vpack.c.b16 %v892, %v888
  %v1173 = vpack.c.b16 %v893, %v889
  %v1174 = vpack.c.b16 %v894, %v890
  %v1175 = vpack.c.b16 %v899, %v895
  %v1176 = vpack.c.b16 %v900, %v896
  %v1177 = vpack.c.b16 %v901, %v897
  %v1178 = vpack.c.b16 %v902, %v898
  %v1179 = vpack.c.b16 %v907, %v903
  %v1180 = vpack.c.b16 %v908, %v904
  %v1181 = vpack.c.b16 %v909, %v905
  %v1182 = vpack.c.b16 %v910, %v906
  %v1183 = vpack.c.b16 %v915, %v911
  %v1184 = vpack.c.b16 %v916, %v912
  %v1185 = vpack.c.b16 %v917, %v913
  %v1186 = vpack.c.b16 %v918, %v914
  %v1187 = vpack.c.b16 %v923, %v919
  %v1188 = vpack.c.b16 %v924, %v920
  %v1189 = vpack.c.b16 %v925, %v921
  %v1190 = vpack.c.b16 %v926, %v922
  %v1191 = vpack.c.b16 %v931, %v927
  %v1192 = vpack.c.b16 %v932, %v928
  %v1193 = vpack.c.b16 %v933, %v929
  %v1194 = vpack.c.b16 %v934, %v930
  %v1195 = vpack.c.b16 %v939, %v935
  %v1196 = vpack.c.b16 %v940, %v936
  %v1197 = vpack.c.b16 %v941, %v937
  %v1198 = vpack.c.b16 %v942, %v938
  %v1199 = vpack.c.b16 %v947, %v943
  %v1200 = vpack.c.b16 %v948, %v944
  %v1201 = vpack.c.b16 %v949, %v945
  %v1202 = vpack.c.b16 %v950, %v946
  %v1203 = vpack.c.b16 %v955, %v951
  %v1204 = vpack.c.b16 %v956, %v952
  %v1205 = vpack.c.b16 %v957, %v953
  %v1206 = vpack.c.b16 %v958, %v954
  %v1207 = vpack.c.b16 %v963, %v959
  %v1208 = vpack.c.b16 %v964, %v960
  %v1209 = vpack.c.b16 %v965, %v961
  %v1210 = vpack.c.b16 %v966, %v962
  %v1211 = vpack.c.b16 %v971, %v967
  %v1212 = vpack.c.b16 %v972, %v968
  %v1213 = vpack.c.b16 %v973, %v969
  %v1214 = vpack.c.b16 %v974, %v970
  %v1215 = vpack.c.b16 %v979, %v975
  %v1216 = vpack.c.b16 %v980, %v976
  %v1217 = vpack.c.b16 %v981, %v977
  %v1218 = vpack.c.b16 %v982, %v978
  %v1219 = vpack.c.b16 %v987, %v983
  %v1220 = vpack.c.b16 %v988, %v984
  %v1221 = vpack.c.b16 %v989, %v985
  %v1222 = vpack.c.b16 %v990, %v986
  %v1223 = vpack.c.b16 %v995, %v991
  %v1224 = vpack.c.b16 %v996, %v992
  %v1225 = vpack.c.b16 %v997, %v993
  %v1226 = vpack.c.b16 %v998, %v994
  %v1227 = vpack.c.b16 %v1003, %v999
  %v1228 = vpack.c.b16 %v1004, %v1000
  %v1229 = vpack.c.b16 %v1005, %v1001
  %v1230 = vpack.c.b16 %v1006, %v1002
  %1455 = vmatprep.subr.bf16.mxu0 %v1036
  %1456 = vmatpush1.bf16.msra.mxu0 %v1035
  %1457 = vmatprep.subr.bf16.mxu0 %v1032
  %1458 = vmatpush1.bf16.msra.mxu0 %v1031
  %1459 = vmatprep.subr.bf16.mxu0 %v1028
  %1460 = vmatpush1.bf16.msra.mxu0 %v1027
  %1461 = vmatprep.subr.bf16.mxu0 %v1024
  %1462 = vmatpush1.bf16.msra.mxu0 %v1023
  %1463 = vmatprep.subr.bf16.mxu0 %v1020
  %1464 = vmatpush1.bf16.msra.mxu0 %v1019
  %1465 = vmatprep.subr.bf16.mxu0 %v1016
  %1466 = vmatpush1.bf16.msra.mxu0 %v1015
  %1467 = vmatprep.subr.bf16.mxu0 %v1012
  %1468 = vmatpush1.bf16.msra.mxu0 %v1011
  %1469 = vmatprep.subr.bf16.mxu0 %v1008
  %1470 = vmatpush1.bf16.msra.mxu0 %v1007
  %1471 = vmatprep.subr.bf16.mxu0 %v1068
  %1472 = vmatpush2.bf16.msra.mxu0 %v1067
  %1473 = vmatprep.subr.bf16.mxu0 %v1064
  %1474 = vmatpush2.bf16.msra.mxu0 %v1063
  %1475 = vmatprep.subr.bf16.mxu0 %v1060
  %1476 = vmatpush2.bf16.msra.mxu0 %v1059
  %1477 = vmatprep.subr.bf16.mxu0 %v1056
  %1478 = vmatpush2.bf16.msra.mxu0 %v1055
  %1479 = vmatprep.subr.bf16.mxu0 %v1052
  %1480 = vmatpush2.bf16.msra.mxu0 %v1051
  %1481 = vmatprep.subr.bf16.mxu0 %v1048
  %1482 = vmatpush2.bf16.msra.mxu0 %v1047
  %1483 = vmatprep.subr.bf16.mxu0 %v1044
  %1484 = vmatpush2.bf16.msra.mxu0 %v1043
  %1485 = vmatprep.subr.bf16.mxu0 %v1040
  %1486 = vmatpush2.bf16.msra.mxu0 %v1039
  %1487 = vmatprep.mubr.bf16.mxu0 %v322
  %1488 = vmatmul.mubr.bf16.gmra.mxu0 %v321
  %v1489 = vpop.f32.mrf.mxu0
  %v1490 = vadd.f32 %v282, %v1489
  %v1491 = vpop.f32.mrf.mxu0
  %v1492 = vadd.f32 %v286, %v1491
  %v1493 = vpop.f32.mrf.mxu0
  %v1494 = vadd.f32 %v282, %v1493
  %v1495 = vpop.f32.mrf.mxu0
  %v1496 = vadd.f32 %v286, %v1495
  %1497 = vdwg.mxu0
  %1498 = vmatprep.subr.bf16.mxu0 %v1100
  %1499 = vmatpush1.bf16.msra.mxu0 %v1099
  %1500 = vmatprep.subr.bf16.mxu0 %v1096
  %1501 = vmatpush1.bf16.msra.mxu0 %v1095
  %1502 = vmatprep.subr.bf16.mxu0 %v1092
  %1503 = vmatpush1.bf16.msra.mxu0 %v1091
  %1504 = vmatprep.subr.bf16.mxu0 %v1088
  %1505 = vmatpush1.bf16.msra.mxu0 %v1087
  %1506 = vmatprep.subr.bf16.mxu0 %v1084
  %1507 = vmatpush1.bf16.msra.mxu0 %v1083
  %1508 = vmatprep.subr.bf16.mxu0 %v1080
  %1509 = vmatpush1.bf16.msra.mxu0 %v1079
  %1510 = vmatprep.subr.bf16.mxu0 %v1076
  %1511 = vmatpush1.bf16.msra.mxu0 %v1075
  %1512 = vmatprep.subr.bf16.mxu0 %v1072
  %1513 = vmatpush1.bf16.msra.mxu0 %v1071
  %1514 = vmatprep.subr.bf16.mxu0 %v1132
  %1515 = vmatpush2.bf16.msra.mxu0 %v1131
  %1516 = vmatprep.subr.bf16.mxu0 %v1128
  %1517 = vmatpush2.bf16.msra.mxu0 %v1127
  %1518 = vmatprep.subr.bf16.mxu0 %v1124
  %1519 = vmatpush2.bf16.msra.mxu0 %v1123
  %1520 = vmatprep.subr.bf16.mxu0 %v1120
  %1521 = vmatpush2.bf16.msra.mxu0 %v1119
  %1522 = vmatprep.subr.bf16.mxu0 %v1116
  %1523 = vmatpush2.bf16.msra.mxu0 %v1115
  %1524 = vmatprep.subr.bf16.mxu0 %v1112
  %1525 = vmatpush2.bf16.msra.mxu0 %v1111
  %1526 = vmatprep.subr.bf16.mxu0 %v1108
  %1527 = vmatpush2.bf16.msra.mxu0 %v1107
  %1528 = vmatprep.subr.bf16.mxu0 %v1104
  %1529 = vmatpush2.bf16.msra.mxu0 %v1103
  %1530 = vmatprep.mubr.bf16.mxu0 %v324
  %1531 = vmatmul.mubr.bf16.gmra.mxu0 %v323
  %v1532 = vpop.f32.mrf.mxu0
  %v1533 = vadd.f32 %v1490, %v1532
  %v1534 = vpop.f32.mrf.mxu0
  %v1535 = vadd.f32 %v1492, %v1534
  %v1536 = vpop.f32.mrf.mxu0
  %v1537 = vadd.f32 %v1494, %v1536
  %v1538 = vpop.f32.mrf.mxu0
  %v1539 = vadd.f32 %v1496, %v1538
  %1540 = vdwg.mxu0
  %1541 = vmatprep.subr.bf16.mxu0 %v1164
  %1542 = vmatpush1.bf16.msra.mxu0 %v1163
  %1543 = vmatprep.subr.bf16.mxu0 %v1160
  %1544 = vmatpush1.bf16.msra.mxu0 %v1159
  %1545 = vmatprep.subr.bf16.mxu0 %v1156
  %1546 = vmatpush1.bf16.msra.mxu0 %v1155
  %1547 = vmatprep.subr.bf16.mxu0 %v1152
  %1548 = vmatpush1.bf16.msra.mxu0 %v1151
  %1549 = vmatprep.subr.bf16.mxu0 %v1148
  %1550 = vmatpush1.bf16.msra.mxu0 %v1147
  %1551 = vmatprep.subr.bf16.mxu0 %v1144
  %1552 = vmatpush1.bf16.msra.mxu0 %v1143
  %1553 = vmatprep.subr.bf16.mxu0 %v1140
  %1554 = vmatpush1.bf16.msra.mxu0 %v1139
  %1555 = vmatprep.subr.bf16.mxu0 %v1136
  %1556 = vmatpush1.bf16.msra.mxu0 %v1135
  %1557 = vmatprep.subr.bf16.mxu0 %v1196
  %1558 = vmatpush2.bf16.msra.mxu0 %v1195
  %1559 = vmatprep.subr.bf16.mxu0 %v1192
  %1560 = vmatpush2.bf16.msra.mxu0 %v1191
  %1561 = vmatprep.subr.bf16.mxu0 %v1188
  %1562 = vmatpush2.bf16.msra.mxu0 %v1187
  %1563 = vmatprep.subr.bf16.mxu0 %v1184
  %1564 = vmatpush2.bf16.msra.mxu0 %v1183
  %1565 = vmatprep.subr.bf16.mxu0 %v1180
  %1566 = vmatpush2.bf16.msra.mxu0 %v1179
  %1567 = vmatprep.subr.bf16.mxu0 %v1176
  %1568 = vmatpush2.bf16.msra.mxu0 %v1175
  %1569 = vmatprep.subr.bf16.mxu0 %v1172
  %1570 = vmatpush2.bf16.msra.mxu0 %v1171
  %1571 = vmatprep.subr.bf16.mxu0 %v1168
  %1572 = vmatpush2.bf16.msra.mxu0 %v1167
  %1573 = vmatprep.mubr.bf16.mxu0 %v326
  %1574 = vmatmul.mubr.bf16.gmra.mxu0 %v325
  %v1575 = vpop.f32.mrf.mxu0
  %v1576 = vadd.f32 %v1533, %v1575
  %v1577 = vpop.f32.mrf.mxu0
  %v1578 = vadd.f32 %v1535, %v1577
  %v1579 = vpop.f32.mrf.mxu0
  %v1580 = vadd.f32 %v1537, %v1579
  %v1581 = vpop.f32.mrf.mxu0
  %v1582 = vadd.f32 %v1539, %v1581
  %1583 = vdwg.mxu0
  %1584 = vmatprep.subr.bf16.mxu0 %v1228
  %1585 = vmatpush1.bf16.msra.mxu0 %v1227
  %1586 = vmatprep.subr.bf16.mxu0 %v1224
  %1587 = vmatpush1.bf16.msra.mxu0 %v1223
  %1588 = vmatprep.subr.bf16.mxu0 %v1220
  %1589 = vmatpush1.bf16.msra.mxu0 %v1219
  %1590 = vmatprep.subr.bf16.mxu0 %v1216
  %1591 = vmatpush1.bf16.msra.mxu0 %v1215
  %1592 = vmatprep.subr.bf16.mxu0 %v1212
  %1593 = vmatpush1.bf16.msra.mxu0 %v1211
  %1594 = vmatprep.subr.bf16.mxu0 %v1208
  %1595 = vmatpush1.bf16.msra.mxu0 %v1207
  %1596 = vmatprep.subr.bf16.mxu0 %v1204
  %1597 = vmatpush1.bf16.msra.mxu0 %v1203
  %1598 = vmatprep.subr.bf16.mxu0 %v1200
  %1599 = vmatpush1.bf16.msra.mxu0 %v1199
  %1600 = vmatprep.subr.bf16.mxu0 0
  %1601 = vmatpush2.bf16.msra.mxu0 0
  %1602 = vmatprep.subr.bf16.mxu0 0
  %1603 = vmatpush2.bf16.msra.mxu0 0
  %1604 = vmatprep.subr.bf16.mxu0 0
  %1605 = vmatpush2.bf16.msra.mxu0 0
  %1606 = vmatprep.subr.bf16.mxu0 0
  %1607 = vmatpush2.bf16.msra.mxu0 0
  %1608 = vmatprep.subr.bf16.mxu0 0
  %1609 = vmatpush2.bf16.msra.mxu0 0
  %1610 = vmatprep.subr.bf16.mxu0 0
  %1611 = vmatpush2.bf16.msra.mxu0 0
  %1612 = vmatprep.subr.bf16.mxu0 0
  %1613 = vmatpush2.bf16.msra.mxu0 0
  %1614 = vmatprep.subr.bf16.mxu0 0
  %1615 = vmatpush2.bf16.msra.mxu0 0
  %1616 = vmatprep.mubr.bf16.mxu0 0
  %1617 = vmatmul.mubr.bf16.gmra.mxu0 %v327
  %v1618 = vpop.f32.mrf.mxu0
  %v1619 = vadd.f32 %v1576, %v1618
  %v1620 = vpop.f32.mrf.mxu0
  %v1621 = vadd.f32 %v1578, %v1620
  %v1622 = vpop.f32.mrf.mxu0
  %v1623 = vadd.f32 %v1580, %v1622
  %v1624 = vpop.f32.mrf.mxu0
  %v1625 = vadd.f32 %v1582, %v1624
  %1626 = vdwg.mxu0
  %1627 = vmatprep.subr.bf16.mxu0 %v1038
  %1628 = vmatpush1.bf16.msra.mxu0 %v1037
  %1629 = vmatprep.subr.bf16.mxu0 %v1034
  %1630 = vmatpush1.bf16.msra.mxu0 %v1033
  %1631 = vmatprep.subr.bf16.mxu0 %v1030
  %1632 = vmatpush1.bf16.msra.mxu0 %v1029
  %1633 = vmatprep.subr.bf16.mxu0 %v1026
  %1634 = vmatpush1.bf16.msra.mxu0 %v1025
  %1635 = vmatprep.subr.bf16.mxu0 %v1022
  %1636 = vmatpush1.bf16.msra.mxu0 %v1021
  %1637 = vmatprep.subr.bf16.mxu0 %v1018
  %1638 = vmatpush1.bf16.msra.mxu0 %v1017
  %1639 = vmatprep.subr.bf16.mxu0 %v1014
  %1640 = vmatpush1.bf16.msra.mxu0 %v1013
  %1641 = vmatprep.subr.bf16.mxu0 %v1010
  %1642 = vmatpush1.bf16.msra.mxu0 %v1009
  %1643 = vmatprep.subr.bf16.mxu0 %v1070
  %1644 = vmatpush2.bf16.msra.mxu0 %v1069
  %1645 = vmatprep.subr.bf16.mxu0 %v1066
  %1646 = vmatpush2.bf16.msra.mxu0 %v1065
  %1647 = vmatprep.subr.bf16.mxu0 %v1062
  %1648 = vmatpush2.bf16.msra.mxu0 %v1061
  %1649 = vmatprep.subr.bf16.mxu0 %v1058
  %1650 = vmatpush2.bf16.msra.mxu0 %v1057
  %1651 = vmatprep.subr.bf16.mxu0 %v1054
  %1652 = vmatpush2.bf16.msra.mxu0 %v1053
  %1653 = vmatprep.subr.bf16.mxu0 %v1050
  %1654 = vmatpush2.bf16.msra.mxu0 %v1049
  %1655 = vmatprep.subr.bf16.mxu0 %v1046
  %1656 = vmatpush2.bf16.msra.mxu0 %v1045
  %1657 = vmatprep.subr.bf16.mxu0 %v1042
  %1658 = vmatpush2.bf16.msra.mxu0 %v1041
  %1659 = vmatprep.mubr.bf16.mxu0 %v322
  %1660 = vmatmul.mubr.bf16.gmra.mxu0 %v321
  %v1661 = vpop.f32.mrf.mxu0
  %v1662 = vadd.f32 %v290, %v1661
  %v1663 = vpop.f32.mrf.mxu0
  %v1664 = vadd.f32 %v294, %v1663
  %v1665 = vpop.f32.mrf.mxu0
  %v1666 = vadd.f32 %v290, %v1665
  %v1667 = vpop.f32.mrf.mxu0
  %v1668 = vadd.f32 %v294, %v1667
  %1669 = vdwg.mxu0
  %1670 = vmatprep.subr.bf16.mxu0 %v1102
  %1671 = vmatpush1.bf16.msra.mxu0 %v1101
  %1672 = vmatprep.subr.bf16.mxu0 %v1098
  %1673 = vmatpush1.bf16.msra.mxu0 %v1097
  %1674 = vmatprep.subr.bf16.mxu0 %v1094
  %1675 = vmatpush1.bf16.msra.mxu0 %v1093
  %1676 = vmatprep.subr.bf16.mxu0 %v1090
  %1677 = vmatpush1.bf16.msra.mxu0 %v1089
  %1678 = vmatprep.subr.bf16.mxu0 %v1086
  %1679 = vmatpush1.bf16.msra.mxu0 %v1085
  %1680 = vmatprep.subr.bf16.mxu0 %v1082
  %1681 = vmatpush1.bf16.msra.mxu0 %v1081
  %1682 = vmatprep.subr.bf16.mxu0 %v1078
  %1683 = vmatpush1.bf16.msra.mxu0 %v1077
  %1684 = vmatprep.subr.bf16.mxu0 %v1074
  %1685 = vmatpush1.bf16.msra.mxu0 %v1073
  %1686 = vmatprep.subr.bf16.mxu0 %v1134
  %1687 = vmatpush2.bf16.msra.mxu0 %v1133
  %1688 = vmatprep.subr.bf16.mxu0 %v1130
  %1689 = vmatpush2.bf16.msra.mxu0 %v1129
  %1690 = vmatprep.subr.bf16.mxu0 %v1126
  %1691 = vmatpush2.bf16.msra.mxu0 %v1125
  %1692 = vmatprep.subr.bf16.mxu0 %v1122
  %1693 = vmatpush2.bf16.msra.mxu0 %v1121
  %1694 = vmatprep.subr.bf16.mxu0 %v1118
  %1695 = vmatpush2.bf16.msra.mxu0 %v1117
  %1696 = vmatprep.subr.bf16.mxu0 %v1114
  %1697 = vmatpush2.bf16.msra.mxu0 %v1113
  %1698 = vmatprep.subr.bf16.mxu0 %v1110
  %1699 = vmatpush2.bf16.msra.mxu0 %v1109
  %1700 = vmatprep.subr.bf16.mxu0 %v1106
  %1701 = vmatpush2.bf16.msra.mxu0 %v1105
  %1702 = vmatprep.mubr.bf16.mxu0 %v324
  %1703 = vmatmul.mubr.bf16.gmra.mxu0 %v323
  %v1704 = vpop.f32.mrf.mxu0
  %v1705 = vadd.f32 %v1662, %v1704
  %v1706 = vpop.f32.mrf.mxu0
  %v1707 = vadd.f32 %v1664, %v1706
  %v1708 = vpop.f32.mrf.mxu0
  %v1709 = vadd.f32 %v1666, %v1708
  %v1710 = vpop.f32.mrf.mxu0
  %v1711 = vadd.f32 %v1668, %v1710
  %1712 = vdwg.mxu0
  %1713 = vmatprep.subr.bf16.mxu0 %v1166
  %1714 = vmatpush1.bf16.msra.mxu0 %v1165
  %1715 = vmatprep.subr.bf16.mxu0 %v1162
  %1716 = vmatpush1.bf16.msra.mxu0 %v1161
  %1717 = vmatprep.subr.bf16.mxu0 %v1158
  %1718 = vmatpush1.bf16.msra.mxu0 %v1157
  %1719 = vmatprep.subr.bf16.mxu0 %v1154
  %1720 = vmatpush1.bf16.msra.mxu0 %v1153
  %1721 = vmatprep.subr.bf16.mxu0 %v1150
  %1722 = vmatpush1.bf16.msra.mxu0 %v1149
  %1723 = vmatprep.subr.bf16.mxu0 %v1146
  %1724 = vmatpush1.bf16.msra.mxu0 %v1145
  %1725 = vmatprep.subr.bf16.mxu0 %v1142
  %1726 = vmatpush1.bf16.msra.mxu0 %v1141
  %1727 = vmatprep.subr.bf16.mxu0 %v1138
  %1728 = vmatpush1.bf16.msra.mxu0 %v1137
  %1729 = vmatprep.subr.bf16.mxu0 %v1198
  %1730 = vmatpush2.bf16.msra.mxu0 %v1197
  %1731 = vmatprep.subr.bf16.mxu0 %v1194
  %1732 = vmatpush2.bf16.msra.mxu0 %v1193
  %1733 = vmatprep.subr.bf16.mxu0 %v1190
  %1734 = vmatpush2.bf16.msra.mxu0 %v1189
  %1735 = vmatprep.subr.bf16.mxu0 %v1186
  %1736 = vmatpush2.bf16.msra.mxu0 %v1185
  %1737 = vmatprep.subr.bf16.mxu0 %v1182
  %1738 = vmatpush2.bf16.msra.mxu0 %v1181
  %1739 = vmatprep.subr.bf16.mxu0 %v1178
  %1740 = vmatpush2.bf16.msra.mxu0 %v1177
  %1741 = vmatprep.subr.bf16.mxu0 %v1174
  %1742 = vmatpush2.bf16.msra.mxu0 %v1173
  %1743 = vmatprep.subr.bf16.mxu0 %v1170
  %1744 = vmatpush2.bf16.msra.mxu0 %v1169
  %1745 = vmatprep.mubr.bf16.mxu0 %v326
  %1746 = vmatmul.mubr.bf16.gmra.mxu0 %v325
  %v1747 = vpop.f32.mrf.mxu0
  %v1748 = vadd.f32 %v1705, %v1747
  %v1749 = vpop.f32.mrf.mxu0
  %v1750 = vadd.f32 %v1707, %v1749
  %v1751 = vpop.f32.mrf.mxu0
  %v1752 = vadd.f32 %v1709, %v1751
  %v1753 = vpop.f32.mrf.mxu0
  %v1754 = vadd.f32 %v1711, %v1753
  %1755 = vdwg.mxu0
  %1756 = vmatprep.subr.bf16.mxu0 %v1230
  %1757 = vmatpush1.bf16.msra.mxu0 %v1229
  %1758 = vmatprep.subr.bf16.mxu0 %v1226
  %1759 = vmatpush1.bf16.msra.mxu0 %v1225
  %1760 = vmatprep.subr.bf16.mxu0 %v1222
  %1761 = vmatpush1.bf16.msra.mxu0 %v1221
  %1762 = vmatprep.subr.bf16.mxu0 %v1218
  %1763 = vmatpush1.bf16.msra.mxu0 %v1217
  %1764 = vmatprep.subr.bf16.mxu0 %v1214
  %1765 = vmatpush1.bf16.msra.mxu0 %v1213
  %1766 = vmatprep.subr.bf16.mxu0 %v1210
  %1767 = vmatpush1.bf16.msra.mxu0 %v1209
  %1768 = vmatprep.subr.bf16.mxu0 %v1206
  %1769 = vmatpush1.bf16.msra.mxu0 %v1205
  %1770 = vmatprep.subr.bf16.mxu0 %v1202
  %1771 = vmatpush1.bf16.msra.mxu0 %v1201
  %1772 = vmatprep.subr.bf16.mxu0 0
  %1773 = vmatpush2.bf16.msra.mxu0 0
  %1774 = vmatprep.subr.bf16.mxu0 0
  %1775 = vmatpush2.bf16.msra.mxu0 0
  %1776 = vmatprep.subr.bf16.mxu0 0
  %1777 = vmatpush2.bf16.msra.mxu0 0
  %1778 = vmatprep.subr.bf16.mxu0 0
  %1779 = vmatpush2.bf16.msra.mxu0 0
  %1780 = vmatprep.subr.bf16.mxu0 0
  %1781 = vmatpush2.bf16.msra.mxu0 0
  %1782 = vmatprep.subr.bf16.mxu0 0
  %1783 = vmatpush2.bf16.msra.mxu0 0
  %1784 = vmatprep.subr.bf16.mxu0 0
  %1785 = vmatpush2.bf16.msra.mxu0 0
  %1786 = vmatprep.subr.bf16.mxu0 0
  %1787 = vmatpush2.bf16.msra.mxu0 0
  %1788 = vmatprep.mubr.bf16.mxu0 0
  %1789 = vmatmul.mubr.bf16.gmra.mxu0 %v327
  %v1790 = vpop.f32.mrf.mxu0
  %v1791 = vadd.f32 %v1748, %v1790
  %v1792 = vpop.f32.mrf.mxu0
  %v1793 = vadd.f32 %v1750, %v1792
  %v1794 = vpop.f32.mrf.mxu0
  %v1795 = vadd.f32 %v1752, %v1794
  %v1796 = vpop.f32.mrf.mxu0
  %v1797 = vadd.f32 %v1754, %v1796
  %1798 = vdwg.mxu0
  %v1799 = vmul.f32 %v1619, 0.5
  %v1800 = vmul.f32 %v1621, 0.5
  %v1801 = vmul.f32 %v1791, 0.5
  %v1802 = vmul.f32 %v1793, 0.5
  %v1803 = vmul.f32 %v1623, 0.5
  %v1804 = vmul.f32 %v1625, 0.5
  %v1805 = vmul.f32 %v1795, 0.5
  %v1806 = vmul.f32 %v1797, 0.5
  %v1807 = vmax.f32 %v1619, %v1799
  %v1808 = vmax.f32 %v1621, %v1800
  %v1809 = vmax.f32 %v1791, %v1801
  %v1810 = vmax.f32 %v1793, %v1802
  %v1811 = vmax.f32 %v1623, %v1803
  %v1812 = vmax.f32 %v1625, %v1804
  %v1813 = vmax.f32 %v1795, %v1805
  %v1814 = vmax.f32 %v1797, %v1806
  %v1815 = vpack.c.bf16 %v1811, %v1807
  %v1816 = vpack.c.bf16 %v1812, %v1808
  %v1817 = vpack.c.bf16 %v1813, %v1809
  %v1818 = vpack.c.bf16 %v1814, %v1810
  %v1819 = vld [vmem:[%s3] sm:$0xff]
  %v1820 = vld [vmem:[%s3 + $0x8] sm:$0xff]
  %v1821 = vld [vmem:[%s3 + $0x10] sm:$0xff]
  %v1822 = vld [vmem:[%s3 + $0x18] sm:$0xff]
  %v1823 = vld [vmem:[%s3 + $0x20] sm:$0xff]
  %v1824 = vld [vmem:[%s3 + $0x28] sm:$0xff]
  %v1825 = vld [vmem:[%s3 + $0x30] sm:$0xff]
  %v1826 = vld [vmem:[%s3 + $0x38] sm:$0xff]
  %v1827 = vld [vmem:[%s3 + $0x40] sm:$0xff]
  %v1828 = vld [vmem:[%s3 + $0x48] sm:$0xff]
  %v1829 = vld [vmem:[%s3 + $0x50] sm:$0xff]
  %v1830 = vld [vmem:[%s3 + $0x58] sm:$0xff]
  %v1831 = vld [vmem:[%s3 + $0x60] sm:$0xff]
  %v1832 = vld [vmem:[%s3 + $0x68] sm:$0xff]
  %v1833 = vld [vmem:[%s3 + $0x70] sm:$0xff]
  %v1834 = vld [vmem:[%s3 + $0x78] sm:$0xff]
  %v1835 = vld [vmem:[%s3 + $0x80] sm:$0xff]
  %v1836 = vld [vmem:[%s3 + $0x88] sm:$0xff]
  %v1837 = vld [vmem:[%s3 + $0x90] sm:$0xff]
  %v1838 = vld [vmem:[%s3 + $0x98] sm:$0xff]
  %v1839 = vld [vmem:[%s3 + $0xa0] sm:$0xff]
  %v1840 = vld [vmem:[%s3 + $0xa8] sm:$0xff]
  %v1841 = vld [vmem:[%s3 + $0xb0] sm:$0xff]
  %v1842 = vld [vmem:[%s3 + $0xb8] sm:$0xff]
  %v1843 = vld [vmem:[%s3 + $0xc0] sm:$0xff]
  %v1844 = vld [vmem:[%s3 + $0xc8] sm:$0xff]
  %v1845 = vld [vmem:[%s3 + $0xd0] sm:$0xff]
  %v1846 = vld [vmem:[%s3 + $0xd8] sm:$0xff]
  %v1847 = vld [vmem:[%s3 + $0xe0] sm:$0xff]
  %v1848 = vld [vmem:[%s3 + $0xe8] sm:$0xff]
  %v1849 = vld [vmem:[%s3 + $0xf0] sm:$0xff]
  %v1850 = vld [vmem:[%s3 + $0xf8] sm:$0xff]
  %v1851 = vld [vmem:[%s3 + $0x100] sm:$0xff]
  %v1852 = vld [vmem:[%s3 + $0x108] sm:$0xff]
  %v1853 = vld [vmem:[%s3 + $0x110] sm:$0xff]
  %v1854 = vld [vmem:[%s3 + $0x118] sm:$0xff]
  %v1855 = vld [vmem:[%s3 + $0x120] sm:$0xff]
  %v1856 = vld [vmem:[%s3 + $0x128] sm:$0xff]
  %v1857 = vld [vmem:[%s3 + $0x130] sm:$0xff]
  %v1858 = vld [vmem:[%s3 + $0x138] sm:$0xff]
  %v1859 = vld [vmem:[%s3 + $0x140] sm:$0xff]
  %v1860 = vld [vmem:[%s3 + $0x148] sm:$0xff]
  %v1861 = vld [vmem:[%s3 + $0x150] sm:$0xff]
  %v1862 = vld [vmem:[%s3 + $0x158] sm:$0xff]
  %v1863 = vld [vmem:[%s3 + $0x160] sm:$0xff]
  %v1864 = vld [vmem:[%s3 + $0x168] sm:$0xff]
  %v1865 = vld [vmem:[%s3 + $0x170] sm:$0xff]
  %v1866 = vld [vmem:[%s3 + $0x178] sm:$0xff]
  %v1867 = vld [vmem:[%s3 + $0x180] sm:$0xff]
  %v1868 = vld [vmem:[%s4] sm:$0x3]
  %v1870 = vlaneseq
  %v1871 = vshrl.u32 %v1870, 7
  %v1872 = vsub.s32 0, %v1871
  %v1873 = vrot.slane %v1868, %v1872
  %v1874 = vlaneseq
  %v1875 = vshrl.u32 %v1874, 7
  %v1876 = vsub.s32 1, %v1875
  %v1877 = vrot.slane %v1868, %v1876
  %v1929 = vunpack.c.l.b16 %v1819
  %v1930 = vunpack.c.h.b16 %v1819
  %v1931 = vunpack.c.l.b16 %v1820
  %v1932 = vunpack.c.h.b16 %v1820
  %v1933 = vunpack.c.l.b16 %v1821
  %v1934 = vunpack.c.h.b16 %v1821
  %v1935 = vunpack.c.l.b16 %v1822
  %v1936 = vunpack.c.h.b16 %v1822
  %v1937 = vunpack.c.l.b16 %v1823
  %v1938 = vunpack.c.h.b16 %v1823
  %v1939 = vunpack.c.l.b16 %v1824
  %v1940 = vunpack.c.h.b16 %v1824
  %v1941 = vunpack.c.l.b16 %v1825
  %v1942 = vunpack.c.h.b16 %v1825
  %v1943 = vunpack.c.l.b16 %v1826
  %v1944 = vunpack.c.h.b16 %v1826
  %v1945 = vunpack.c.l.b16 %v1827
  %v1946 = vunpack.c.h.b16 %v1827
  %v1947 = vunpack.c.l.b16 %v1828
  %v1948 = vunpack.c.h.b16 %v1828
  %v1949 = vunpack.c.l.b16 %v1829
  %v1950 = vunpack.c.h.b16 %v1829
  %v1951 = vunpack.c.l.b16 %v1830
  %v1952 = vunpack.c.h.b16 %v1830
  %v1953 = vunpack.c.l.b16 %v1831
  %v1954 = vunpack.c.h.b16 %v1831
  %v1955 = vunpack.c.l.b16 %v1832
  %v1956 = vunpack.c.h.b16 %v1832
  %v1957 = vunpack.c.l.b16 %v1833
  %v1958 = vunpack.c.h.b16 %v1833
  %v1959 = vunpack.c.l.b16 %v1834
  %v1960 = vunpack.c.h.b16 %v1834
  %v1961 = vunpack.c.l.b16 %v1835
  %v1962 = vunpack.c.h.b16 %v1835
  %v1963 = vunpack.c.l.b16 %v1836
  %v1964 = vunpack.c.h.b16 %v1836
  %v1965 = vunpack.c.l.b16 %v1837
  %v1966 = vunpack.c.h.b16 %v1837
  %v1967 = vunpack.c.l.b16 %v1838
  %v1968 = vunpack.c.h.b16 %v1838
  %v1969 = vunpack.c.l.b16 %v1839
  %v1970 = vunpack.c.h.b16 %v1839
  %v1971 = vunpack.c.l.b16 %v1840
  %v1972 = vunpack.c.h.b16 %v1840
  %v1973 = vunpack.c.l.b16 %v1841
  %v1974 = vunpack.c.h.b16 %v1841
  %v1975 = vunpack.c.l.b16 %v1842
  %v1976 = vunpack.c.h.b16 %v1842
  %v1977 = vunpack.c.l.b16 %v1843
  %v1978 = vunpack.c.h.b16 %v1843
  %v1979 = vunpack.c.l.b16 %v1844
  %v1980 = vunpack.c.h.b16 %v1844
  %v1981 = vunpack.c.l.b16 %v1845
  %v1982 = vunpack.c.h.b16 %v1845
  %v1983 = vunpack.c.l.b16 %v1846
  %v1984 = vunpack.c.h.b16 %v1846
  %v1985 = vunpack.c.l.b16 %v1847
  %v1986 = vunpack.c.h.b16 %v1847
  %v1987 = vunpack.c.l.b16 %v1848
  %v1988 = vunpack.c.h.b16 %v1848
  %v1989 = vunpack.c.l.b16 %v1849
  %v1990 = vunpack.c.h.b16 %v1849
  %v1991 = vunpack.c.l.b16 %v1850
  %v1992 = vunpack.c.h.b16 %v1850
  %v1993 = vunpack.c.l.b16 %v1851
  %v1994 = vunpack.c.h.b16 %v1851
  %v1995 = vunpack.c.l.b16 %v1852
  %v1996 = vunpack.c.h.b16 %v1852
  %v1997 = vunpack.c.l.b16 %v1853
  %v1998 = vunpack.c.h.b16 %v1853
  %v1999 = vunpack.c.l.b16 %v1854
  %v2000 = vunpack.c.h.b16 %v1854
  %v2001 = vunpack.c.l.b16 %v1855
  %v2002 = vunpack.c.h.b16 %v1855
  %v2003 = vunpack.c.l.b16 %v1856
  %v2004 = vunpack.c.h.b16 %v1856
  %v2005 = vunpack.c.l.b16 %v1857
  %v2006 = vunpack.c.h.b16 %v1857
  %v2007 = vunpack.c.l.b16 %v1858
  %v2008 = vunpack.c.h.b16 %v1858
  %v2009 = vunpack.c.l.b16 %v1859
  %v2010 = vunpack.c.h.b16 %v1859
  %v2011 = vunpack.c.l.b16 %v1860
  %v2012 = vunpack.c.h.b16 %v1860
  %v2013 = vunpack.c.l.b16 %v1861
  %v2014 = vunpack.c.h.b16 %v1861
  %v2015 = vunpack.c.l.b16 %v1862
  %v2016 = vunpack.c.h.b16 %v1862
  %v2017 = vunpack.c.l.b16 %v1863
  %v2018 = vunpack.c.h.b16 %v1863
  %v2019 = vunpack.c.l.b16 %v1864
  %v2020 = vunpack.c.h.b16 %v1864
  %v2021 = vunpack.c.l.b16 %v1865
  %v2022 = vunpack.c.h.b16 %v1865
  %v2023 = vunpack.c.l.b16 %v1866
  %v2024 = vunpack.c.h.b16 %v1866
  %v2025 = vunpack.c.l.b16 %v1867
  %v2026 = vunpack.c.h.b16 %v1867
  %v2027 = vpack.c.b16 %v1931, %v1929
  %v2028 = vpack.c.b16 %v1932, %v1930
  %v2029 = vpack.c.b16 %v1935, %v1933
  %v2030 = vpack.c.b16 %v1936, %v1934
  %v2031 = vpack.c.b16 %v1939, %v1937
  %v2032 = vpack.c.b16 %v1940, %v1938
  %v2033 = vpack.c.b16 %v1943, %v1941
  %v2034 = vpack.c.b16 %v1944, %v1942
  %v2035 = vpack.c.b16 %v1947, %v1945
  %v2036 = vpack.c.b16 %v1948, %v1946
  %v2037 = vpack.c.b16 %v1951, %v1949
  %v2038 = vpack.c.b16 %v1952, %v1950
  %v2039 = vpack.c.b16 %v1955, %v1953
  %v2040 = vpack.c.b16 %v1956, %v1954
  %v2041 = vpack.c.b16 %v1959, %v1957
  %v2042 = vpack.c.b16 %v1960, %v1958
  %v2043 = vpack.c.b16 %v1963, %v1961
  %v2044 = vpack.c.b16 %v1964, %v1962
  %v2045 = vpack.c.b16 %v1967, %v1965
  %v2046 = vpack.c.b16 %v1968, %v1966
  %v2047 = vpack.c.b16 %v1971, %v1969
  %v2048 = vpack.c.b16 %v1972, %v1970
  %v2049 = vpack.c.b16 %v1975, %v1973
  %v2050 = vpack.c.b16 %v1976, %v1974
  %v2051 = vpack.c.b16 %v1979, %v1977
  %v2052 = vpack.c.b16 %v1980, %v1978
  %v2053 = vpack.c.b16 %v1983, %v1981
  %v2054 = vpack.c.b16 %v1984, %v1982
  %v2055 = vpack.c.b16 %v1987, %v1985
  %v2056 = vpack.c.b16 %v1988, %v1986
  %v2057 = vpack.c.b16 %v1991, %v1989
  %v2058 = vpack.c.b16 %v1992, %v1990
  %v2059 = vpack.c.b16 %v1995, %v1993
  %v2060 = vpack.c.b16 %v1996, %v1994
  %v2061 = vpack.c.b16 %v1999, %v1997
  %v2062 = vpack.c.b16 %v2000, %v1998
  %v2063 = vpack.c.b16 %v2003, %v2001
  %v2064 = vpack.c.b16 %v2004, %v2002
  %v2065 = vpack.c.b16 %v2007, %v2005
  %v2066 = vpack.c.b16 %v2008, %v2006
  %v2067 = vpack.c.b16 %v2011, %v2009
  %v2068 = vpack.c.b16 %v2012, %v2010
  %v2069 = vpack.c.b16 %v2015, %v2013
  %v2070 = vpack.c.b16 %v2016, %v2014
  %v2071 = vpack.c.b16 %v2019, %v2017
  %v2072 = vpack.c.b16 %v2020, %v2018
  %v2073 = vpack.c.b16 %v2023, %v2021
  %v2074 = vpack.c.b16 %v2024, %v2022
  %v2075 = vpack.c.b16 %v2025, %v2025
  %v2076 = vpack.c.b16 %v2026, %v2026
  %vm2125 = vcmask 64512
  %v2127 = vsel %vm2125, %v1818, 0
  %vm2129 = vcmask 1043456
  %v2131 = vsel %vm2129, %v2075, 0
  %v2134 = vsel %vm2129, %v2076, 0
  %2136 = vmatprep.subr.bf16.mxu0 %v2042
  %2137 = vmatpush1.bf16.msra.mxu0 %v2041
  %2138 = vmatprep.subr.bf16.mxu0 %v2040
  %2139 = vmatpush1.bf16.msra.mxu0 %v2039
  %2140 = vmatprep.subr.bf16.mxu0 %v2038
  %2141 = vmatpush1.bf16.msra.mxu0 %v2037
  %2142 = vmatprep.subr.bf16.mxu0 %v2036
  %2143 = vmatpush1.bf16.msra.mxu0 %v2035
  %2144 = vmatprep.subr.bf16.mxu0 %v2034
  %2145 = vmatpush1.bf16.msra.mxu0 %v2033
  %2146 = vmatprep.subr.bf16.mxu0 %v2032
  %2147 = vmatpush1.bf16.msra.mxu0 %v2031
  %2148 = vmatprep.subr.bf16.mxu0 %v2030
  %2149 = vmatpush1.bf16.msra.mxu0 %v2029
  %2150 = vmatprep.subr.bf16.mxu0 %v2028
  %2151 = vmatpush1.bf16.msra.mxu0 %v2027
  %2152 = vmatprep.subr.bf16.mxu0 %v2058
  %2153 = vmatpush2.bf16.msra.mxu0 %v2057
  %2154 = vmatprep.subr.bf16.mxu0 %v2056
  %2155 = vmatpush2.bf16.msra.mxu0 %v2055
  %2156 = vmatprep.subr.bf16.mxu0 %v2054
  %2157 = vmatpush2.bf16.msra.mxu0 %v2053
  %2158 = vmatprep.subr.bf16.mxu0 %v2052
  %2159 = vmatpush2.bf16.msra.mxu0 %v2051
  %2160 = vmatprep.subr.bf16.mxu0 %v2050
  %2161 = vmatpush2.bf16.msra.mxu0 %v2049
  %2162 = vmatprep.subr.bf16.mxu0 %v2048
  %2163 = vmatpush2.bf16.msra.mxu0 %v2047
  %2164 = vmatprep.subr.bf16.mxu0 %v2046
  %2165 = vmatpush2.bf16.msra.mxu0 %v2045
  %2166 = vmatprep.subr.bf16.mxu0 %v2044
  %2167 = vmatpush2.bf16.msra.mxu0 %v2043
  %2168 = vmatprep.mubr.bf16.mxu0 %v1816
  %2169 = vmatmul.mubr.bf16.gmra.mxu0 %v1815
  %v2170 = vpop.f32.mrf.mxu0
  %v2171 = vadd.f32 %v1873, %v2170
  %v2172 = vpop.f32.mrf.mxu0
  %v2173 = vadd.f32 %v1877, %v2172
  %v2174 = vpop.f32.mrf.mxu0
  %v2175 = vadd.f32 %v1873, %v2174
  %v2176 = vpop.f32.mrf.mxu0
  %v2177 = vadd.f32 %v1877, %v2176
  %2178 = vdwg.mxu0
  %2179 = vmatprep.subr.bf16.mxu0 %v2074
  %2180 = vmatpush1.bf16.msra.mxu0 %v2073
  %2181 = vmatprep.subr.bf16.mxu0 %v2072
  %2182 = vmatpush1.bf16.msra.mxu0 %v2071
  %2183 = vmatprep.subr.bf16.mxu0 %v2070
  %2184 = vmatpush1.bf16.msra.mxu0 %v2069
  %2185 = vmatprep.subr.bf16.mxu0 %v2068
  %2186 = vmatpush1.bf16.msra.mxu0 %v2067
  %2187 = vmatprep.subr.bf16.mxu0 %v2066
  %2188 = vmatpush1.bf16.msra.mxu0 %v2065
  %2189 = vmatprep.subr.bf16.mxu0 %v2064
  %2190 = vmatpush1.bf16.msra.mxu0 %v2063
  %2191 = vmatprep.subr.bf16.mxu0 %v2062
  %2192 = vmatpush1.bf16.msra.mxu0 %v2061
  %2193 = vmatprep.subr.bf16.mxu0 %v2060
  %2194 = vmatpush1.bf16.msra.mxu0 %v2059
  %2195 = vmatprep.subr.bf16.mxu0 0
  %2196 = vmatpush2.bf16.msra.mxu0 0
  %2197 = vmatprep.subr.bf16.mxu0 0
  %2198 = vmatpush2.bf16.msra.mxu0 0
  %2199 = vmatprep.subr.bf16.mxu0 0
  %2200 = vmatpush2.bf16.msra.mxu0 0
  %2201 = vmatprep.subr.bf16.mxu0 0
  %2202 = vmatpush2.bf16.msra.mxu0 0
  %2203 = vmatprep.subr.bf16.mxu0 0
  %2204 = vmatpush2.bf16.msra.mxu0 0
  %2205 = vmatprep.subr.bf16.mxu0 0
  %2206 = vmatpush2.bf16.msra.mxu0 0
  %2207 = vmatprep.subr.bf16.mxu0 0
  %2208 = vmatpush2.bf16.msra.mxu0 0
  %2209 = vmatprep.subr.bf16.mxu0 %v2134
  %2210 = vmatpush2.bf16.msra.mxu0 %v2131
  %2211 = vmatprep.mubr.bf16.mxu0 %v2127
  %2212 = vmatmul.mubr.bf16.gmra.mxu0 %v1817
  %v2213 = vpop.f32.mrf.mxu0
  %v2214 = vadd.f32 %v2171, %v2213
  %v2215 = vpop.f32.mrf.mxu0
  %v2216 = vadd.f32 %v2173, %v2215
  %v2217 = vpop.f32.mrf.mxu0
  %v2218 = vadd.f32 %v2175, %v2217
  %v2219 = vpop.f32.mrf.mxu0
  %v2220 = vadd.f32 %v2177, %v2219
  %2221 = vdwg.mxu0
  %v2222 = vmul.f32 %v2214, 0.5
  %v2223 = vmul.f32 %v2216, 0.5
  %v2224 = vmul.f32 %v2218, 0.5
  %v2225 = vmul.f32 %v2220, 0.5
  %v2226 = vmax.f32 %v2214, %v2222
  %v2227 = vmax.f32 %v2216, %v2223
  %v2228 = vmax.f32 %v2218, %v2224
  %v2229 = vmax.f32 %v2220, %v2225
  %v2230 = vpack.c.bf16 %v2228, %v2226
  %v2231 = vpack.c.bf16 %v2229, %v2227
  %v2232 = vld [vmem:[%s5] sm:$0xf]
  %v2233 = vld [vmem:[%s5 + $0x4] sm:$0xf]
  %v2234 = vld [vmem:[%s5 + $0x8] sm:$0xf]
  %v2235 = vld [vmem:[%s5 + $0xc] sm:$0xf]
  %v2236 = vld [vmem:[%s5 + $0x10] sm:$0xf]
  %v2237 = vld [vmem:[%s5 + $0x14] sm:$0xf]
  %v2238 = vld [vmem:[%s5 + $0x18] sm:$0xf]
  %v2239 = vld [vmem:[%s5 + $0x1c] sm:$0xf]
  %v2240 = vld [vmem:[%s5 + $0x20] sm:$0xf]
  %v2241 = vld [vmem:[%s5 + $0x24] sm:$0xf]
  %v2242 = vld [vmem:[%s5 + $0x28] sm:$0xf]
  %v2243 = vld [vmem:[%s5 + $0x2c] sm:$0xf]
  %v2244 = vld [vmem:[%s5 + $0x30] sm:$0xf]
  %v2245 = vld [vmem:[%s5 + $0x34] sm:$0xf]
  %v2246 = vld [vmem:[%s5 + $0x38] sm:$0xf]
  %v2247 = vld [vmem:[%s5 + $0x3c] sm:$0xf]
  %v2248 = vld [vmem:[%s5 + $0x40] sm:$0xf]
  %v2249 = vld [vmem:[%s5 + $0x44] sm:$0xf]
  %v2250 = vld [vmem:[%s5 + $0x48] sm:$0xf]
  %v2251 = vld [vmem:[%s5 + $0x4c] sm:$0xf]
  %v2252 = vld [vmem:[%s5 + $0x50] sm:$0xf]
  %v2253 = vld [vmem:[%s5 + $0x54] sm:$0xf]
  %v2254 = vld [vmem:[%s5 + $0x58] sm:$0xf]
  %v2255 = vld [vmem:[%s5 + $0x5c] sm:$0xf]
  %v2256 = vld [vmem:[%s5 + $0x60] sm:$0x3]
  %v2257 = vld [vmem:[%s6] sm:$0x1]
  %v2259 = vlaneseq
  %v2260 = vshrl.u32 %v2259, 7
  %v2261 = vsub.s32 0, %v2260
  %v2262 = vrot.slane %v2257, %v2261
  %v2289 = vunpack.c.l.b16 %v2232
  %v2290 = vunpack.c.l.b16 %v2233
  %v2291 = vunpack.c.l.b16 %v2234
  %v2292 = vunpack.c.l.b16 %v2235
  %v2293 = vunpack.c.l.b16 %v2236
  %v2294 = vunpack.c.l.b16 %v2237
  %v2295 = vunpack.c.l.b16 %v2238
  %v2296 = vunpack.c.l.b16 %v2239
  %v2297 = vunpack.c.l.b16 %v2240
  %v2298 = vunpack.c.l.b16 %v2241
  %v2299 = vunpack.c.l.b16 %v2242
  %v2300 = vunpack.c.l.b16 %v2243
  %v2301 = vunpack.c.l.b16 %v2244
  %v2302 = vunpack.c.l.b16 %v2245
  %v2303 = vunpack.c.l.b16 %v2246
  %v2304 = vunpack.c.l.b16 %v2247
  %v2305 = vunpack.c.l.b16 %v2248
  %v2306 = vunpack.c.l.b16 %v2249
  %v2307 = vunpack.c.l.b16 %v2250
  %v2308 = vunpack.c.l.b16 %v2251
  %v2309 = vunpack.c.l.b16 %v2252
  %v2310 = vunpack.c.l.b16 %v2253
  %v2311 = vunpack.c.l.b16 %v2254
  %v2312 = vunpack.c.l.b16 %v2255
  %v2313 = vunpack.c.l.b16 %v2256
  %v2314 = vpack.c.b16 %v2290, %v2289
  %v2315 = vpack.c.b16 %v2292, %v2291
  %v2316 = vpack.c.b16 %v2294, %v2293
  %v2317 = vpack.c.b16 %v2296, %v2295
  %v2318 = vpack.c.b16 %v2298, %v2297
  %v2319 = vpack.c.b16 %v2300, %v2299
  %v2320 = vpack.c.b16 %v2302, %v2301
  %v2321 = vpack.c.b16 %v2304, %v2303
  %v2322 = vpack.c.b16 %v2306, %v2305
  %v2323 = vpack.c.b16 %v2308, %v2307
  %v2324 = vpack.c.b16 %v2310, %v2309
  %v2325 = vpack.c.b16 %v2312, %v2311
  %v2326 = vpack.c.b16 %v2313, %v2313
  %vm2339 = vcmask 556032
  %v2341 = vsel %vm2339, %v2231, 0
  %vm2343 = vcmask 1041408
  %v2345 = vsel %vm2343, %v2326, 0
  %2347 = vmatprep.subr.bf16.mxu0 0
  %2348 = vmatpush1.bf16.msra.mxu0 %v2321
  %2349 = vmatprep.subr.bf16.mxu0 0
  %2350 = vmatpush1.bf16.msra.mxu0 %v2320
  %2351 = vmatprep.subr.bf16.mxu0 0
  %2352 = vmatpush1.bf16.msra.mxu0 %v2319
  %2353 = vmatprep.subr.bf16.mxu0 0
  %2354 = vmatpush1.bf16.msra.mxu0 %v2318
  %2355 = vmatprep.subr.bf16.mxu0 0
  %2356 = vmatpush1.bf16.msra.mxu0 %v2317
  %2357 = vmatprep.subr.bf16.mxu0 0
  %2358 = vmatpush1.bf16.msra.mxu0 %v2316
  %2359 = vmatprep.subr.bf16.mxu0 0
  %2360 = vmatpush1.bf16.msra.mxu0 %v2315
  %2361 = vmatprep.subr.bf16.mxu0 0
  %2362 = vmatpush1.bf16.msra.mxu0 %v2314
  %2363 = vmatprep.subr.bf16.mxu0 0
  %2364 = vmatpush2.bf16.msra.mxu0 0
  %2365 = vmatprep.subr.bf16.mxu0 0
  %2366 = vmatpush2.bf16.msra.mxu0 0
  %2367 = vmatprep.subr.bf16.mxu0 0
  %2368 = vmatpush2.bf16.msra.mxu0 0
  %2369 = vmatprep.subr.bf16.mxu0 0
  %2370 = vmatpush2.bf16.msra.mxu0 %v2345
  %2371 = vmatprep.subr.bf16.mxu0 0
  %2372 = vmatpush2.bf16.msra.mxu0 %v2325
  %2373 = vmatprep.subr.bf16.mxu0 0
  %2374 = vmatpush2.bf16.msra.mxu0 %v2324
  %2375 = vmatprep.subr.bf16.mxu0 0
  %2376 = vmatpush2.bf16.msra.mxu0 %v2323
  %2377 = vmatprep.subr.bf16.mxu0 0
  %2378 = vmatpush2.bf16.msra.mxu0 %v2322
  %2379 = vmatprep.mubr.bf16.mxu0 %v2341
  %2380 = vmatmul.mubr.bf16.gmra.mxu0 %v2230
  %v2381 = vpop.f32.mrf.mxu0
  %v2382 = vadd.f32 %v2262, %v2381
  %v2383 = vpop.f32.mrf.mxu0
  %v2384 = vpop.f32.mrf.mxu0
  %v2385 = vadd.f32 %v2262, %v2384
  %v2386 = vpop.f32.mrf.mxu0
  %2387 = vdwg.mxu0
  %v2388 = vmul.f32 %v2382, 0.5
  %v2389 = vmul.f32 %v2385, 0.5
  %v2390 = vmax.f32 %v2382, %v2388
  %v2391 = vmax.f32 %v2385, %v2389
  %v2392 = vpack.c.bf16 %v2391, %v2390
  %v2393 = vld [vmem:[%s7] sm:$0xff]
  %v2394 = vld [vmem:[%s7 + $0x8] sm:$0xff]
  %v2395 = vld [vmem:[%s7 + $0x10] sm:$0xff]
  %v2396 = vld [vmem:[%s7 + $0x18] sm:$0xff]
  %v2397 = vld [vmem:[%s7 + $0x20] sm:$0xff]
  %v2398 = vld [vmem:[%s7 + $0x28] sm:$0xff]
  %v2399 = vld [vmem:[%s7 + $0x30] sm:$0xff]
  %v2400 = vld [vmem:[%s7 + $0x38] sm:$0xff]
  %v2401 = vld [vmem:[%s7 + $0x40] sm:$0xff]
  %v2402 = vld [vmem:[%s7 + $0x48] sm:$0xff]
  %v2403 = vld [vmem:[%s7 + $0x50] sm:$0xff]
  %v2404 = vld [vmem:[%s7 + $0x58] sm:$0xff]
  %v2405 = vld [vmem:[%s7 + $0x60] sm:$0xff]
  %v2406 = vld [vmem:[%s7 + $0x68] sm:$0xff]
  %v2407 = vld [vmem:[%s7 + $0x70] sm:$0xff]
  %v2408 = vld [vmem:[%s7 + $0x78] sm:$0xff]
  %v2409 = vld [vmem:[%s8] sm:$0x3]
  %v2411 = vlaneseq
  %v2412 = vshrl.u32 %v2411, 7
  %v2413 = vsub.s32 0, %v2412
  %v2414 = vrot.slane %v2409, %v2413
  %v2415 = vlaneseq
  %v2416 = vshrl.u32 %v2415, 7
  %v2417 = vsub.s32 1, %v2416
  %v2418 = vrot.slane %v2409, %v2417
  %v2437 = vunpack.c.l.b16 %v2393
  %v2438 = vunpack.c.h.b16 %v2393
  %v2439 = vunpack.c.l.b16 %v2394
  %v2440 = vunpack.c.h.b16 %v2394
  %v2441 = vunpack.c.l.b16 %v2395
  %v2442 = vunpack.c.h.b16 %v2395
  %v2443 = vunpack.c.l.b16 %v2396
  %v2444 = vunpack.c.h.b16 %v2396
  %v2445 = vunpack.c.l.b16 %v2397
  %v2446 = vunpack.c.h.b16 %v2397
  %v2447 = vunpack.c.l.b16 %v2398
  %v2448 = vunpack.c.h.b16 %v2398
  %v2449 = vunpack.c.l.b16 %v2399
  %v2450 = vunpack.c.h.b16 %v2399
  %v2451 = vunpack.c.l.b16 %v2400
  %v2452 = vunpack.c.h.b16 %v2400
  %v2453 = vunpack.c.l.b16 %v2401
  %v2454 = vunpack.c.h.b16 %v2401
  %v2455 = vunpack.c.l.b16 %v2402
  %v2456 = vunpack.c.h.b16 %v2402
  %v2457 = vunpack.c.l.b16 %v2403
  %v2458 = vunpack.c.h.b16 %v2403
  %v2459 = vunpack.c.l.b16 %v2404
  %v2460 = vunpack.c.h.b16 %v2404
  %v2461 = vunpack.c.l.b16 %v2405
  %v2462 = vunpack.c.h.b16 %v2405
  %v2463 = vunpack.c.l.b16 %v2406
  %v2464 = vunpack.c.h.b16 %v2406
  %v2465 = vunpack.c.l.b16 %v2407
  %v2466 = vunpack.c.h.b16 %v2407
  %v2467 = vunpack.c.l.b16 %v2408
  %v2468 = vunpack.c.h.b16 %v2408
  %v2469 = vpack.c.b16 %v2439, %v2437
  %v2470 = vpack.c.b16 %v2440, %v2438
  %v2471 = vpack.c.b16 %v2443, %v2441
  %v2472 = vpack.c.b16 %v2444, %v2442
  %v2473 = vpack.c.b16 %v2447, %v2445
  %v2474 = vpack.c.b16 %v2448, %v2446
  %v2475 = vpack.c.b16 %v2451, %v2449
  %v2476 = vpack.c.b16 %v2452, %v2450
  %v2477 = vpack.c.b16 %v2455, %v2453
  %v2478 = vpack.c.b16 %v2456, %v2454
  %v2479 = vpack.c.b16 %v2459, %v2457
  %v2480 = vpack.c.b16 %v2460, %v2458
  %v2481 = vpack.c.b16 %v2463, %v2461
  %v2482 = vpack.c.b16 %v2464, %v2462
  %v2483 = vpack.c.b16 %v2467, %v2465
  %v2484 = vpack.c.b16 %v2468, %v2466
  %2501 = vmatprep.subr.bf16.mxu0 %v2484
  %2502 = vmatpush1.bf16.msra.mxu0 %v2483
  %2503 = vmatprep.subr.bf16.mxu0 %v2482
  %2504 = vmatpush1.bf16.msra.mxu0 %v2481
  %2505 = vmatprep.subr.bf16.mxu0 %v2480
  %2506 = vmatpush1.bf16.msra.mxu0 %v2479
  %2507 = vmatprep.subr.bf16.mxu0 %v2478
  %2508 = vmatpush1.bf16.msra.mxu0 %v2477
  %2509 = vmatprep.subr.bf16.mxu0 %v2476
  %2510 = vmatpush1.bf16.msra.mxu0 %v2475
  %2511 = vmatprep.subr.bf16.mxu0 %v2474
  %2512 = vmatpush1.bf16.msra.mxu0 %v2473
  %2513 = vmatprep.subr.bf16.mxu0 %v2472
  %2514 = vmatpush1.bf16.msra.mxu0 %v2471
  %2515 = vmatprep.subr.bf16.mxu0 %v2470
  %2516 = vmatpush1.bf16.msra.mxu0 %v2469
  %2517 = vmatprep.subr.bf16.mxu0 0
  %2518 = vmatpush2.bf16.msra.mxu0 0
  %2519 = vmatprep.subr.bf16.mxu0 0
  %2520 = vmatpush2.bf16.msra.mxu0 0
  %2521 = vmatprep.subr.bf16.mxu0 0
  %2522 = vmatpush2.bf16.msra.mxu0 0
  %2523 = vmatprep.subr.bf16.mxu0 0
  %2524 = vmatpush2.bf16.msra.mxu0 0
  %2525 = vmatprep.subr.bf16.mxu0 0
  %2526 = vmatpush2.bf16.msra.mxu0 0
  %2527 = vmatprep.subr.bf16.mxu0 0
  %2528 = vmatpush2.bf16.msra.mxu0 0
  %2529 = vmatprep.subr.bf16.mxu0 0
  %2530 = vmatpush2.bf16.msra.mxu0 0
  %2531 = vmatprep.subr.bf16.mxu0 0
  %2532 = vmatpush2.bf16.msra.mxu0 0
  %2533 = vmatprep.mubr.bf16.mxu0 0
  %2534 = vmatmul.mubr.bf16.gmra.mxu0 %v2392
  %v2535 = vpop.f32.mrf.mxu0
  %v2536 = vadd.f32 %v2414, %v2535
  %v2537 = vpop.f32.mrf.mxu0
  %v2538 = vadd.f32 %v2418, %v2537
  %v2539 = vpop.f32.mrf.mxu0
  %v2540 = vadd.f32 %v2414, %v2539
  %v2541 = vpop.f32.mrf.mxu0
  %v2542 = vadd.f32 %v2418, %v2541
  %2543 = vdwg.mxu0
  %v2544 = vmul.f32 %v2536, 0.5
  %v2545 = vmul.f32 %v2538, 0.5
  %v2546 = vmul.f32 %v2540, 0.5
  %v2547 = vmul.f32 %v2542, 0.5
  %v2548 = vmax.f32 %v2536, %v2544
  %v2549 = vmax.f32 %v2538, %v2545
  %v2550 = vmax.f32 %v2540, %v2546
  %v2551 = vmax.f32 %v2542, %v2547
  %v2552 = vpack.c.bf16 %v2550, %v2548
  %v2553 = vpack.c.bf16 %v2551, %v2549
  %v2554 = vld [vmem:[%s9] sm:$0xff]
  %v2555 = vld [vmem:[%s9 + $0x8] sm:$0xff]
  %v2556 = vld [vmem:[%s9 + $0x10] sm:$0xff]
  %v2557 = vld [vmem:[%s9 + $0x18] sm:$0xff]
  %v2558 = vld [vmem:[%s9 + $0x20] sm:$0xff]
  %v2559 = vld [vmem:[%s9 + $0x28] sm:$0xff]
  %v2560 = vld [vmem:[%s9 + $0x30] sm:$0xff]
  %v2561 = vld [vmem:[%s9 + $0x38] sm:$0xff]
  %v2562 = vld [vmem:[%s9 + $0x40] sm:$0xff]
  %v2563 = vld [vmem:[%s9 + $0x48] sm:$0xff]
  %v2564 = vld [vmem:[%s9 + $0x50] sm:$0xff]
  %v2565 = vld [vmem:[%s9 + $0x58] sm:$0xff]
  %v2566 = vld [vmem:[%s9 + $0x60] sm:$0xff]
  %v2567 = vld [vmem:[%s9 + $0x68] sm:$0xff]
  %v2568 = vld [vmem:[%s9 + $0x70] sm:$0xff]
  %v2569 = vld [vmem:[%s9 + $0x78] sm:$0xff]
  %v2570 = vld [vmem:[%s9 + $0x80] sm:$0xff]
  %v2571 = vld [vmem:[%s9 + $0x88] sm:$0xff]
  %v2572 = vld [vmem:[%s9 + $0x90] sm:$0xff]
  %v2573 = vld [vmem:[%s9 + $0x98] sm:$0xff]
  %v2574 = vld [vmem:[%s9 + $0xa0] sm:$0xff]
  %v2575 = vld [vmem:[%s9 + $0xa8] sm:$0xff]
  %v2576 = vld [vmem:[%s9 + $0xb0] sm:$0xff]
  %v2577 = vld [vmem:[%s9 + $0xb8] sm:$0xff]
  %v2578 = vld [vmem:[%s9 + $0xc0] sm:$0xff]
  %v2579 = vld [vmem:[%s9 + $0xc8] sm:$0xff]
  %v2580 = vld [vmem:[%s9 + $0xd0] sm:$0xff]
  %v2581 = vld [vmem:[%s9 + $0xd8] sm:$0xff]
  %v2582 = vld [vmem:[%s9 + $0xe0] sm:$0xff]
  %v2583 = vld [vmem:[%s9 + $0xe8] sm:$0xff]
  %v2584 = vld [vmem:[%s9 + $0xf0] sm:$0xff]
  %v2585 = vld [vmem:[%s9 + $0xf8] sm:$0xff]
  %v2586 = vld [vmem:[%s9 + $0x100] sm:$0xff]
  %v2587 = vld [vmem:[%s9 + $0x108] sm:$0xff]
  %v2588 = vld [vmem:[%s9 + $0x110] sm:$0xff]
  %v2589 = vld [vmem:[%s9 + $0x118] sm:$0xff]
  %v2590 = vld [vmem:[%s9 + $0x120] sm:$0xff]
  %v2591 = vld [vmem:[%s9 + $0x128] sm:$0xff]
  %v2592 = vld [vmem:[%s9 + $0x130] sm:$0xff]
  %v2593 = vld [vmem:[%s9 + $0x138] sm:$0xff]
  %v2594 = vld [vmem:[%s9 + $0x140] sm:$0xff]
  %v2595 = vld [vmem:[%s9 + $0x148] sm:$0xff]
  %v2596 = vld [vmem:[%s9 + $0x150] sm:$0xff]
  %v2597 = vld [vmem:[%s9 + $0x158] sm:$0xff]
  %v2598 = vld [vmem:[%s9 + $0x160] sm:$0xff]
  %v2599 = vld [vmem:[%s9 + $0x168] sm:$0xff]
  %v2600 = vld [vmem:[%s9 + $0x170] sm:$0xff]
  %v2601 = vld [vmem:[%s9 + $0x178] sm:$0xff]
  %v2602 = vld [vmem:[%s9 + $0x180] sm:$0x33]
  %v2603 = vld [vmem:[%s9 + $0x188] sm:$0x33]
  %v2604 = vld [vmem:[%s10] sm:$0xf]
  %v2606 = vlaneseq
  %v2607 = vshrl.u32 %v2606, 7
  %v2608 = vsub.s32 0, %v2607
  %v2609 = vrot.slane %v2604, %v2608
  %v2610 = vlaneseq
  %v2611 = vshrl.u32 %v2610, 7
  %v2612 = vsub.s32 1, %v2611
  %v2613 = vrot.slane %v2604, %v2612
  %v2614 = vlaneseq
  %v2615 = vshrl.u32 %v2614, 7
  %v2616 = vsub.s32 2, %v2615
  %v2617 = vrot.slane %v2604, %v2616
  %v2618 = vlaneseq
  %v2619 = vshrl.u32 %v2618, 7
  %v2620 = vsub.s32 3, %v2619
  %v2621 = vrot.slane %v2604, %v2620
  %v2676 = vunpack.c.l.b16 %v2554
  %v2677 = vunpack.c.h.b16 %v2554
  %v2678 = vunpack.c.l.b16 %v2555
  %v2679 = vunpack.c.h.b16 %v2555
  %v2680 = vunpack.c.l.b16 %v2556
  %v2681 = vunpack.c.h.b16 %v2556
  %v2682 = vunpack.c.l.b16 %v2557
  %v2683 = vunpack.c.h.b16 %v2557
  %v2684 = vunpack.c.l.b16 %v2558
  %v2685 = vunpack.c.h.b16 %v2558
  %v2686 = vunpack.c.l.b16 %v2559
  %v2687 = vunpack.c.h.b16 %v2559
  %v2688 = vunpack.c.l.b16 %v2560
  %v2689 = vunpack.c.h.b16 %v2560
  %v2690 = vunpack.c.l.b16 %v2561
  %v2691 = vunpack.c.h.b16 %v2561
  %v2692 = vunpack.c.l.b16 %v2562
  %v2693 = vunpack.c.h.b16 %v2562
  %v2694 = vunpack.c.l.b16 %v2563
  %v2695 = vunpack.c.h.b16 %v2563
  %v2696 = vunpack.c.l.b16 %v2564
  %v2697 = vunpack.c.h.b16 %v2564
  %v2698 = vunpack.c.l.b16 %v2565
  %v2699 = vunpack.c.h.b16 %v2565
  %v2700 = vunpack.c.l.b16 %v2566
  %v2701 = vunpack.c.h.b16 %v2566
  %v2702 = vunpack.c.l.b16 %v2567
  %v2703 = vunpack.c.h.b16 %v2567
  %v2704 = vunpack.c.l.b16 %v2568
  %v2705 = vunpack.c.h.b16 %v2568
  %v2706 = vunpack.c.l.b16 %v2569
  %v2707 = vunpack.c.h.b16 %v2569
  %v2708 = vunpack.c.l.b16 %v2570
  %v2709 = vunpack.c.h.b16 %v2570
  %v2710 = vunpack.c.l.b16 %v2571
  %v2711 = vunpack.c.h.b16 %v2571
  %v2712 = vunpack.c.l.b16 %v2572
  %v2713 = vunpack.c.h.b16 %v2572
  %v2714 = vunpack.c.l.b16 %v2573
  %v2715 = vunpack.c.h.b16 %v2573
  %v2716 = vunpack.c.l.b16 %v2574
  %v2717 = vunpack.c.h.b16 %v2574
  %v2718 = vunpack.c.l.b16 %v2575
  %v2719 = vunpack.c.h.b16 %v2575
  %v2720 = vunpack.c.l.b16 %v2576
  %v2721 = vunpack.c.h.b16 %v2576
  %v2722 = vunpack.c.l.b16 %v2577
  %v2723 = vunpack.c.h.b16 %v2577
  %v2724 = vunpack.c.l.b16 %v2578
  %v2725 = vunpack.c.h.b16 %v2578
  %v2726 = vunpack.c.l.b16 %v2579
  %v2727 = vunpack.c.h.b16 %v2579
  %v2728 = vunpack.c.l.b16 %v2580
  %v2729 = vunpack.c.h.b16 %v2580
  %v2730 = vunpack.c.l.b16 %v2581
  %v2731 = vunpack.c.h.b16 %v2581
  %v2732 = vunpack.c.l.b16 %v2582
  %v2733 = vunpack.c.h.b16 %v2582
  %v2734 = vunpack.c.l.b16 %v2583
  %v2735 = vunpack.c.h.b16 %v2583
  %v2736 = vunpack.c.l.b16 %v2584
  %v2737 = vunpack.c.h.b16 %v2584
  %v2738 = vunpack.c.l.b16 %v2585
  %v2739 = vunpack.c.h.b16 %v2585
  %v2740 = vunpack.c.l.b16 %v2586
  %v2741 = vunpack.c.h.b16 %v2586
  %v2742 = vunpack.c.l.b16 %v2587
  %v2743 = vunpack.c.h.b16 %v2587
  %v2744 = vunpack.c.l.b16 %v2588
  %v2745 = vunpack.c.h.b16 %v2588
  %v2746 = vunpack.c.l.b16 %v2589
  %v2747 = vunpack.c.h.b16 %v2589
  %v2748 = vunpack.c.l.b16 %v2590
  %v2749 = vunpack.c.h.b16 %v2590
  %v2750 = vunpack.c.l.b16 %v2591
  %v2751 = vunpack.c.h.b16 %v2591
  %v2752 = vunpack.c.l.b16 %v2592
  %v2753 = vunpack.c.h.b16 %v2592
  %v2754 = vunpack.c.l.b16 %v2593
  %v2755 = vunpack.c.h.b16 %v2593
  %v2756 = vunpack.c.l.b16 %v2594
  %v2757 = vunpack.c.h.b16 %v2594
  %v2758 = vunpack.c.l.b16 %v2595
  %v2759 = vunpack.c.h.b16 %v2595
  %v2760 = vunpack.c.l.b16 %v2596
  %v2761 = vunpack.c.h.b16 %v2596
  %v2762 = vunpack.c.l.b16 %v2597
  %v2763 = vunpack.c.h.b16 %v2597
  %v2764 = vunpack.c.l.b16 %v2598
  %v2765 = vunpack.c.h.b16 %v2598
  %v2766 = vunpack.c.l.b16 %v2599
  %v2767 = vunpack.c.h.b16 %v2599
  %v2768 = vunpack.c.l.b16 %v2600
  %v2769 = vunpack.c.h.b16 %v2600
  %v2770 = vunpack.c.l.b16 %v2601
  %v2771 = vunpack.c.h.b16 %v2601
  %v2772 = vunpack.c.l.b16 %v2602
  %v2773 = vunpack.c.h.b16 %v2602
  %v2774 = vunpack.c.l.b16 %v2603
  %v2775 = vunpack.c.h.b16 %v2603
  %v2776 = vpack.c.b16 %v2680, %v2676
  %v2777 = vpack.c.b16 %v2681, %v2677
  %v2778 = vpack.c.b16 %v2682, %v2678
  %v2779 = vpack.c.b16 %v2683, %v2679
  %v2780 = vpack.c.b16 %v2688, %v2684
  %v2781 = vpack.c.b16 %v2689, %v2685
  %v2782 = vpack.c.b16 %v2690, %v2686
  %v2783 = vpack.c.b16 %v2691, %v2687
  %v2784 = vpack.c.b16 %v2696, %v2692
  %v2785 = vpack.c.b16 %v2697, %v2693
  %v2786 = vpack.c.b16 %v2698, %v2694
  %v2787 = vpack.c.b16 %v2699, %v2695
  %v2788 = vpack.c.b16 %v2704, %v2700
  %v2789 = vpack.c.b16 %v2705, %v2701
  %v2790 = vpack.c.b16 %v2706, %v2702
  %v2791 = vpack.c.b16 %v2707, %v2703
  %v2792 = vpack.c.b16 %v2712, %v2708
  %v2793 = vpack.c.b16 %v2713, %v2709
  %v2794 = vpack.c.b16 %v2714, %v2710
  %v2795 = vpack.c.b16 %v2715, %v2711
  %v2796 = vpack.c.b16 %v2720, %v2716
  %v2797 = vpack.c.b16 %v2721, %v2717
  %v2798 = vpack.c.b16 %v2722, %v2718
  %v2799 = vpack.c.b16 %v2723, %v2719
  %v2800 = vpack.c.b16 %v2728, %v2724
  %v2801 = vpack.c.b16 %v2729, %v2725
  %v2802 = vpack.c.b16 %v2730, %v2726
  %v2803 = vpack.c.b16 %v2731, %v2727
  %v2804 = vpack.c.b16 %v2736, %v2732
  %v2805 = vpack.c.b16 %v2737, %v2733
  %v2806 = vpack.c.b16 %v2738, %v2734
  %v2807 = vpack.c.b16 %v2739, %v2735
  %v2808 = vpack.c.b16 %v2744, %v2740
  %v2809 = vpack.c.b16 %v2745, %v2741
  %v2810 = vpack.c.b16 %v2746, %v2742
  %v2811 = vpack.c.b16 %v2747, %v2743
  %v2812 = vpack.c.b16 %v2752, %v2748
  %v2813 = vpack.c.b16 %v2753, %v2749
  %v2814 = vpack.c.b16 %v2754, %v2750
  %v2815 = vpack.c.b16 %v2755, %v2751
  %v2816 = vpack.c.b16 %v2760, %v2756
  %v2817 = vpack.c.b16 %v2761, %v2757
  %v2818 = vpack.c.b16 %v2762, %v2758
  %v2819 = vpack.c.b16 %v2763, %v2759
  %v2820 = vpack.c.b16 %v2768, %v2764
  %v2821 = vpack.c.b16 %v2769, %v2765
  %v2822 = vpack.c.b16 %v2770, %v2766
  %v2823 = vpack.c.b16 %v2771, %v2767
  %v2824 = vpack.c.b16 %v2772, %v2772
  %v2825 = vpack.c.b16 %v2773, %v2773
  %v2826 = vpack.c.b16 %v2774, %v2774
  %v2827 = vpack.c.b16 %v2775, %v2775
  %v2877 = vsel %vm2339, %v2553, 0
  %v2880 = vsel %vm2343, %v2824, 0
  %v2883 = vsel %vm2343, %v2825, 0
  %v2886 = vsel %vm2343, %v2826, 0
  %v2889 = vsel %vm2343, %v2827, 0
  %2891 = vmatprep.subr.bf16.mxu0 %v2805
  %2892 = vmatpush1.bf16.msra.mxu0 %v2804
  %2893 = vmatprep.subr.bf16.mxu0 %v2801
  %2894 = vmatpush1.bf16.msra.mxu0 %v2800
  %2895 = vmatprep.subr.bf16.mxu0 %v2797
  %2896 = vmatpush1.bf16.msra.mxu0 %v2796
  %2897 = vmatprep.subr.bf16.mxu0 %v2793
  %2898 = vmatpush1.bf16.msra.mxu0 %v2792
  %2899 = vmatprep.subr.bf16.mxu0 %v2789
  %2900 = vmatpush1.bf16.msra.mxu0 %v2788
  %2901 = vmatprep.subr.bf16.mxu0 %v2785
  %2902 = vmatpush1.bf16.msra.mxu0 %v2784
  %2903 = vmatprep.subr.bf16.mxu0 %v2781
  %2904 = vmatpush1.bf16.msra.mxu0 %v2780
  %2905 = vmatprep.subr.bf16.mxu0 %v2777
  %2906 = vmatpush1.bf16.msra.mxu0 %v2776
  %2907 = vmatprep.subr.bf16.mxu0 0
  %2908 = vmatpush2.bf16.msra.mxu0 0
  %2909 = vmatprep.subr.bf16.mxu0 0
  %2910 = vmatpush2.bf16.msra.mxu0 0
  %2911 = vmatprep.subr.bf16.mxu0 0
  %2912 = vmatpush2.bf16.msra.mxu0 0
  %2913 = vmatprep.subr.bf16.mxu0 %v2883
  %2914 = vmatpush2.bf16.msra.mxu0 %v2880
  %2915 = vmatprep.subr.bf16.mxu0 %v2821
  %2916 = vmatpush2.bf16.msra.mxu0 %v2820
  %2917 = vmatprep.subr.bf16.mxu0 %v2817
  %2918 = vmatpush2.bf16.msra.mxu0 %v2816
  %2919 = vmatprep.subr.bf16.mxu0 %v2813
  %2920 = vmatpush2.bf16.msra.mxu0 %v2812
  %2921 = vmatprep.subr.bf16.mxu0 %v2809
  %2922 = vmatpush2.bf16.msra.mxu0 %v2808
  %2923 = vmatprep.mubr.bf16.mxu0 %v2877
  %2924 = vmatmul.mubr.bf16.gmra.mxu0 %v2552
  %v2925 = vpop.f32.mrf.mxu0
  %v2926 = vadd.f32 %v2609, %v2925
  %v2927 = vpop.f32.mrf.mxu0
  %v2928 = vadd.f32 %v2613, %v2927
  %v2929 = vpop.f32.mrf.mxu0
  %v2930 = vadd.f32 %v2609, %v2929
  %v2931 = vpop.f32.mrf.mxu0
  %v2932 = vadd.f32 %v2613, %v2931
  %2933 = vdwg.mxu0
  %2934 = vmatprep.subr.bf16.mxu0 %v2807
  %2935 = vmatpush1.bf16.msra.mxu0 %v2806
  %2936 = vmatprep.subr.bf16.mxu0 %v2803
  %2937 = vmatpush1.bf16.msra.mxu0 %v2802
  %2938 = vmatprep.subr.bf16.mxu0 %v2799
  %2939 = vmatpush1.bf16.msra.mxu0 %v2798
  %2940 = vmatprep.subr.bf16.mxu0 %v2795
  %2941 = vmatpush1.bf16.msra.mxu0 %v2794
  %2942 = vmatprep.subr.bf16.mxu0 %v2791
  %2943 = vmatpush1.bf16.msra.mxu0 %v2790
  %2944 = vmatprep.subr.bf16.mxu0 %v2787
  %2945 = vmatpush1.bf16.msra.mxu0 %v2786
  %2946 = vmatprep.subr.bf16.mxu0 %v2783
  %2947 = vmatpush1.bf16.msra.mxu0 %v2782
  %2948 = vmatprep.subr.bf16.mxu0 %v2779
  %2949 = vmatpush1.bf16.msra.mxu0 %v2778
  %2950 = vmatprep.subr.bf16.mxu0 0
  %2951 = vmatpush2.bf16.msra.mxu0 0
  %2952 = vmatprep.subr.bf16.mxu0 0
  %2953 = vmatpush2.bf16.msra.mxu0 0
  %2954 = vmatprep.subr.bf16.mxu0 0
  %2955 = vmatpush2.bf16.msra.mxu0 0
  %2956 = vmatprep.subr.bf16.mxu0 %v2889
  %2957 = vmatpush2.bf16.msra.mxu0 %v2886
  %2958 = vmatprep.subr.bf16.mxu0 %v2823
  %2959 = vmatpush2.bf16.msra.mxu0 %v2822
  %2960 = vmatprep.subr.bf16.mxu0 %v2819
  %2961 = vmatpush2.bf16.msra.mxu0 %v2818
  %2962 = vmatprep.subr.bf16.mxu0 %v2815
  %2963 = vmatpush2.bf16.msra.mxu0 %v2814
  %2964 = vmatprep.subr.bf16.mxu0 %v2811
  %2965 = vmatpush2.bf16.msra.mxu0 %v2810
  %2966 = vmatprep.mubr.bf16.mxu0 %v2877
  %2967 = vmatmul.mubr.bf16.gmra.mxu0 %v2552
  %v2968 = vpop.f32.mrf.mxu0
  %v2969 = vadd.f32 %v2617, %v2968
  %v2970 = vpop.f32.mrf.mxu0
  %v2971 = vadd.f32 %v2621, %v2970
  %v2972 = vpop.f32.mrf.mxu0
  %v2973 = vadd.f32 %v2617, %v2972
  %v2974 = vpop.f32.mrf.mxu0
  %v2975 = vadd.f32 %v2621, %v2974
  %2976 = vdwg.mxu0
  %v2977 = vmul.f32 %v2926, 0.5
  %v2978 = vmul.f32 %v2928, 0.5
  %v2979 = vmul.f32 %v2969, 0.5
  %v2980 = vmul.f32 %v2971, 0.5
  %v2981 = vmul.f32 %v2930, 0.5
  %v2982 = vmul.f32 %v2932, 0.5
  %v2983 = vmul.f32 %v2973, 0.5
  %v2984 = vmul.f32 %v2975, 0.5
  %v2985 = vmax.f32 %v2926, %v2977
  %v2986 = vmax.f32 %v2928, %v2978
  %v2987 = vmax.f32 %v2969, %v2979
  %v2988 = vmax.f32 %v2971, %v2980
  %v2989 = vmax.f32 %v2930, %v2981
  %v2990 = vmax.f32 %v2932, %v2982
  %v2991 = vmax.f32 %v2973, %v2983
  %v2992 = vmax.f32 %v2975, %v2984
  %v2993 = vpack.c.bf16 %v2989, %v2985
  %v2994 = vpack.c.bf16 %v2990, %v2986
  %v2995 = vpack.c.bf16 %v2991, %v2987
  %v2996 = vpack.c.bf16 %v2992, %v2988
  %v2997 = vld [vmem:[%s11] sm:$0xff]
  %v2998 = vld [vmem:[%s11 + $0x8] sm:$0xff]
  %v2999 = vld [vmem:[%s11 + $0x10] sm:$0xff]
  %v3000 = vld [vmem:[%s11 + $0x18] sm:$0xf]
  %v3001 = vld [vmem:[%s11 + $0x1c] sm:$0xff]
  %v3002 = vld [vmem:[%s11 + $0x24] sm:$0xff]
  %v3003 = vld [vmem:[%s11 + $0x2c] sm:$0xff]
  %v3004 = vld [vmem:[%s11 + $0x34] sm:$0xf]
  %v3005 = vld [vmem:[%s11 + $0x38] sm:$0xff]
  %v3006 = vld [vmem:[%s11 + $0x40] sm:$0xff]
  %v3007 = vld [vmem:[%s11 + $0x48] sm:$0xff]
  %v3008 = vld [vmem:[%s11 + $0x50] sm:$0xf]
  %v3009 = vld [vmem:[%s11 + $0x54] sm:$0xff]
  %v3010 = vld [vmem:[%s11 + $0x5c] sm:$0xff]
  %v3011 = vld [vmem:[%s11 + $0x64] sm:$0xff]
  %v3012 = vld [vmem:[%s11 + $0x6c] sm:$0xf]
  %v3013 = vld [vmem:[%s11 + $0x70] sm:$0xff]
  %v3014 = vld [vmem:[%s11 + $0x78] sm:$0xff]
  %v3015 = vld [vmem:[%s11 + $0x80] sm:$0xff]
  %v3016 = vld [vmem:[%s11 + $0x88] sm:$0xf]
  %v3017 = vld [vmem:[%s11 + $0x8c] sm:$0xff]
  %v3018 = vld [vmem:[%s11 + $0x94] sm:$0xff]
  %v3019 = vld [vmem:[%s11 + $0x9c] sm:$0xff]
  %v3020 = vld [vmem:[%s11 + $0xa4] sm:$0xf]
  %v3021 = vld [vmem:[%s11 + $0xa8] sm:$0xff]
  %v3022 = vld [vmem:[%s11 + $0xb0] sm:$0xff]
  %v3023 = vld [vmem:[%s11 + $0xb8] sm:$0xff]
  %v3024 = vld [vmem:[%s11 + $0xc0] sm:$0xf]
  %v3025 = vld [vmem:[%s11 + $0xc4] sm:$0xff]
  %v3026 = vld [vmem:[%s11 + $0xcc] sm:$0xff]
  %v3027 = vld [vmem:[%s11 + $0xd4] sm:$0xff]
  %v3028 = vld [vmem:[%s11 + $0xdc] sm:$0xf]
  %v3029 = vld [vmem:[%s11 + $0xe0] sm:$0xff]
  %v3030 = vld [vmem:[%s11 + $0xe8] sm:$0xff]
  %v3031 = vld [vmem:[%s11 + $0xf0] sm:$0xff]
  %v3032 = vld [vmem:[%s11 + $0xf8] sm:$0xf]
  %v3033 = vld [vmem:[%s11 + $0xfc] sm:$0xff]
  %v3034 = vld [vmem:[%s11 + $0x104] sm:$0xff]
  %v3035 = vld [vmem:[%s11 + $0x10c] sm:$0xff]
  %v3036 = vld [vmem:[%s11 + $0x114] sm:$0xf]
  %v3037 = vld [vmem:[%s11 + $0x118] sm:$0xff]
  %v3038 = vld [vmem:[%s11 + $0x120] sm:$0xff]
  %v3039 = vld [vmem:[%s11 + $0x128] sm:$0xff]
  %v3040 = vld [vmem:[%s11 + $0x130] sm:$0xf]
  %v3041 = vld [vmem:[%s11 + $0x134] sm:$0xff]
  %v3042 = vld [vmem:[%s11 + $0x13c] sm:$0xff]
  %v3043 = vld [vmem:[%s11 + $0x144] sm:$0xff]
  %v3044 = vld [vmem:[%s11 + $0x14c] sm:$0xf]
  %v3045 = vld [vmem:[%s11 + $0x150] sm:$0xff]
  %v3046 = vld [vmem:[%s11 + $0x158] sm:$0xff]
  %v3047 = vld [vmem:[%s11 + $0x160] sm:$0xff]
  %v3048 = vld [vmem:[%s11 + $0x168] sm:$0xf]
  %v3049 = vld [vmem:[%s11 + $0x16c] sm:$0xff]
  %v3050 = vld [vmem:[%s11 + $0x174] sm:$0xff]
  %v3051 = vld [vmem:[%s11 + $0x17c] sm:$0xff]
  %v3052 = vld [vmem:[%s11 + $0x184] sm:$0xf]
  %v3053 = vld [vmem:[%s11 + $0x188] sm:$0xff]
  %v3054 = vld [vmem:[%s11 + $0x190] sm:$0xff]
  %v3055 = vld [vmem:[%s11 + $0x198] sm:$0xff]
  %v3056 = vld [vmem:[%s11 + $0x1a0] sm:$0xf]
  %v3057 = vld [vmem:[%s11 + $0x1a4] sm:$0xff]
  %v3058 = vld [vmem:[%s11 + $0x1ac] sm:$0xff]
  %v3059 = vld [vmem:[%s11 + $0x1b4] sm:$0xff]
  %v3060 = vld [vmem:[%s11 + $0x1bc] sm:$0xf]
  %v3061 = vld [vmem:[%s11 + $0x1c0] sm:$0xff]
  %v3062 = vld [vmem:[%s11 + $0x1c8] sm:$0xff]
  %v3063 = vld [vmem:[%s11 + $0x1d0] sm:$0xff]
  %v3064 = vld [vmem:[%s11 + $0x1d8] sm:$0xf]
  %v3065 = vld [vmem:[%s11 + $0x1dc] sm:$0xff]
  %v3066 = vld [vmem:[%s11 + $0x1e4] sm:$0xff]
  %v3067 = vld [vmem:[%s11 + $0x1ec] sm:$0xff]
  %v3068 = vld [vmem:[%s11 + $0x1f4] sm:$0xf]
  %v3069 = vld [vmem:[%s11 + $0x1f8] sm:$0xff]
  %v3070 = vld [vmem:[%s11 + $0x200] sm:$0xff]
  %v3071 = vld [vmem:[%s11 + $0x208] sm:$0xff]
  %v3072 = vld [vmem:[%s11 + $0x210] sm:$0xf]
  %v3073 = vld [vmem:[%s11 + $0x214] sm:$0xff]
  %v3074 = vld [vmem:[%s11 + $0x21c] sm:$0xff]
  %v3075 = vld [vmem:[%s11 + $0x224] sm:$0xff]
  %v3076 = vld [vmem:[%s11 + $0x22c] sm:$0xf]
  %v3077 = vld [vmem:[%s11 + $0x230] sm:$0xff]
  %v3078 = vld [vmem:[%s11 + $0x238] sm:$0xff]
  %v3079 = vld [vmem:[%s11 + $0x240] sm:$0xff]
  %v3080 = vld [vmem:[%s11 + $0x248] sm:$0xf]
  %v3081 = vld [vmem:[%s11 + $0x24c] sm:$0xff]
  %v3082 = vld [vmem:[%s11 + $0x254] sm:$0xff]
  %v3083 = vld [vmem:[%s11 + $0x25c] sm:$0xff]
  %v3084 = vld [vmem:[%s11 + $0x264] sm:$0xf]
  %v3085 = vld [vmem:[%s11 + $0x268] sm:$0xff]
  %v3086 = vld [vmem:[%s11 + $0x270] sm:$0xff]
  %v3087 = vld [vmem:[%s11 + $0x278] sm:$0xff]
  %v3088 = vld [vmem:[%s11 + $0x280] sm:$0xf]
  %v3089 = vld [vmem:[%s11 + $0x284] sm:$0xff]
  %v3090 = vld [vmem:[%s11 + $0x28c] sm:$0xff]
  %v3091 = vld [vmem:[%s11 + $0x294] sm:$0xff]
  %v3092 = vld [vmem:[%s11 + $0x29c] sm:$0xf]
  %v3093 = vld [vmem:[%s11 + $0x2a0] sm:$0xff]
  %v3094 = vld [vmem:[%s11 + $0x2a8] sm:$0xff]
  %v3095 = vld [vmem:[%s11 + $0x2b0] sm:$0xff]
  %v3096 = vld [vmem:[%s11 + $0x2b8] sm:$0xf]
  %v3097 = vld [vmem:[%s11 + $0x2bc] sm:$0xff]
  %v3098 = vld [vmem:[%s11 + $0x2c4] sm:$0xff]
  %v3099 = vld [vmem:[%s11 + $0x2cc] sm:$0xff]
  %v3100 = vld [vmem:[%s11 + $0x2d4] sm:$0xf]
  %v3101 = vld [vmem:[%s11 + $0x2d8] sm:$0xff]
  %v3102 = vld [vmem:[%s11 + $0x2e0] sm:$0xff]
  %v3103 = vld [vmem:[%s11 + $0x2e8] sm:$0xff]
  %v3104 = vld [vmem:[%s11 + $0x2f0] sm:$0xf]
  %v3105 = vld [vmem:[%s11 + $0x2f4] sm:$0xff]
  %v3106 = vld [vmem:[%s11 + $0x2fc] sm:$0xff]
  %v3107 = vld [vmem:[%s11 + $0x304] sm:$0xff]
  %v3108 = vld [vmem:[%s11 + $0x30c] sm:$0xf]
  %v3109 = vld [vmem:[%s11 + $0x310] sm:$0xff]
  %v3110 = vld [vmem:[%s11 + $0x318] sm:$0xff]
  %v3111 = vld [vmem:[%s11 + $0x320] sm:$0xff]
  %v3112 = vld [vmem:[%s11 + $0x328] sm:$0xf]
  %v3113 = vld [vmem:[%s11 + $0x32c] sm:$0xff]
  %v3114 = vld [vmem:[%s11 + $0x334] sm:$0xff]
  %v3115 = vld [vmem:[%s11 + $0x33c] sm:$0xff]
  %v3116 = vld [vmem:[%s11 + $0x344] sm:$0xf]
  %v3117 = vld [vmem:[%s11 + $0x348] sm:$0xff]
  %v3118 = vld [vmem:[%s11 + $0x350] sm:$0xff]
  %v3119 = vld [vmem:[%s11 + $0x358] sm:$0xff]
  %v3120 = vld [vmem:[%s11 + $0x360] sm:$0xf]
  %v3121 = vld [vmem:[%s11 + $0x364] sm:$0xff]
  %v3122 = vld [vmem:[%s11 + $0x36c] sm:$0xff]
  %v3123 = vld [vmem:[%s11 + $0x374] sm:$0xff]
  %v3124 = vld [vmem:[%s11 + $0x37c] sm:$0xf]
  %v3125 = vld [vmem:[%s11 + $0x380] sm:$0xff]
  %v3126 = vld [vmem:[%s11 + $0x388] sm:$0xff]
  %v3127 = vld [vmem:[%s11 + $0x390] sm:$0xff]
  %v3128 = vld [vmem:[%s11 + $0x398] sm:$0xf]
  %v3129 = vld [vmem:[%s11 + $0x39c] sm:$0xff]
  %v3130 = vld [vmem:[%s11 + $0x3a4] sm:$0xff]
  %v3131 = vld [vmem:[%s11 + $0x3ac] sm:$0xff]
  %v3132 = vld [vmem:[%s11 + $0x3b4] sm:$0xf]
  %v3133 = vld [vmem:[%s11 + $0x3b8] sm:$0xff]
  %v3134 = vld [vmem:[%s11 + $0x3c0] sm:$0xff]
  %v3135 = vld [vmem:[%s11 + $0x3c8] sm:$0xff]
  %v3136 = vld [vmem:[%s11 + $0x3d0] sm:$0xf]
  %v3137 = vld [vmem:[%s11 + $0x3d4] sm:$0xff]
  %v3138 = vld [vmem:[%s11 + $0x3dc] sm:$0xff]
  %v3139 = vld [vmem:[%s11 + $0x3e4] sm:$0xff]
  %v3140 = vld [vmem:[%s11 + $0x3ec] sm:$0xf]
  %v3141 = vld [vmem:[%s11 + $0x3f0] sm:$0xff]
  %v3142 = vld [vmem:[%s11 + $0x3f8] sm:$0xff]
  %v3143 = vld [vmem:[%s11 + $0x400] sm:$0xff]
  %v3144 = vld [vmem:[%s11 + $0x408] sm:$0xf]
  %v3145 = vld [vmem:[%s11 + $0x40c] sm:$0xff]
  %v3146 = vld [vmem:[%s11 + $0x414] sm:$0xff]
  %v3147 = vld [vmem:[%s11 + $0x41c] sm:$0xff]
  %v3148 = vld [vmem:[%s11 + $0x424] sm:$0xf]
  %v3149 = vld [vmem:[%s11 + $0x428] sm:$0xff]
  %v3150 = vld [vmem:[%s11 + $0x430] sm:$0xff]
  %v3151 = vld [vmem:[%s11 + $0x438] sm:$0xff]
  %v3152 = vld [vmem:[%s11 + $0x440] sm:$0xf]
  %v3153 = vld [vmem:[%s11 + $0x444] sm:$0xff]
  %v3154 = vld [vmem:[%s11 + $0x44c] sm:$0xff]
  %v3155 = vld [vmem:[%s11 + $0x454] sm:$0xff]
  %v3156 = vld [vmem:[%s11 + $0x45c] sm:$0xf]
  %v3157 = vld [vmem:[%s11 + $0x460] sm:$0xff]
  %v3158 = vld [vmem:[%s11 + $0x468] sm:$0xff]
  %v3159 = vld [vmem:[%s11 + $0x470] sm:$0xff]
  %v3160 = vld [vmem:[%s11 + $0x478] sm:$0xf]
  %v3161 = vld [vmem:[%s11 + $0x47c] sm:$0xff]
  %v3162 = vld [vmem:[%s11 + $0x484] sm:$0xff]
  %v3163 = vld [vmem:[%s11 + $0x48c] sm:$0xff]
  %v3164 = vld [vmem:[%s11 + $0x494] sm:$0xf]
  %v3165 = vld [vmem:[%s11 + $0x498] sm:$0xff]
  %v3166 = vld [vmem:[%s11 + $0x4a0] sm:$0xff]
  %v3167 = vld [vmem:[%s11 + $0x4a8] sm:$0xff]
  %v3168 = vld [vmem:[%s11 + $0x4b0] sm:$0xf]
  %v3169 = vld [vmem:[%s11 + $0x4b4] sm:$0xff]
  %v3170 = vld [vmem:[%s11 + $0x4bc] sm:$0xff]
  %v3171 = vld [vmem:[%s11 + $0x4c4] sm:$0xff]
  %v3172 = vld [vmem:[%s11 + $0x4cc] sm:$0xf]
  %v3173 = vld [vmem:[%s11 + $0x4d0] sm:$0xff]
  %v3174 = vld [vmem:[%s11 + $0x4d8] sm:$0xff]
  %v3175 = vld [vmem:[%s11 + $0x4e0] sm:$0xff]
  %v3176 = vld [vmem:[%s11 + $0x4e8] sm:$0xf]
  %v3177 = vld [vmem:[%s11 + $0x4ec] sm:$0xff]
  %v3178 = vld [vmem:[%s11 + $0x4f4] sm:$0xff]
  %v3179 = vld [vmem:[%s11 + $0x4fc] sm:$0xff]
  %v3180 = vld [vmem:[%s11 + $0x504] sm:$0xf]
  %v3181 = vld [vmem:[%s11 + $0x508] sm:$0xff]
  %v3182 = vld [vmem:[%s11 + $0x510] sm:$0xff]
  %v3183 = vld [vmem:[%s11 + $0x518] sm:$0xff]
  %v3184 = vld [vmem:[%s11 + $0x520] sm:$0xf]
  %v3185 = vld [vmem:[%s11 + $0x524] sm:$0xff]
  %v3186 = vld [vmem:[%s11 + $0x52c] sm:$0xff]
  %v3187 = vld [vmem:[%s11 + $0x534] sm:$0xff]
  %v3188 = vld [vmem:[%s11 + $0x53c] sm:$0xf]
  %v3189 = vld [vmem:[%s11 + $0x540] sm:$0xff]
  %v3190 = vld [vmem:[%s11 + $0x548] sm:$0xff]
  %v3191 = vld [vmem:[%s11 + $0x550] sm:$0xff]
  %v3192 = vld [vmem:[%s11 + $0x558] sm:$0xf]
  %v3193 = vld [vmem:[%s12] sm:$0xff]
  %v3195 = vlaneseq
  %v3196 = vshrl.u32 %v3195, 7
  %v3197 = vsub.s32 0, %v3196
  %v3198 = vrot.slane %v3193, %v3197
  %v3199 = vlaneseq
  %v3200 = vshrl.u32 %v3199, 7
  %v3201 = vsub.s32 1, %v3200
  %v3202 = vrot.slane %v3193, %v3201
  %v3203 = vlaneseq
  %v3204 = vshrl.u32 %v3203, 7
  %v3205 = vsub.s32 2, %v3204
  %v3206 = vrot.slane %v3193, %v3205
  %v3207 = vlaneseq
  %v3208 = vshrl.u32 %v3207, 7
  %v3209 = vsub.s32 3, %v3208
  %v3210 = vrot.slane %v3193, %v3209
  %v3211 = vlaneseq
  %v3212 = vshrl.u32 %v3211, 7
  %v3213 = vsub.s32 4, %v3212
  %v3214 = vrot.slane %v3193, %v3213
  %v3215 = vlaneseq
  %v3216 = vshrl.u32 %v3215, 7
  %v3217 = vsub.s32 5, %v3216
  %v3218 = vrot.slane %v3193, %v3217
  %v3219 = vlaneseq
  %v3220 = vshrl.u32 %v3219, 7
  %v3221 = vsub.s32 6, %v3220
  %v3222 = vrot.slane %v3193, %v3221
  %v3426 = vunpack.c.l.b16 %v2997
  %v3427 = vunpack.c.h.b16 %v2997
  %v3428 = vunpack.c.l.b16 %v2998
  %v3429 = vunpack.c.h.b16 %v2998
  %v3430 = vunpack.c.l.b16 %v2999
  %v3431 = vunpack.c.h.b16 %v2999
  %v3432 = vunpack.c.l.b16 %v3000
  %v3433 = vunpack.c.l.b16 %v3001
  %v3434 = vunpack.c.h.b16 %v3001
  %v3435 = vunpack.c.l.b16 %v3002
  %v3436 = vunpack.c.h.b16 %v3002
  %v3437 = vunpack.c.l.b16 %v3003
  %v3438 = vunpack.c.h.b16 %v3003
  %v3439 = vunpack.c.l.b16 %v3004
  %v3440 = vunpack.c.l.b16 %v3005
  %v3441 = vunpack.c.h.b16 %v3005
  %v3442 = vunpack.c.l.b16 %v3006
  %v3443 = vunpack.c.h.b16 %v3006
  %v3444 = vunpack.c.l.b16 %v3007
  %v3445 = vunpack.c.h.b16 %v3007
  %v3446 = vunpack.c.l.b16 %v3008
  %v3447 = vunpack.c.l.b16 %v3009
  %v3448 = vunpack.c.h.b16 %v3009
  %v3449 = vunpack.c.l.b16 %v3010
  %v3450 = vunpack.c.h.b16 %v3010
  %v3451 = vunpack.c.l.b16 %v3011
  %v3452 = vunpack.c.h.b16 %v3011
  %v3453 = vunpack.c.l.b16 %v3012
  %v3454 = vunpack.c.l.b16 %v3013
  %v3455 = vunpack.c.h.b16 %v3013
  %v3456 = vunpack.c.l.b16 %v3014
  %v3457 = vunpack.c.h.b16 %v3014
  %v3458 = vunpack.c.l.b16 %v3015
  %v3459 = vunpack.c.h.b16 %v3015
  %v3460 = vunpack.c.l.b16 %v3016
  %v3461 = vunpack.c.l.b16 %v3017
  %v3462 = vunpack.c.h.b16 %v3017
  %v3463 = vunpack.c.l.b16 %v3018
  %v3464 = vunpack.c.h.b16 %v3018
  %v3465 = vunpack.c.l.b16 %v3019
  %v3466 = vunpack.c.h.b16 %v3019
  %v3467 = vunpack.c.l.b16 %v3020
  %v3468 = vunpack.c.l.b16 %v3021
  %v3469 = vunpack.c.h.b16 %v3021
  %v3470 = vunpack.c.l.b16 %v3022
  %v3471 = vunpack.c.h.b16 %v3022
  %v3472 = vunpack.c.l.b16 %v3023
  %v3473 = vunpack.c.h.b16 %v3023
  %v3474 = vunpack.c.l.b16 %v3024
  %v3475 = vunpack.c.l.b16 %v3025
  %v3476 = vunpack.c.h.b16 %v3025
  %v3477 = vunpack.c.l.b16 %v3026
  %v3478 = vunpack.c.h.b16 %v3026
  %v3479 = vunpack.c.l.b16 %v3027
  %v3480 = vunpack.c.h.b16 %v3027
  %v3481 = vunpack.c.l.b16 %v3028
  %v3482 = vunpack.c.l.b16 %v3029
  %v3483 = vunpack.c.h.b16 %v3029
  %v3484 = vunpack.c.l.b16 %v3030
  %v3485 = vunpack.c.h.b16 %v3030
  %v3486 = vunpack.c.l.b16 %v3031
  %v3487 = vunpack.c.h.b16 %v3031
  %v3488 = vunpack.c.l.b16 %v3032
  %v3489 = vunpack.c.l.b16 %v3033
  %v3490 = vunpack.c.h.b16 %v3033
  %v3491 = vunpack.c.l.b16 %v3034
  %v3492 = vunpack.c.h.b16 %v3034
  %v3493 = vunpack.c.l.b16 %v3035
  %v3494 = vunpack.c.h.b16 %v3035
  %v3495 = vunpack.c.l.b16 %v3036
  %v3496 = vunpack.c.l.b16 %v3037
  %v3497 = vunpack.c.h.b16 %v3037
  %v3498 = vunpack.c.l.b16 %v3038
  %v3499 = vunpack.c.h.b16 %v3038
  %v3500 = vunpack.c.l.b16 %v3039
  %v3501 = vunpack.c.h.b16 %v3039
  %v3502 = vunpack.c.l.b16 %v3040
  %v3503 = vunpack.c.l.b16 %v3041
  %v3504 = vunpack.c.h.b16 %v3041
  %v3505 = vunpack.c.l.b16 %v3042
  %v3506 = vunpack.c.h.b16 %v3042
  %v3507 = vunpack.c.l.b16 %v3043
  %v3508 = vunpack.c.h.b16 %v3043
  %v3509 = vunpack.c.l.b16 %v3044
  %v3510 = vunpack.c.l.b16 %v3045
  %v3511 = vunpack.c.h.b16 %v3045
  %v3512 = vunpack.c.l.b16 %v3046
  %v3513 = vunpack.c.h.b16 %v3046
  %v3514 = vunpack.c.l.b16 %v3047
  %v3515 = vunpack.c.h.b16 %v3047
  %v3516 = vunpack.c.l.b16 %v3048
  %v3517 = vunpack.c.l.b16 %v3049
  %v3518 = vunpack.c.h.b16 %v3049
  %v3519 = vunpack.c.l.b16 %v3050
  %v3520 = vunpack.c.h.b16 %v3050
  %v3521 = vunpack.c.l.b16 %v3051
  %v3522 = vunpack.c.h.b16 %v3051
  %v3523 = vunpack.c.l.b16 %v3052
  %v3524 = vunpack.c.l.b16 %v3053
  %v3525 = vunpack.c.h.b16 %v3053
  %v3526 = vunpack.c.l.b16 %v3054
  %v3527 = vunpack.c.h.b16 %v3054
  %v3528 = vunpack.c.l.b16 %v3055
  %v3529 = vunpack.c.h.b16 %v3055
  %v3530 = vunpack.c.l.b16 %v3056
  %v3531 = vunpack.c.l.b16 %v3057
  %v3532 = vunpack.c.h.b16 %v3057
  %v3533 = vunpack.c.l.b16 %v3058
  %v3534 = vunpack.c.h.b16 %v3058
  %v3535 = vunpack.c.l.b16 %v3059
  %v3536 = vunpack.c.h.b16 %v3059
  %v3537 = vunpack.c.l.b16 %v3060
  %v3538 = vunpack.c.l.b16 %v3061
  %v3539 = vunpack.c.h.b16 %v3061
  %v3540 = vunpack.c.l.b16 %v3062
  %v3541 = vunpack.c.h.b16 %v3062
  %v3542 = vunpack.c.l.b16 %v3063
  %v3543 = vunpack.c.h.b16 %v3063
  %v3544 = vunpack.c.l.b16 %v3064
  %v3545 = vunpack.c.l.b16 %v3065
  %v3546 = vunpack.c.h.b16 %v3065
  %v3547 = vunpack.c.l.b16 %v3066
  %v3548 = vunpack.c.h.b16 %v3066
  %v3549 = vunpack.c.l.b16 %v3067
  %v3550 = vunpack.c.h.b16 %v3067
  %v3551 = vunpack.c.l.b16 %v3068
  %v3552 = vunpack.c.l.b16 %v3069
  %v3553 = vunpack.c.h.b16 %v3069
  %v3554 = vunpack.c.l.b16 %v3070
  %v3555 = vunpack.c.h.b16 %v3070
  %v3556 = vunpack.c.l.b16 %v3071
  %v3557 = vunpack.c.h.b16 %v3071
  %v3558 = vunpack.c.l.b16 %v3072
  %v3559 = vunpack.c.l.b16 %v3073
  %v3560 = vunpack.c.h.b16 %v3073
  %v3561 = vunpack.c.l.b16 %v3074
  %v3562 = vunpack.c.h.b16 %v3074
  %v3563 = vunpack.c.l.b16 %v3075
  %v3564 = vunpack.c.h.b16 %v3075
  %v3565 = vunpack.c.l.b16 %v3076
  %v3566 = vunpack.c.l.b16 %v3077
  %v3567 = vunpack.c.h.b16 %v3077
  %v3568 = vunpack.c.l.b16 %v3078
  %v3569 = vunpack.c.h.b16 %v3078
  %v3570 = vunpack.c.l.b16 %v3079
  %v3571 = vunpack.c.h.b16 %v3079
  %v3572 = vunpack.c.l.b16 %v3080
  %v3573 = vunpack.c.l.b16 %v3081
  %v3574 = vunpack.c.h.b16 %v3081
  %v3575 = vunpack.c.l.b16 %v3082
  %v3576 = vunpack.c.h.b16 %v3082
  %v3577 = vunpack.c.l.b16 %v3083
  %v3578 = vunpack.c.h.b16 %v3083
  %v3579 = vunpack.c.l.b16 %v3084
  %v3580 = vunpack.c.l.b16 %v3085
  %v3581 = vunpack.c.h.b16 %v3085
  %v3582 = vunpack.c.l.b16 %v3086
  %v3583 = vunpack.c.h.b16 %v3086
  %v3584 = vunpack.c.l.b16 %v3087
  %v3585 = vunpack.c.h.b16 %v3087
  %v3586 = vunpack.c.l.b16 %v3088
  %v3587 = vunpack.c.l.b16 %v3089
  %v3588 = vunpack.c.h.b16 %v3089
  %v3589 = vunpack.c.l.b16 %v3090
  %v3590 = vunpack.c.h.b16 %v3090
  %v3591 = vunpack.c.l.b16 %v3091
  %v3592 = vunpack.c.h.b16 %v3091
  %v3593 = vunpack.c.l.b16 %v3092
  %v3594 = vunpack.c.l.b16 %v3093
  %v3595 = vunpack.c.h.b16 %v3093
  %v3596 = vunpack.c.l.b16 %v3094
  %v3597 = vunpack.c.h.b16 %v3094
  %v3598 = vunpack.c.l.b16 %v3095
  %v3599 = vunpack.c.h.b16 %v3095
  %v3600 = vunpack.c.l.b16 %v3096
  %v3601 = vunpack.c.l.b16 %v3097
  %v3602 = vunpack.c.h.b16 %v3097
  %v3603 = vunpack.c.l.b16 %v3098
  %v3604 = vunpack.c.h.b16 %v3098
  %v3605 = vunpack.c.l.b16 %v3099
  %v3606 = vunpack.c.h.b16 %v3099
  %v3607 = vunpack.c.l.b16 %v3100
  %v3608 = vunpack.c.l.b16 %v3101
  %v3609 = vunpack.c.h.b16 %v3101
  %v3610 = vunpack.c.l.b16 %v3102
  %v3611 = vunpack.c.h.b16 %v3102
  %v3612 = vunpack.c.l.b16 %v3103
  %v3613 = vunpack.c.h.b16 %v3103
  %v3614 = vunpack.c.l.b16 %v3104
  %v3615 = vunpack.c.l.b16 %v3105
  %v3616 = vunpack.c.h.b16 %v3105
  %v3617 = vunpack.c.l.b16 %v3106
  %v3618 = vunpack.c.h.b16 %v3106
  %v3619 = vunpack.c.l.b16 %v3107
  %v3620 = vunpack.c.h.b16 %v3107
  %v3621 = vunpack.c.l.b16 %v3108
  %v3622 = vunpack.c.l.b16 %v3109
  %v3623 = vunpack.c.h.b16 %v3109
  %v3624 = vunpack.c.l.b16 %v3110
  %v3625 = vunpack.c.h.b16 %v3110
  %v3626 = vunpack.c.l.b16 %v3111
  %v3627 = vunpack.c.h.b16 %v3111
  %v3628 = vunpack.c.l.b16 %v3112
  %v3629 = vunpack.c.l.b16 %v3113
  %v3630 = vunpack.c.h.b16 %v3113
  %v3631 = vunpack.c.l.b16 %v3114
  %v3632 = vunpack.c.h.b16 %v3114
  %v3633 = vunpack.c.l.b16 %v3115
  %v3634 = vunpack.c.h.b16 %v3115
  %v3635 = vunpack.c.l.b16 %v3116
  %v3636 = vunpack.c.l.b16 %v3117
  %v3637 = vunpack.c.h.b16 %v3117
  %v3638 = vunpack.c.l.b16 %v3118
  %v3639 = vunpack.c.h.b16 %v3118
  %v3640 = vunpack.c.l.b16 %v3119
  %v3641 = vunpack.c.h.b16 %v3119
  %v3642 = vunpack.c.l.b16 %v3120
  %v3643 = vunpack.c.l.b16 %v3121
  %v3644 = vunpack.c.h.b16 %v3121
  %v3645 = vunpack.c.l.b16 %v3122
  %v3646 = vunpack.c.h.b16 %v3122
  %v3647 = vunpack.c.l.b16 %v3123
  %v3648 = vunpack.c.h.b16 %v3123
  %v3649 = vunpack.c.l.b16 %v3124
  %v3650 = vunpack.c.l.b16 %v3125
  %v3651 = vunpack.c.h.b16 %v3125
  %v3652 = vunpack.c.l.b16 %v3126
  %v3653 = vunpack.c.h.b16 %v3126
  %v3654 = vunpack.c.l.b16 %v3127
  %v3655 = vunpack.c.h.b16 %v3127
  %v3656 = vunpack.c.l.b16 %v3128
  %v3657 = vunpack.c.l.b16 %v3129
  %v3658 = vunpack.c.h.b16 %v3129
  %v3659 = vunpack.c.l.b16 %v3130
  %v3660 = vunpack.c.h.b16 %v3130
  %v3661 = vunpack.c.l.b16 %v3131
  %v3662 = vunpack.c.h.b16 %v3131
  %v3663 = vunpack.c.l.b16 %v3132
  %v3664 = vunpack.c.l.b16 %v3133
  %v3665 = vunpack.c.h.b16 %v3133
  %v3666 = vunpack.c.l.b16 %v3134
  %v3667 = vunpack.c.h.b16 %v3134
  %v3668 = vunpack.c.l.b16 %v3135
  %v3669 = vunpack.c.h.b16 %v3135
  %v3670 = vunpack.c.l.b16 %v3136
  %v3671 = vunpack.c.l.b16 %v3137
  %v3672 = vunpack.c.h.b16 %v3137
  %v3673 = vunpack.c.l.b16 %v3138
  %v3674 = vunpack.c.h.b16 %v3138
  %v3675 = vunpack.c.l.b16 %v3139
  %v3676 = vunpack.c.h.b16 %v3139
  %v3677 = vunpack.c.l.b16 %v3140
  %v3678 = vunpack.c.l.b16 %v3141
  %v3679 = vunpack.c.h.b16 %v3141
  %v3680 = vunpack.c.l.b16 %v3142
  %v3681 = vunpack.c.h.b16 %v3142
  %v3682 = vunpack.c.l.b16 %v3143
  %v3683 = vunpack.c.h.b16 %v3143
  %v3684 = vunpack.c.l.b16 %v3144
  %v3685 = vunpack.c.l.b16 %v3145
  %v3686 = vunpack.c.h.b16 %v3145
  %v3687 = vunpack.c.l.b16 %v3146
  %v3688 = vunpack.c.h.b16 %v3146
  %v3689 = vunpack.c.l.b16 %v3147
  %v3690 = vunpack.c.h.b16 %v3147
  %v3691 = vunpack.c.l.b16 %v3148
  %v3692 = vunpack.c.l.b16 %v3149
  %v3693 = vunpack.c.h.b16 %v3149
  %v3694 = vunpack.c.l.b16 %v3150
  %v3695 = vunpack.c.h.b16 %v3150
  %v3696 = vunpack.c.l.b16 %v3151
  %v3697 = vunpack.c.h.b16 %v3151
  %v3698 = vunpack.c.l.b16 %v3152
  %v3699 = vunpack.c.l.b16 %v3153
  %v3700 = vunpack.c.h.b16 %v3153
  %v3701 = vunpack.c.l.b16 %v3154
  %v3702 = vunpack.c.h.b16 %v3154
  %v3703 = vunpack.c.l.b16 %v3155
  %v3704 = vunpack.c.h.b16 %v3155
  %v3705 = vunpack.c.l.b16 %v3156
  %v3706 = vunpack.c.l.b16 %v3157
  %v3707 = vunpack.c.h.b16 %v3157
  %v3708 = vunpack.c.l.b16 %v3158
  %v3709 = vunpack.c.h.b16 %v3158
  %v3710 = vunpack.c.l.b16 %v3159
  %v3711 = vunpack.c.h.b16 %v3159
  %v3712 = vunpack.c.l.b16 %v3160
  %v3713 = vunpack.c.l.b16 %v3161
  %v3714 = vunpack.c.h.b16 %v3161
  %v3715 = vunpack.c.l.b16 %v3162
  %v3716 = vunpack.c.h.b16 %v3162
  %v3717 = vunpack.c.l.b16 %v3163
  %v3718 = vunpack.c.h.b16 %v3163
  %v3719 = vunpack.c.l.b16 %v3164
  %v3720 = vunpack.c.l.b16 %v3165
  %v3721 = vunpack.c.h.b16 %v3165
  %v3722 = vunpack.c.l.b16 %v3166
  %v3723 = vunpack.c.h.b16 %v3166
  %v3724 = vunpack.c.l.b16 %v3167
  %v3725 = vunpack.c.h.b16 %v3167
  %v3726 = vunpack.c.l.b16 %v3168
  %v3727 = vunpack.c.l.b16 %v3169
  %v3728 = vunpack.c.h.b16 %v3169
  %v3729 = vunpack.c.l.b16 %v3170
  %v3730 = vunpack.c.h.b16 %v3170
  %v3731 = vunpack.c.l.b16 %v3171
  %v3732 = vunpack.c.h.b16 %v3171
  %v3733 = vunpack.c.l.b16 %v3172
  %v3734 = vunpack.c.l.b16 %v3173
  %v3735 = vunpack.c.h.b16 %v3173
  %v3736 = vunpack.c.l.b16 %v3174
  %v3737 = vunpack.c.h.b16 %v3174
  %v3738 = vunpack.c.l.b16 %v3175
  %v3739 = vunpack.c.h.b16 %v3175
  %v3740 = vunpack.c.l.b16 %v3176
  %v3741 = vunpack.c.l.b16 %v3177
  %v3742 = vunpack.c.h.b16 %v3177
  %v3743 = vunpack.c.l.b16 %v3178
  %v3744 = vunpack.c.h.b16 %v3178
  %v3745 = vunpack.c.l.b16 %v3179
  %v3746 = vunpack.c.h.b16 %v3179
  %v3747 = vunpack.c.l.b16 %v3180
  %v3748 = vunpack.c.l.b16 %v3181
  %v3749 = vunpack.c.h.b16 %v3181
  %v3750 = vunpack.c.l.b16 %v3182
  %v3751 = vunpack.c.h.b16 %v3182
  %v3752 = vunpack.c.l.b16 %v3183
  %v3753 = vunpack.c.h.b16 %v3183
  %v3754 = vunpack.c.l.b16 %v3184
  %v3755 = vunpack.c.l.b16 %v3185
  %v3756 = vunpack.c.h.b16 %v3185
  %v3757 = vunpack.c.l.b16 %v3186
  %v3758 = vunpack.c.h.b16 %v3186
  %v3759 = vunpack.c.l.b16 %v3187
  %v3760 = vunpack.c.h.b16 %v3187
  %v3761 = vunpack.c.l.b16 %v3188
  %v3762 = vunpack.c.l.b16 %v3189
  %v3763 = vunpack.c.h.b16 %v3189
  %v3764 = vunpack.c.l.b16 %v3190
  %v3765 = vunpack.c.h.b16 %v3190
  %v3766 = vunpack.c.l.b16 %v3191
  %v3767 = vunpack.c.h.b16 %v3191
  %v3768 = vunpack.c.l.b16 %v3192
  %v3769 = vpack.c.b16 %v3433, %v3426
  %v3770 = vpack.c.b16 %v3434, %v3427
  %v3771 = vpack.c.b16 %v3435, %v3428
  %v3772 = vpack.c.b16 %v3436, %v3429
  %v3773 = vpack.c.b16 %v3437, %v3430
  %v3774 = vpack.c.b16 %v3438, %v3431
  %v3775 = vpack.c.b16 %v3439, %v3432
  %v3776 = vpack.c.b16 %v3447, %v3440
  %v3777 = vpack.c.b16 %v3448, %v3441
  %v3778 = vpack.c.b16 %v3449, %v3442
  %v3779 = vpack.c.b16 %v3450, %v3443
  %v3780 = vpack.c.b16 %v3451, %v3444
  %v3781 = vpack.c.b16 %v3452, %v3445
  %v3782 = vpack.c.b16 %v3453, %v3446
  %v3783 = vpack.c.b16 %v3461, %v3454
  %v3784 = vpack.c.b16 %v3462, %v3455
  %v3785 = vpack.c.b16 %v3463, %v3456
  %v3786 = vpack.c.b16 %v3464, %v3457
  %v3787 = vpack.c.b16 %v3465, %v3458
  %v3788 = vpack.c.b16 %v3466, %v3459
  %v3789 = vpack.c.b16 %v3467, %v3460
  %v3790 = vpack.c.b16 %v3475, %v3468
  %v3791 = vpack.c.b16 %v3476, %v3469
  %v3792 = vpack.c.b16 %v3477, %v3470
  %v3793 = vpack.c.b16 %v3478, %v3471
  %v3794 = vpack.c.b16 %v3479, %v3472
  %v3795 = vpack.c.b16 %v3480, %v3473
  %v3796 = vpack.c.b16 %v3481, %v3474
  %v3797 = vpack.c.b16 %v3489, %v3482
  %v3798 = vpack.c.b16 %v3490, %v3483
  %v3799 = vpack.c.b16 %v3491, %v3484
  %v3800 = vpack.c.b16 %v3492, %v3485
  %v3801 = vpack.c.b16 %v3493, %v3486
  %v3802 = vpack.c.b16 %v3494, %v3487
  %v3803 = vpack.c.b16 %v3495, %v3488
  %v3804 = vpack.c.b16 %v3503, %v3496
  %v3805 = vpack.c.b16 %v3504, %v3497
  %v3806 = vpack.c.b16 %v3505, %v3498
  %v3807 = vpack.c.b16 %v3506, %v3499
  %v3808 = vpack.c.b16 %v3507, %v3500
  %v3809 = vpack.c.b16 %v3508, %v3501
  %v3810 = vpack.c.b16 %v3509, %v3502
  %v3811 = vpack.c.b16 %v3517, %v3510
  %v3812 = vpack.c.b16 %v3518, %v3511
  %v3813 = vpack.c.b16 %v3519, %v3512
  %v3814 = vpack.c.b16 %v3520, %v3513
  %v3815 = vpack.c.b16 %v3521, %v3514
  %v3816 = vpack.c.b16 %v3522, %v3515
  %v3817 = vpack.c.b16 %v3523, %v3516
  %v3818 = vpack.c.b16 %v3531, %v3524
  %v3819 = vpack.c.b16 %v3532, %v3525
  %v3820 = vpack.c.b16 %v3533, %v3526
  %v3821 = vpack.c.b16 %v3534, %v3527
  %v3822 = vpack.c.b16 %v3535, %v3528
  %v3823 = vpack.c.b16 %v3536, %v3529
  %v3824 = vpack.c.b16 %v3537, %v3530
  %v3825 = vpack.c.b16 %v3545, %v3538
  %v3826 = vpack.c.b16 %v3546, %v3539
  %v3827 = vpack.c.b16 %v3547, %v3540
  %v3828 = vpack.c.b16 %v3548, %v3541
  %v3829 = vpack.c.b16 %v3549, %v3542
  %v3830 = vpack.c.b16 %v3550, %v3543
  %v3831 = vpack.c.b16 %v3551, %v3544
  %v3832 = vpack.c.b16 %v3559, %v3552
  %v3833 = vpack.c.b16 %v3560, %v3553
  %v3834 = vpack.c.b16 %v3561, %v3554
  %v3835 = vpack.c.b16 %v3562, %v3555
  %v3836 = vpack.c.b16 %v3563, %v3556
  %v3837 = vpack.c.b16 %v3564, %v3557
  %v3838 = vpack.c.b16 %v3565, %v3558
  %v3839 = vpack.c.b16 %v3573, %v3566
  %v3840 = vpack.c.b16 %v3574, %v3567
  %v3841 = vpack.c.b16 %v3575, %v3568
  %v3842 = vpack.c.b16 %v3576, %v3569
  %v3843 = vpack.c.b16 %v3577, %v3570
  %v3844 = vpack.c.b16 %v3578, %v3571
  %v3845 = vpack.c.b16 %v3579, %v3572
  %v3846 = vpack.c.b16 %v3587, %v3580
  %v3847 = vpack.c.b16 %v3588, %v3581
  %v3848 = vpack.c.b16 %v3589, %v3582
  %v3849 = vpack.c.b16 %v3590, %v3583
  %v3850 = vpack.c.b16 %v3591, %v3584
  %v3851 = vpack.c.b16 %v3592, %v3585
  %v3852 = vpack.c.b16 %v3593, %v3586
  %v3853 = vpack.c.b16 %v3601, %v3594
  %v3854 = vpack.c.b16 %v3602, %v3595
  %v3855 = vpack.c.b16 %v3603, %v3596
  %v3856 = vpack.c.b16 %v3604, %v3597
  %v3857 = vpack.c.b16 %v3605, %v3598
  %v3858 = vpack.c.b16 %v3606, %v3599
  %v3859 = vpack.c.b16 %v3607, %v3600
  %v3860 = vpack.c.b16 %v3615, %v3608
  %v3861 = vpack.c.b16 %v3616, %v3609
  %v3862 = vpack.c.b16 %v3617, %v3610
  %v3863 = vpack.c.b16 %v3618, %v3611
  %v3864 = vpack.c.b16 %v3619, %v3612
  %v3865 = vpack.c.b16 %v3620, %v3613
  %v3866 = vpack.c.b16 %v3621, %v3614
  %v3867 = vpack.c.b16 %v3629, %v3622
  %v3868 = vpack.c.b16 %v3630, %v3623
  %v3869 = vpack.c.b16 %v3631, %v3624
  %v3870 = vpack.c.b16 %v3632, %v3625
  %v3871 = vpack.c.b16 %v3633, %v3626
  %v3872 = vpack.c.b16 %v3634, %v3627
  %v3873 = vpack.c.b16 %v3635, %v3628
  %v3874 = vpack.c.b16 %v3643, %v3636
  %v3875 = vpack.c.b16 %v3644, %v3637
  %v3876 = vpack.c.b16 %v3645, %v3638
  %v3877 = vpack.c.b16 %v3646, %v3639
  %v3878 = vpack.c.b16 %v3647, %v3640
  %v3879 = vpack.c.b16 %v3648, %v3641
  %v3880 = vpack.c.b16 %v3649, %v3642
  %v3881 = vpack.c.b16 %v3657, %v3650
  %v3882 = vpack.c.b16 %v3658, %v3651
  %v3883 = vpack.c.b16 %v3659, %v3652
  %v3884 = vpack.c.b16 %v3660, %v3653
  %v3885 = vpack.c.b16 %v3661, %v3654
  %v3886 = vpack.c.b16 %v3662, %v3655
  %v3887 = vpack.c.b16 %v3663, %v3656
  %v3888 = vpack.c.b16 %v3671, %v3664
  %v3889 = vpack.c.b16 %v3672, %v3665
  %v3890 = vpack.c.b16 %v3673, %v3666
  %v3891 = vpack.c.b16 %v3674, %v3667
  %v3892 = vpack.c.b16 %v3675, %v3668
  %v3893 = vpack.c.b16 %v3676, %v3669
  %v3894 = vpack.c.b16 %v3677, %v3670
  %v3895 = vpack.c.b16 %v3685, %v3678
  %v3896 = vpack.c.b16 %v3686, %v3679
  %v3897 = vpack.c.b16 %v3687, %v3680
  %v3898 = vpack.c.b16 %v3688, %v3681
  %v3899 = vpack.c.b16 %v3689, %v3682
  %v3900 = vpack.c.b16 %v3690, %v3683
  %v3901 = vpack.c.b16 %v3691, %v3684
  %v3902 = vpack.c.b16 %v3699, %v3692
  %v3903 = vpack.c.b16 %v3700, %v3693
  %v3904 = vpack.c.b16 %v3701, %v3694
  %v3905 = vpack.c.b16 %v3702, %v3695
  %v3906 = vpack.c.b16 %v3703, %v3696
  %v3907 = vpack.c.b16 %v3704, %v3697
  %v3908 = vpack.c.b16 %v3705, %v3698
  %v3909 = vpack.c.b16 %v3713, %v3706
  %v3910 = vpack.c.b16 %v3714, %v3707
  %v3911 = vpack.c.b16 %v3715, %v3708
  %v3912 = vpack.c.b16 %v3716, %v3709
  %v3913 = vpack.c.b16 %v3717, %v3710
  %v3914 = vpack.c.b16 %v3718, %v3711
  %v3915 = vpack.c.b16 %v3719, %v3712
  %v3916 = vpack.c.b16 %v3727, %v3720
  %v3917 = vpack.c.b16 %v3728, %v3721
  %v3918 = vpack.c.b16 %v3729, %v3722
  %v3919 = vpack.c.b16 %v3730, %v3723
  %v3920 = vpack.c.b16 %v3731, %v3724
  %v3921 = vpack.c.b16 %v3732, %v3725
  %v3922 = vpack.c.b16 %v3733, %v3726
  %v3923 = vpack.c.b16 %v3741, %v3734
  %v3924 = vpack.c.b16 %v3742, %v3735
  %v3925 = vpack.c.b16 %v3743, %v3736
  %v3926 = vpack.c.b16 %v3744, %v3737
  %v3927 = vpack.c.b16 %v3745, %v3738
  %v3928 = vpack.c.b16 %v3746, %v3739
  %v3929 = vpack.c.b16 %v3747, %v3740
  %v3930 = vpack.c.b16 %v3755, %v3748
  %v3931 = vpack.c.b16 %v3756, %v3749
  %v3932 = vpack.c.b16 %v3757, %v3750
  %v3933 = vpack.c.b16 %v3758, %v3751
  %v3934 = vpack.c.b16 %v3759, %v3752
  %v3935 = vpack.c.b16 %v3760, %v3753
  %v3936 = vpack.c.b16 %v3761, %v3754
  %v3937 = vpack.c.b16 %v3762, %v3762
  %v3938 = vpack.c.b16 %v3763, %v3763
  %v3939 = vpack.c.b16 %v3764, %v3764
  %v3940 = vpack.c.b16 %v3765, %v3765
  %v3941 = vpack.c.b16 %v3766, %v3766
  %v3942 = vpack.c.b16 %v3767, %v3767
  %v3943 = vpack.c.b16 %v3768, %v3768
  %v4113 = vsel %vm2125, %v2996, 0
  %v4116 = vsel %vm2129, %v3937, 0
  %v4119 = vsel %vm2129, %v3938, 0
  %v4122 = vsel %vm2129, %v3939, 0
  %v4125 = vsel %vm2129, %v3940, 0
  %v4128 = vsel %vm2129, %v3941, 0
  %v4131 = vsel %vm2129, %v3942, 0
  %v4134 = vsel %vm2129, %v3943, 0
  %4136 = vmatprep.subr.bf16.mxu0 %v3819
  %4137 = vmatpush1.bf16.msra.mxu0 %v3818
  %4138 = vmatprep.subr.bf16.mxu0 %v3812
  %4139 = vmatpush1.bf16.msra.mxu0 %v3811
  %4140 = vmatprep.subr.bf16.mxu0 %v3805
  %4141 = vmatpush1.bf16.msra.mxu0 %v3804
  %4142 = vmatprep.subr.bf16.mxu0 %v3798
  %4143 = vmatpush1.bf16.msra.mxu0 %v3797
  %4144 = vmatprep.subr.bf16.mxu0 %v3791
  %4145 = vmatpush1.bf16.msra.mxu0 %v3790
  %4146 = vmatprep.subr.bf16.mxu0 %v3784
  %4147 = vmatpush1.bf16.msra.mxu0 %v3783
  %4148 = vmatprep.subr.bf16.mxu0 %v3777
  %4149 = vmatpush1.bf16.msra.mxu0 %v3776
  %4150 = vmatprep.subr.bf16.mxu0 %v3770
  %4151 = vmatpush1.bf16.msra.mxu0 %v3769
  %4152 = vmatprep.subr.bf16.mxu0 %v3875
  %4153 = vmatpush2.bf16.msra.mxu0 %v3874
  %4154 = vmatprep.subr.bf16.mxu0 %v3868
  %4155 = vmatpush2.bf16.msra.mxu0 %v3867
  %4156 = vmatprep.subr.bf16.mxu0 %v3861
  %4157 = vmatpush2.bf16.msra.mxu0 %v3860
  %4158 = vmatprep.subr.bf16.mxu0 %v3854
  %4159 = vmatpush2.bf16.msra.mxu0 %v3853
  %4160 = vmatprep.subr.bf16.mxu0 %v3847
  %4161 = vmatpush2.bf16.msra.mxu0 %v3846
  %4162 = vmatprep.subr.bf16.mxu0 %v3840
  %4163 = vmatpush2.bf16.msra.mxu0 %v3839
  %4164 = vmatprep.subr.bf16.mxu0 %v3833
  %4165 = vmatpush2.bf16.msra.mxu0 %v3832
  %4166 = vmatprep.subr.bf16.mxu0 %v3826
  %4167 = vmatpush2.bf16.msra.mxu0 %v3825
  %4168 = vmatprep.mubr.bf16.mxu0 %v2994
  %4169 = vmatmul.mubr.bf16.gmra.mxu0 %v2993
  %v4170 = vpop.f32.mrf.mxu0
  %v4171 = vadd.f32 %v3198, %v4170
  %v4172 = vpop.f32.mrf.mxu0
  %v4173 = vadd.f32 %v3202, %v4172
  %v4174 = vpop.f32.mrf.mxu0
  %v4175 = vadd.f32 %v3198, %v4174
  %v4176 = vpop.f32.mrf.mxu0
  %v4177 = vadd.f32 %v3202, %v4176
  %4178 = vdwg.mxu0
  %4179 = vmatprep.subr.bf16.mxu0 %v3931
  %4180 = vmatpush1.bf16.msra.mxu0 %v3930
  %4181 = vmatprep.subr.bf16.mxu0 %v3924
  %4182 = vmatpush1.bf16.msra.mxu0 %v3923
  %4183 = vmatprep.subr.bf16.mxu0 %v3917
  %4184 = vmatpush1.bf16.msra.mxu0 %v3916
  %4185 = vmatprep.subr.bf16.mxu0 %v3910
  %4186 = vmatpush1.bf16.msra.mxu0 %v3909
  %4187 = vmatprep.subr.bf16.mxu0 %v3903
  %4188 = vmatpush1.bf16.msra.mxu0 %v3902
  %4189 = vmatprep.subr.bf16.mxu0 %v3896
  %4190 = vmatpush1.bf16.msra.mxu0 %v3895
  %4191 = vmatprep.subr.bf16.mxu0 %v3889
  %4192 = vmatpush1.bf16.msra.mxu0 %v3888
  %4193 = vmatprep.subr.bf16.mxu0 %v3882
  %4194 = vmatpush1.bf16.msra.mxu0 %v3881
  %4195 = vmatprep.subr.bf16.mxu0 0
  %4196 = vmatpush2.bf16.msra.mxu0 0
  %4197 = vmatprep.subr.bf16.mxu0 0
  %4198 = vmatpush2.bf16.msra.mxu0 0
  %4199 = vmatprep.subr.bf16.mxu0 0
  %4200 = vmatpush2.bf16.msra.mxu0 0
  %4201 = vmatprep.subr.bf16.mxu0 0
  %4202 = vmatpush2.bf16.msra.mxu0 0
  %4203 = vmatprep.subr.bf16.mxu0 0
  %4204 = vmatpush2.bf16.msra.mxu0 0
  %4205 = vmatprep.subr.bf16.mxu0 0
  %4206 = vmatpush2.bf16.msra.mxu0 0
  %4207 = vmatprep.subr.bf16.mxu0 0
  %4208 = vmatpush2.bf16.msra.mxu0 0
  %4209 = vmatprep.subr.bf16.mxu0 %v4119
  %4210 = vmatpush2.bf16.msra.mxu0 %v4116
  %4211 = vmatprep.mubr.bf16.mxu0 %v4113
  %4212 = vmatmul.mubr.bf16.gmra.mxu0 %v2995
  %v4213 = vpop.f32.mrf.mxu0
  %v4214 = vadd.f32 %v4171, %v4213
  %v4215 = vpop.f32.mrf.mxu0
  %v4216 = vadd.f32 %v4173, %v4215
  %v4217 = vpop.f32.mrf.mxu0
  %v4218 = vadd.f32 %v4175, %v4217
  %v4219 = vpop.f32.mrf.mxu0
  %v4220 = vadd.f32 %v4177, %v4219
  %4221 = vdwg.mxu0
  %4222 = vmatprep.subr.bf16.mxu0 %v3821
  %4223 = vmatpush1.bf16.msra.mxu0 %v3820
  %4224 = vmatprep.subr.bf16.mxu0 %v3814
  %4225 = vmatpush1.bf16.msra.mxu0 %v3813
  %4226 = vmatprep.subr.bf16.mxu0 %v3807
  %4227 = vmatpush1.bf16.msra.mxu0 %v3806
  %4228 = vmatprep.subr.bf16.mxu0 %v3800
  %4229 = vmatpush1.bf16.msra.mxu0 %v3799
  %4230 = vmatprep.subr.bf16.mxu0 %v3793
  %4231 = vmatpush1.bf16.msra.mxu0 %v3792
  %4232 = vmatprep.subr.bf16.mxu0 %v3786
  %4233 = vmatpush1.bf16.msra.mxu0 %v3785
  %4234 = vmatprep.subr.bf16.mxu0 %v3779
  %4235 = vmatpush1.bf16.msra.mxu0 %v3778
  %4236 = vmatprep.subr.bf16.mxu0 %v3772
  %4237 = vmatpush1.bf16.msra.mxu0 %v3771
  %4238 = vmatprep.subr.bf16.mxu0 %v3877
  %4239 = vmatpush2.bf16.msra.mxu0 %v3876
  %4240 = vmatprep.subr.bf16.mxu0 %v3870
  %4241 = vmatpush2.bf16.msra.mxu0 %v3869
  %4242 = vmatprep.subr.bf16.mxu0 %v3863
  %4243 = vmatpush2.bf16.msra.mxu0 %v3862
  %4244 = vmatprep.subr.bf16.mxu0 %v3856
  %4245 = vmatpush2.bf16.msra.mxu0 %v3855
  %4246 = vmatprep.subr.bf16.mxu0 %v3849
  %4247 = vmatpush2.bf16.msra.mxu0 %v3848
  %4248 = vmatprep.subr.bf16.mxu0 %v3842
  %4249 = vmatpush2.bf16.msra.mxu0 %v3841
  %4250 = vmatprep.subr.bf16.mxu0 %v3835
  %4251 = vmatpush2.bf16.msra.mxu0 %v3834
  %4252 = vmatprep.subr.bf16.mxu0 %v3828
  %4253 = vmatpush2.bf16.msra.mxu0 %v3827
  %4254 = vmatprep.mubr.bf16.mxu0 %v2994
  %4255 = vmatmul.mubr.bf16.gmra.mxu0 %v2993
  %v4256 = vpop.f32.mrf.mxu0
  %v4257 = vadd.f32 %v3206, %v4256
  %v4258 = vpop.f32.mrf.mxu0
  %v4259 = vadd.f32 %v3210, %v4258
  %v4260 = vpop.f32.mrf.mxu0
  %v4261 = vadd.f32 %v3206, %v4260
  %v4262 = vpop.f32.mrf.mxu0
  %v4263 = vadd.f32 %v3210, %v4262
  %4264 = vdwg.mxu0
  %4265 = vmatprep.subr.bf16.mxu0 %v3933
  %4266 = vmatpush1.bf16.msra.mxu0 %v3932
  %4267 = vmatprep.subr.bf16.mxu0 %v3926
  %4268 = vmatpush1.bf16.msra.mxu0 %v3925
  %4269 = vmatprep.subr.bf16.mxu0 %v3919
  %4270 = vmatpush1.bf16.msra.mxu0 %v3918
  %4271 = vmatprep.subr.bf16.mxu0 %v3912
  %4272 = vmatpush1.bf16.msra.mxu0 %v3911
  %4273 = vmatprep.subr.bf16.mxu0 %v3905
  %4274 = vmatpush1.bf16.msra.mxu0 %v3904
  %4275 = vmatprep.subr.bf16.mxu0 %v3898
  %4276 = vmatpush1.bf16.msra.mxu0 %v3897
  %4277 = vmatprep.subr.bf16.mxu0 %v3891
  %4278 = vmatpush1.bf16.msra.mxu0 %v3890
  %4279 = vmatprep.subr.bf16.mxu0 %v3884
  %4280 = vmatpush1.bf16.msra.mxu0 %v3883
  %4281 = vmatprep.subr.bf16.mxu0 0
  %4282 = vmatpush2.bf16.msra.mxu0 0
  %4283 = vmatprep.subr.bf16.mxu0 0
  %4284 = vmatpush2.bf16.msra.mxu0 0
  %4285 = vmatprep.subr.bf16.mxu0 0
  %4286 = vmatpush2.bf16.msra.mxu0 0
  %4287 = vmatprep.subr.bf16.mxu0 0
  %4288 = vmatpush2.bf16.msra.mxu0 0
  %4289 = vmatprep.subr.bf16.mxu0 0
  %4290 = vmatpush2.bf16.msra.mxu0 0
  %4291 = vmatprep.subr.bf16.mxu0 0
  %4292 = vmatpush2.bf16.msra.mxu0 0
  %4293 = vmatprep.subr.bf16.mxu0 0
  %4294 = vmatpush2.bf16.msra.mxu0 0
  %4295 = vmatprep.subr.bf16.mxu0 %v4125
  %4296 = vmatpush2.bf16.msra.mxu0 %v4122
  %4297 = vmatprep.mubr.bf16.mxu0 %v4113
  %4298 = vmatmul.mubr.bf16.gmra.mxu0 %v2995
  %v4299 = vpop.f32.mrf.mxu0
  %v4300 = vadd.f32 %v4257, %v4299
  %v4301 = vpop.f32.mrf.mxu0
  %v4302 = vadd.f32 %v4259, %v4301
  %v4303 = vpop.f32.mrf.mxu0
  %v4304 = vadd.f32 %v4261, %v4303
  %v4305 = vpop.f32.mrf.mxu0
  %v4306 = vadd.f32 %v4263, %v4305
  %4307 = vdwg.mxu0
  %4308 = vmatprep.subr.bf16.mxu0 %v3823
  %4309 = vmatpush1.bf16.msra.mxu0 %v3822
  %4310 = vmatprep.subr.bf16.mxu0 %v3816
  %4311 = vmatpush1.bf16.msra.mxu0 %v3815
  %4312 = vmatprep.subr.bf16.mxu0 %v3809
  %4313 = vmatpush1.bf16.msra.mxu0 %v3808
  %4314 = vmatprep.subr.bf16.mxu0 %v3802
  %4315 = vmatpush1.bf16.msra.mxu0 %v3801
  %4316 = vmatprep.subr.bf16.mxu0 %v3795
  %4317 = vmatpush1.bf16.msra.mxu0 %v3794
  %4318 = vmatprep.subr.bf16.mxu0 %v3788
  %4319 = vmatpush1.bf16.msra.mxu0 %v3787
  %4320 = vmatprep.subr.bf16.mxu0 %v3781
  %4321 = vmatpush1.bf16.msra.mxu0 %v3780
  %4322 = vmatprep.subr.bf16.mxu0 %v3774
  %4323 = vmatpush1.bf16.msra.mxu0 %v3773
  %4324 = vmatprep.subr.bf16.mxu0 %v3879
  %4325 = vmatpush2.bf16.msra.mxu0 %v3878
  %4326 = vmatprep.subr.bf16.mxu0 %v3872
  %4327 = vmatpush2.bf16.msra.mxu0 %v3871
  %4328 = vmatprep.subr.bf16.mxu0 %v3865
  %4329 = vmatpush2.bf16.msra.mxu0 %v3864
  %4330 = vmatprep.subr.bf16.mxu0 %v3858
  %4331 = vmatpush2.bf16.msra.mxu0 %v3857
  %4332 = vmatprep.subr.bf16.mxu0 %v3851
  %4333 = vmatpush2.bf16.msra.mxu0 %v3850
  %4334 = vmatprep.subr.bf16.mxu0 %v3844
  %4335 = vmatpush2.bf16.msra.mxu0 %v3843
  %4336 = vmatprep.subr.bf16.mxu0 %v3837
  %4337 = vmatpush2.bf16.msra.mxu0 %v3836
  %4338 = vmatprep.subr.bf16.mxu0 %v3830
  %4339 = vmatpush2.bf16.msra.mxu0 %v3829
  %4340 = vmatprep.mubr.bf16.mxu0 %v2994
  %4341 = vmatmul.mubr.bf16.gmra.mxu0 %v2993
  %v4342 = vpop.f32.mrf.mxu0
  %v4343 = vadd.f32 %v3214, %v4342
  %v4344 = vpop.f32.mrf.mxu0
  %v4345 = vadd.f32 %v3218, %v4344
  %v4346 = vpop.f32.mrf.mxu0
  %v4347 = vadd.f32 %v3214, %v4346
  %v4348 = vpop.f32.mrf.mxu0
  %v4349 = vadd.f32 %v3218, %v4348
  %4350 = vdwg.mxu0
  %4351 = vmatprep.subr.bf16.mxu0 %v3935
  %4352 = vmatpush1.bf16.msra.mxu0 %v3934
  %4353 = vmatprep.subr.bf16.mxu0 %v3928
  %4354 = vmatpush1.bf16.msra.mxu0 %v3927
  %4355 = vmatprep.subr.bf16.mxu0 %v3921
  %4356 = vmatpush1.bf16.msra.mxu0 %v3920
  %4357 = vmatprep.subr.bf16.mxu0 %v3914
  %4358 = vmatpush1.bf16.msra.mxu0 %v3913
  %4359 = vmatprep.subr.bf16.mxu0 %v3907
  %4360 = vmatpush1.bf16.msra.mxu0 %v3906
  %4361 = vmatprep.subr.bf16.mxu0 %v3900
  %4362 = vmatpush1.bf16.msra.mxu0 %v3899
  %4363 = vmatprep.subr.bf16.mxu0 %v3893
  %4364 = vmatpush1.bf16.msra.mxu0 %v3892
  %4365 = vmatprep.subr.bf16.mxu0 %v3886
  %4366 = vmatpush1.bf16.msra.mxu0 %v3885
  %4367 = vmatprep.subr.bf16.mxu0 0
  %4368 = vmatpush2.bf16.msra.mxu0 0
  %4369 = vmatprep.subr.bf16.mxu0 0
  %4370 = vmatpush2.bf16.msra.mxu0 0
  %4371 = vmatprep.subr.bf16.mxu0 0
  %4372 = vmatpush2.bf16.msra.mxu0 0
  %4373 = vmatprep.subr.bf16.mxu0 0
  %4374 = vmatpush2.bf16.msra.mxu0 0
  %4375 = vmatprep.subr.bf16.mxu0 0
  %4376 = vmatpush2.bf16.msra.mxu0 0
  %4377 = vmatprep.subr.bf16.mxu0 0
  %4378 = vmatpush2.bf16.msra.mxu0 0
  %4379 = vmatprep.subr.bf16.mxu0 0
  %4380 = vmatpush2.bf16.msra.mxu0 0
  %4381 = vmatprep.subr.bf16.mxu0 %v4131
  %4382 = vmatpush2.bf16.msra.mxu0 %v4128
  %4383 = vmatprep.mubr.bf16.mxu0 %v4113
  %4384 = vmatmul.mubr.bf16.gmra.mxu0 %v2995
  %v4385 = vpop.f32.mrf.mxu0
  %v4386 = vadd.f32 %v4343, %v4385
  %v4387 = vpop.f32.mrf.mxu0
  %v4388 = vadd.f32 %v4345, %v4387
  %v4389 = vpop.f32.mrf.mxu0
  %v4390 = vadd.f32 %v4347, %v4389
  %v4391 = vpop.f32.mrf.mxu0
  %v4392 = vadd.f32 %v4349, %v4391
  %4393 = vdwg.mxu0
  %4394 = vmatprep.subr.bf16.mxu0 0
  %4395 = vmatpush1.bf16.msra.mxu0 %v3824
  %4396 = vmatprep.subr.bf16.mxu0 0
  %4397 = vmatpush1.bf16.msra.mxu0 %v3817
  %4398 = vmatprep.subr.bf16.mxu0 0
  %4399 = vmatpush1.bf16.msra.mxu0 %v3810
  %4400 = vmatprep.subr.bf16.mxu0 0
  %4401 = vmatpush1.bf16.msra.mxu0 %v3803
  %4402 = vmatprep.subr.bf16.mxu0 0
  %4403 = vmatpush1.bf16.msra.mxu0 %v3796
  %4404 = vmatprep.subr.bf16.mxu0 0
  %4405 = vmatpush1.bf16.msra.mxu0 %v3789
  %4406 = vmatprep.subr.bf16.mxu0 0
  %4407 = vmatpush1.bf16.msra.mxu0 %v3782
  %4408 = vmatprep.subr.bf16.mxu0 0
  %4409 = vmatpush1.bf16.msra.mxu0 %v3775
  %4410 = vmatprep.subr.bf16.mxu0 0
  %4411 = vmatpush2.bf16.msra.mxu0 %v3880
  %4412 = vmatprep.subr.bf16.mxu0 0
  %4413 = vmatpush2.bf16.msra.mxu0 %v3873
  %4414 = vmatprep.subr.bf16.mxu0 0
  %4415 = vmatpush2.bf16.msra.mxu0 %v3866
  %4416 = vmatprep.subr.bf16.mxu0 0
  %4417 = vmatpush2.bf16.msra.mxu0 %v3859
  %4418 = vmatprep.subr.bf16.mxu0 0
  %4419 = vmatpush2.bf16.msra.mxu0 %v3852
  %4420 = vmatprep.subr.bf16.mxu0 0
  %4421 = vmatpush2.bf16.msra.mxu0 %v3845
  %4422 = vmatprep.subr.bf16.mxu0 0
  %4423 = vmatpush2.bf16.msra.mxu0 %v3838
  %4424 = vmatprep.subr.bf16.mxu0 0
  %4425 = vmatpush2.bf16.msra.mxu0 %v3831
  %4426 = vmatprep.mubr.bf16.mxu0 %v2994
  %4427 = vmatmul.mubr.bf16.gmra.mxu0 %v2993
  %v4428 = vpop.f32.mrf.mxu0
  %v4429 = vadd.f32 %v3222, %v4428
  %v4430 = vpop.f32.mrf.mxu0
  %v4431 = vpop.f32.mrf.mxu0
  %v4432 = vadd.f32 %v3222, %v4431
  %v4433 = vpop.f32.mrf.mxu0
  %4434 = vdwg.mxu0
  %4435 = vmatprep.subr.bf16.mxu0 0
  %4436 = vmatpush1.bf16.msra.mxu0 %v3936
  %4437 = vmatprep.subr.bf16.mxu0 0
  %4438 = vmatpush1.bf16.msra.mxu0 %v3929
  %4439 = vmatprep.subr.bf16.mxu0 0
  %4440 = vmatpush1.bf16.msra.mxu0 %v3922
  %4441 = vmatprep.subr.bf16.mxu0 0
  %4442 = vmatpush1.bf16.msra.mxu0 %v3915
  %4443 = vmatprep.subr.bf16.mxu0 0
  %4444 = vmatpush1.bf16.msra.mxu0 %v3908
  %4445 = vmatprep.subr.bf16.mxu0 0
  %4446 = vmatpush1.bf16.msra.mxu0 %v3901
  %4447 = vmatprep.subr.bf16.mxu0 0
  %4448 = vmatpush1.bf16.msra.mxu0 %v3894
  %4449 = vmatprep.subr.bf16.mxu0 0
  %4450 = vmatpush1.bf16.msra.mxu0 %v3887
  %4451 = vmatprep.subr.bf16.mxu0 0
  %4452 = vmatpush2.bf16.msra.mxu0 0
  %4453 = vmatprep.subr.bf16.mxu0 0
  %4454 = vmatpush2.bf16.msra.mxu0 0
  %4455 = vmatprep.subr.bf16.mxu0 0
  %4456 = vmatpush2.bf16.msra.mxu0 0
  %4457 = vmatprep.subr.bf16.mxu0 0
  %4458 = vmatpush2.bf16.msra.mxu0 0
  %4459 = vmatprep.subr.bf16.mxu0 0
  %4460 = vmatpush2.bf16.msra.mxu0 0
  %4461 = vmatprep.subr.bf16.mxu0 0
  %4462 = vmatpush2.bf16.msra.mxu0 0
  %4463 = vmatprep.subr.bf16.mxu0 0
  %4464 = vmatpush2.bf16.msra.mxu0 0
  %4465 = vmatprep.subr.bf16.mxu0 0
  %4466 = vmatpush2.bf16.msra.mxu0 %v4134
  %4467 = vmatprep.mubr.bf16.mxu0 %v4113
  %4468 = vmatmul.mubr.bf16.gmra.mxu0 %v2995
  %v4469 = vpop.f32.mrf.mxu0
  %v4470 = vadd.f32 %v4429, %v4469
  %v4471 = vpop.f32.mrf.mxu0
  %v4472 = vpop.f32.mrf.mxu0
  %v4473 = vadd.f32 %v4432, %v4472
  %v4474 = vpop.f32.mrf.mxu0
  %4475 = vdwg.mxu0
  %v4476 = vpack.c.bf16 %v4218, %v4214
  %v4477 = vpack.c.bf16 %v4220, %v4216
  %v4478 = vpack.c.bf16 %v4304, %v4300
  %v4479 = vpack.c.bf16 %v4306, %v4302
  %v4480 = vpack.c.bf16 %v4390, %v4386
  %v4481 = vpack.c.bf16 %v4392, %v4388
  %v4482 = vpack.c.bf16 %v4473, %v4470
  %v4490 = vunpack.c.l.b16 %v4476
  %v4491 = vunpack.c.l.b16 %v4477
  %v4492 = vunpack.c.l.b16 %v4478
  %v4493 = vunpack.c.l.b16 %v4479
  %v4494 = vunpack.c.l.b16 %v4480
  %v4495 = vunpack.c.l.b16 %v4481
  %v4496 = vunpack.c.l.b16 %v4482
  %v4497 = vunpack.c.h.b16 %v4476
  %v4498 = vunpack.c.h.b16 %v4477
  %v4499 = vunpack.c.h.b16 %v4478
  %v4500 = vunpack.c.h.b16 %v4479
  %v4501 = vunpack.c.h.b16 %v4480
  %v4502 = vunpack.c.h.b16 %v4481
  %v4503 = vunpack.c.h.b16 %v4482
  %v4504 = vpack.c.b16 %v4491, %v4490
  %v4505 = vpack.c.b16 %v4493, %v4492
  %v4506 = vpack.c.b16 %v4495, %v4494
  %v4507 = vpack.c.b16 %v4496, %v4496
  %v4508 = vpack.c.b16 %v4498, %v4497
  %v4509 = vpack.c.b16 %v4500, %v4499
  %v4510 = vpack.c.b16 %v4502, %v4501
  %v4511 = vpack.c.b16 %v4503, %v4503
  %4520 = vst [vmem:[%s13] sm:$0xff] %v4504
  %4521 = vst [vmem:[%s13 + $0x8] sm:$0xff] %v4505
  %4522 = vst [vmem:[%s13 + $0x10] sm:$0xff] %v4506
  %4523 = vst [vmem:[%s13 + $0x18] sm:$0xf] %v4507
  %4524 = vst [vmem:[%s13 + $0x1c] sm:$0xff] %v4508
  %4525 = vst [vmem:[%s13 + $0x24] sm:$0xff] %v4509
  %4526 = vst [vmem:[%s13 + $0x2c] sm:$0xff] %v4510
  %4527 = vst [vmem:[%s13 + $0x34] sm:$0xf] %v4511
  // Predicated region
  $region54: #{autoencoder_forward.1} parent=0 // pred_check
    _
  $region55: #{autoencoder_forward.1} parent=0 // pred_check_branch
    %4529 = sbr.rel (0) target = $region57
  $region56: #{autoencoder_forward.1} parent=0 // pred_region
    _
  $region57: #{autoencoder_forward.1} parent=0 // pred_fallthru
    _
  // Predicated region
  $region58: #{autoencoder_forward.1} parent=0 // pred_check
    _
  $region59: #{autoencoder_forward.1} parent=0 // pred_check_branch
    %4531 = sbr.rel (0) target = $region61
  $region60: #{autoencoder_forward.1} parent=0 // pred_region
    _
  $region61: #{autoencoder_forward.1} parent=0 // pred_fallthru
    _

</llo_original>
